<compile_context>
chip_gen: v7x
topology: tpu7x:2x2x1
jax: 0.10.0
libtpu: 0.0.40
codegen_flags: <defaults>
</compile_context>

<pallas_src>
import numpy as np
import jax
import jax.numpy as jnp
from jax import lax
from jax.experimental import pallas as pl
from jax.experimental.pallas import tpu as pltpu

KSIZE = 7
PAD = 3


def _sigmoid(x):
    # tanh formulation: lands on the EUP slot and never overflows.
    return 0.5 * (jnp.tanh(0.5 * x) + 1.0)


def _round_up(v, m):
    return ((v + m - 1) // m) * m


def density_attention_kernel(
    x_ref,      # (Bt, C, HW)  input tile, HW on lanes
    w1t_ref,    # (C, Crp)     channel-attn conv1 weight^T (Cr zero-padded to Crp)
    w2t_ref,    # (Crp, C)     channel-attn conv2 weight^T
    mmean_ref,  # (HW, HW)     7x7 'same' conv, mean-channel taps (dense matrix)
    mmax_ref,   # (HW, HW)     7x7 'same' conv, max-channel taps (dense matrix)
    wa_ref,     # (C, C)       classifier fc1 (avg half), BatchNorm folded in
    wb_ref,     # (C, C)       classifier fc1 (max half), BatchNorm folded in
    bfc1_ref,   # (1, C)       classifier fc1 bias, BatchNorm folded in
    wfc2t_ref,  # (C, Op)      classifier fc2 weight^T (O zero-padded to Op)
    bfc2_ref,   # (1, Op)      classifier fc2 bias (zero-padded)
    o_ref,      # (Bt, Op)     logits tile (lane-dense)
):
    Bt, C, HW = x_ref.shape
    CC = 8 if (C % 8 == 0) else C         # 8-sublane channel chunks
    n_chunks = C // CC
    # TODO(synk): for very large C switch these unrolled chunk loops to
    # lax.fori_loop to bound code size.
    inv_hw = 1.0 / HW
    inv_c = 1.0 / C

    # -------- Channel attention: squeeze + shared MLP --------
    x_all = x_ref[...]
    avg_c = jnp.sum(x_all, axis=-1) * inv_hw            # (Bt, C)  lane reduce
    max_c = jnp.max(x_all, axis=-1)                     # (Bt, C)
    s = jnp.concatenate([avg_c, max_c], axis=0)         # (2Bt, C) one fused MLP pass
    h1 = jnp.maximum(
        jnp.dot(s, w1t_ref[...], preferred_element_type=jnp.float32), 0.0)   # (2Bt, Crp)
    h2 = jnp.dot(h1, w2t_ref[...], preferred_element_type=jnp.float32)       # (2Bt, C)
    ch_att = _sigmoid(h2[:Bt] + h2[Bt:])                # (Bt, C)

    # -------- Spatial squeeze: mean/max over channels of x*ch_att --------
    # Chunked over 8-sublane channel slabs so the full (Bt,C,HW) x_ca tensor
    # is never materialized (no big vst + reload passes, lower peak VMEM).
    ch_sum = jnp.zeros((Bt, HW), jnp.float32)
    ch_mx = jnp.full((Bt, HW), -jnp.inf, jnp.float32)
    for ci in range(n_chunks):
        c0 = ci * CC
        prod = x_ref[:, c0:c0 + CC, :] * ch_att[:, c0:c0 + CC, None]   # (Bt, CC, HW)
        ch_sum = ch_sum + jnp.sum(prod, axis=1)
        ch_mx = jnp.maximum(ch_mx, jnp.max(prod, axis=1))
    ch_mean = ch_sum * inv_c                             # (Bt, HW)

    # -------- 7x7 'same' conv (2->1 ch) as two dense MXU matmuls ----------
    conv = (jnp.dot(ch_mean, mmean_ref[...], preferred_element_type=jnp.float32)
            + jnp.dot(ch_mx, mmax_ref[...], preferred_element_type=jnp.float32))
    sp_att = _sigmoid(conv)                              # (Bt, HW)

    # -------- Global avg/max pooling of attended features (fused) ---------
    # `attended` is never materialized: each channel chunk of
    # x * ch_att * sp_att is reduced over HW while still in vregs.
    gavg_parts, gmax_parts = [], []
    for ci in range(n_chunks):
        c0 = ci * CC
        att = (x_ref[:, c0:c0 + CC, :] * ch_att[:, c0:c0 + CC, None]
               * sp_att[:, None, :])                     # (Bt, CC, HW)
        gavg_parts.append(jnp.sum(att, axis=-1) * inv_hw)
        gmax_parts.append(jnp.max(att, axis=-1))
    gavg = jnp.concatenate(gavg_parts, axis=-1) if n_chunks > 1 else gavg_parts[0]
    gmax = jnp.concatenate(gmax_parts, axis=-1) if n_chunks > 1 else gmax_parts[0]

    # -------- Classifier: fc1 (BN folded, split halves -> no lane concat) --
    h = (jnp.dot(gavg, wa_ref[...], preferred_element_type=jnp.float32)
         + jnp.dot(gmax, wb_ref[...], preferred_element_type=jnp.float32)
         + bfc1_ref[...])
    h = jnp.maximum(h, 0.0)
    # TODO(synk): Dropout(0.5) is identity in eval mode; training-mode RNG drop
    # not implemented.
    o_ref[...] = (jnp.dot(h, wfc2t_ref[...], preferred_element_type=jnp.float32)
                  + bfc2_ref[...])


def build_conv_matrices(w_sp, H, W):
    """Repack the (1,2,7,7) 'same'-padded conv weights into two dense (HW, HW)
    matrices (mean channel, max channel) so the whole spatial conv is two MXU
    matmuls:  ch_mean @ M_mean + ch_max @ M_max.  Pure weight transform
    (indices are static numpy).
    TODO(synk): O(HW^2) dense matrix; for HW >~ 1024 switch to a 49-tap
    pltpu.roll shifted-accumulate to stay inside VMEM (v7x: 64 MiB)."""
    HW = H * W
    hh = np.arange(H)[:, None, None, None] + np.arange(KSIZE)[None, None, :, None] - PAD
    ww = np.arange(W)[None, :, None, None] + np.arange(KSIZE)[None, None, None, :] - PAD
    valid = (hh >= 0) & (hh < H) & (ww >= 0) & (ww < W)                 # (H, W, 7, 7)
    src = np.where(valid, hh * W + ww, 0)                               # source pixel q
    dst = np.broadcast_to(
        (np.arange(H)[:, None] * W + np.arange(W)[None, :])[:, :, None, None], src.shape)
    full = (2,) + src.shape
    c_idx = np.broadcast_to(np.arange(2)[:, None, None, None, None], full).ravel()
    q_idx = np.broadcast_to(src[None], full).ravel()
    p_idx = np.broadcast_to(dst[None], full).ravel()

    w = jnp.asarray(w_sp, jnp.float32).reshape(2, KSIZE, KSIZE)
    vals = jnp.where(jnp.asarray(valid)[None], w[:, None, None, :, :], 0.0)  # (2,H,W,7,7)
    m = jnp.zeros((2, HW, HW), jnp.float32)
    m = m.at[c_idx, q_idx, p_idx].add(vals.ravel())
    return m[0], m[1]


def density_attention(x, params, *, batch_tile=128):
    B, C, H, W = x.shape
    HW = H * W
    Cr = params["w1"].shape[0]
    O = params["w_fc2"].shape[0]
    Crp = _round_up(max(Cr, 1), 8)        # pad bottleneck dim -> no 2-lane vregs
    Op = _round_up(max(O, 1), 128)        # lane-dense output block

    # ---- fold BatchNorm1d (eval) into fc1; split fc1 so the kernel does two
    # accumulated dots instead of a lane concat ----
    eps = 1e-5
    bn_scale = (params["bn_gamma"] / jnp.sqrt(params["bn_var"] + eps)).astype(jnp.float32)
    bn_shift = (params["bn_beta"] - params["bn_mean"] * bn_scale).astype(jnp.float32)
    wfc1t = params["w_fc1"].T.astype(jnp.float32) * bn_scale[None, :]        # (2C, C)
    bfc1 = (params["b_fc1"].astype(jnp.float32) * bn_scale + bn_shift).reshape(1, C)
    wa, wb = wfc1t[:C], wfc1t[C:]

    w1t = jnp.zeros((C, Crp), jnp.float32).at[:, :Cr].set(params["w1"].T.astype(jnp.float32))
    w2t = jnp.zeros((Crp, C), jnp.float32).at[:Cr, :].set(params["w2"].T.astype(jnp.float32))
    wfc2t = jnp.zeros((C, Op), jnp.float32).at[:, :O].set(params["w_fc2"].T.astype(jnp.float32))
    bfc2 = jnp.zeros((1, Op), jnp.float32).at[:, :O].set(
        params["b_fc2"].astype(jnp.float32)[None, :])

    m_mean, m_max = build_conv_matrices(params["w_sp"], H, W)                # 2x (HW, HW)

    # ---- batch tiling: 8-aligned Bt, VMEM-budgeted, >= 2 grid steps ----
    fixed_bytes = (2 * 2 * HW * HW                                  # conv mats (2 bufs)
                   + 2 * (C * Crp + Crp * C + 2 * C * C + C * Op)   # weights (2 bufs)
                   + 4 * (C + Op)) * 4
    per_row_bytes = (2 * C * HW + 6 * HW + 2 * Op + 2 * C) * 4      # x dbl-buf + row temps
    budget = 40 * 1024 * 1024     # conservative across v5e/v6e/v7x (v7x: 64 MiB physical)
    rows_cap = max(8, ((budget - fixed_bytes) // per_row_bytes) // 8 * 8)
    bt_user = max(8, (max(batch_tile, 8) // 8) * 8)
    bt_cap = max(8, min(bt_user, rows_cap))

    Bt = None
    # Prefer an 8-aligned Bt that divides B exactly (no wrapper-side pad copy)
    # and yields >= 2 grid steps (keeps both v7x TensorCores busy).
    for cand in range(bt_cap, 7, -8):
        if B % cand == 0 and B // cand >= 2:
            Bt = cand
            break
    if Bt is None:
        if B >= 2 * bt_cap:
            Bt = bt_cap
        else:
            Bt = min(bt_cap, max(8, _round_up(pl.cdiv(B, 2), 8)))
    n_blocks = max(2, pl.cdiv(B, Bt))
    Bp = n_blocks * Bt

    xf = x.reshape(B, C, HW).astype(jnp.float32)          # lane-dense HW layout
    if Bp != B:
        # Zero rows are benign: no cross-batch reduction inside the kernel and
        # the padded logits are sliced off below.
        xf = jnp.pad(xf, ((0, Bp - B), (0, 0), (0, 0)))

    vmem_limit = int(min(max(fixed_bytes + Bt * per_row_bytes + (4 << 20), 16 << 20),
                         48 << 20))

    const = lambda shape: pl.BlockSpec(shape, lambda i, _s=shape: tuple(0 for _ in _s))

    out = pl.pallas_call(
        density_attention_kernel,
        out_shape=jax.ShapeDtypeStruct((Bp, Op), jnp.float32),
        grid=(n_blocks,),
        in_specs=[
            pl.BlockSpec((Bt, C, HW), lambda i: (i, 0, 0)),
            const((C, Crp)),
            const((Crp, C)),
            const((HW, HW)),
            const((HW, HW)),
            const((C, C)),
            const((C, C)),
            const((1, C)),
            const((C, Op)),
            const((1, Op)),
        ],
        out_specs=pl.BlockSpec((Bt, Op), lambda i: (i, 0)),
        compiler_params=pltpu.CompilerParams(
            dimension_semantics=("parallel",),
            vmem_limit_bytes=vmem_limit),
    )(xf, w1t, w2t, m_mean, m_max, wa, wb, bfc1, wfc2t, bfc2)
    return out[:B, :O]


def density_attention_ref(x, params):
    """Pure-JAX reference matching the PyTorch forward (eval mode)."""
    eps = 1e-5
    avg = jnp.mean(x, axis=(2, 3))
    mx = jnp.max(x, axis=(2, 3))

    def fc(v):
        h = jnp.maximum(v @ params["w1"].T, 0.0)
        return h @ params["w2"].T

    ch_att = jax.nn.sigmoid(fc(avg) + fc(mx))[:, :, None, None]
    x_ca = x * ch_att
    ch_mean = jnp.mean(x_ca, axis=1, keepdims=True)
    ch_max = jnp.max(x_ca, axis=1, keepdims=True)
    feat = jnp.concatenate([ch_mean, ch_max], axis=1)
    conv = lax.conv_general_dilated(
        feat, params["w_sp"].reshape(1, 2, KSIZE, KSIZE),
        window_strides=(1, 1), padding=((PAD, PAD), (PAD, PAD)),
        dimension_numbers=("NCHW", "OIHW", "NCHW"))
    att = x_ca * jax.nn.sigmoid(conv)
    gavg = jnp.mean(att, axis=(2, 3))
    gmax = jnp.max(att, axis=(2, 3))
    g = jnp.concatenate([gavg, gmax], axis=1)
    h = g @ params["w_fc1"].T + params["b_fc1"]
    h = ((h - params["bn_mean"]) / jnp.sqrt(params["bn_var"] + eps)
         * params["bn_gamma"] + params["bn_beta"])
    h = jnp.maximum(h, 0.0)
    return h @ params["w_fc2"].T + params["b_fc2"]


def make_params(key, C, Cr, O):
    ks = jax.random.split(key, 10)
    n = lambda k, s: (0.1 * jax.random.normal(k, s)).astype(jnp.float32)
    return {
        "w1": n(ks[0], (Cr, C)),
        "w2": n(ks[1], (C, Cr)),
        "w_sp": n(ks[2], (1, 2, KSIZE, KSIZE)),
        "w_fc1": n(ks[3], (C, 2 * C)),
        "b_fc1": n(ks[4], (C,)),
        "bn_gamma": 1.0 + n(ks[5], (C,)),
        "bn_beta": n(ks[6], (C,)),
        "bn_mean": n(ks[7], (C,)),
        "bn_var": 0.5 + jnp.abs(n(ks[8], (C,))),
        "w_fc2": n(ks[9], (O, C)),
        "b_fc2": 0.01 * jnp.arange(O, dtype=jnp.float32),
    }


if __name__ == "__main__":
    B, C, H, W = 2, 32, 16, 16
    reduction_ratio, out_features = 16, 4
    Cr = C // reduction_ratio

    key = jax.random.PRNGKey(0)
    kx, kp = jax.random.split(key)
    x = jax.random.normal(kx, (B, C, H, W), dtype=jnp.float32)
    params = make_params(kp, C, Cr, out_features)

    logits = jax.block_until_ready(density_attention(x, params))
    ref = jax.block_until_ready(density_attention_ref(x, params))

    assert logits.shape == (B, out_features), logits.shape
    np.testing.assert_allclose(np.asarray(logits), np.asarray(ref),
                               rtol=2e-3, atol=2e-3)
    print("KERNEL_OK")
</pallas_src>

<mosaic_0001>
module attributes {stable_mosaic.version = 11 : i64} {
  func.func @density_attention_kernel(%arg0: i32, %arg1: memref<8x32x256xf32, #tpu.memory_space<vmem>>, %arg2: memref<32x8xf32, #tpu.memory_space<vmem>>, %arg3: memref<8x32xf32, #tpu.memory_space<vmem>>, %arg4: memref<256x256xf32, #tpu.memory_space<vmem>>, %arg5: memref<256x256xf32, #tpu.memory_space<vmem>>, %arg6: memref<32x32xf32, #tpu.memory_space<vmem>>, %arg7: memref<32x32xf32, #tpu.memory_space<vmem>>, %arg8: memref<1x32xf32, #tpu.memory_space<vmem>>, %arg9: memref<32x128xf32, #tpu.memory_space<vmem>>, %arg10: memref<1x128xf32, #tpu.memory_space<vmem>>, %arg11: memref<8x128xf32, #tpu.memory_space<vmem>>) attributes {dimension_semantics = [#tpu.dimension_semantics<parallel>], iteration_bounds = array<i64: 2>, scalar_prefetch = 0 : i64, scratch_operands = 0 : i64, tpu.core_type = #tpu.core_type<tc>, window_params = [{transform_indices = @transform_0, window_bounds = array<i64: 8, 32, 256>}, {pipeline_mode = #tpu.pipeline_mode<synchronous>, transform_indices = @transform_1, window_bounds = array<i64: 32, 8>}, {pipeline_mode = #tpu.pipeline_mode<synchronous>, transform_indices = @transform_2, window_bounds = array<i64: 8, 32>}, {pipeline_mode = #tpu.pipeline_mode<synchronous>, transform_indices = @transform_3, window_bounds = array<i64: 256, 256>}, {pipeline_mode = #tpu.pipeline_mode<synchronous>, transform_indices = @transform_4, window_bounds = array<i64: 256, 256>}, {pipeline_mode = #tpu.pipeline_mode<synchronous>, transform_indices = @transform_5, window_bounds = array<i64: 32, 32>}, {pipeline_mode = #tpu.pipeline_mode<synchronous>, transform_indices = @transform_6, window_bounds = array<i64: 32, 32>}, {pipeline_mode = #tpu.pipeline_mode<synchronous>, transform_indices = @transform_7, window_bounds = array<i64: 1, 32>}, {pipeline_mode = #tpu.pipeline_mode<synchronous>, transform_indices = @transform_8, window_bounds = array<i64: 32, 128>}, {pipeline_mode = #tpu.pipeline_mode<synchronous>, transform_indices = @transform_9, window_bounds = array<i64: 1, 128>}, {transform_indices = @transform_10, window_bounds = array<i64: 8, 128>}]} {
    %c0 = arith.constant 0 : index
    %c0_0 = arith.constant 0 : index
    %c0_1 = arith.constant 0 : index
    %0 = vector.load %arg1[%c0, %c0_0, %c0_1] : memref<8x32x256xf32, #tpu.memory_space<vmem>>, vector<8x32x256xf32>
    %cst = arith.constant dense<0.000000e+00> : vector<8x32xf32>
    %1 = vector.multi_reduction <add>, %0, %cst [2] : vector<8x32x256xf32> to vector<8x32xf32>
    %cst_2 = arith.constant 3.906250e-03 : f32
    %2 = vector.broadcast %cst_2 : f32 to vector<8x32xf32>
    %3 = arith.mulf %1, %2 : vector<8x32xf32>
    %cst_3 = arith.constant dense<0xFF800000> : vector<8x32xf32>
    %4 = vector.multi_reduction <maximumf>, %0, %cst_3 [2] : vector<8x32x256xf32> to vector<8x32xf32>
    %5 = tpu.concatenate %3, %4 in 0 : vector<8x32xf32>, vector<8x32xf32> -> vector<16x32xf32>
    %c0_4 = arith.constant 0 : index
    %c0_5 = arith.constant 0 : index
    %6 = vector.load %arg2[%c0_4, %c0_5] : memref<32x8xf32, #tpu.memory_space<vmem>>, vector<32x8xf32>
    %cst_6 = arith.constant dense<0.000000e+00> : vector<16x8xf32>
    %7 = tpu.matmul %5, %6, %cst_6 {dimension_numbers = #tpu.dot_dimension_numbers<[1], [0], [0], [1], [0, 0, 1, 1], [], []>} : vector<16x32xf32>, vector<32x8xf32>, vector<16x8xf32> -> vector<16x8xf32>
    %cst_7 = arith.constant 0.000000e+00 : f32
    %8 = vector.broadcast %cst_7 : f32 to vector<16x8xf32>
    %9 = arith.maximumf %7, %8 : vector<16x8xf32>
    %c0_8 = arith.constant 0 : index
    %c0_9 = arith.constant 0 : index
    %10 = vector.load %arg3[%c0_8, %c0_9] : memref<8x32xf32, #tpu.memory_space<vmem>>, vector<8x32xf32>
    %cst_10 = arith.constant dense<0.000000e+00> : vector<16x32xf32>
    %11 = tpu.matmul %9, %10, %cst_10 {dimension_numbers = #tpu.dot_dimension_numbers<[1], [0], [0], [1], [0, 0, 1, 1], [], []>} : vector<16x8xf32>, vector<8x32xf32>, vector<16x32xf32> -> vector<16x32xf32>
    %12 = vector.extract_strided_slice %11 {offsets = [0, 0], sizes = [8, 32], strides = [1, 1]} : vector<16x32xf32> to vector<8x32xf32>
    %13 = vector.extract_strided_slice %11 {offsets = [8, 0], sizes = [8, 32], strides = [1, 1]} : vector<16x32xf32> to vector<8x32xf32>
    %14 = arith.addf %12, %13 : vector<8x32xf32>
    %cst_11 = arith.constant 5.000000e-01 : f32
    %15 = vector.broadcast %cst_11 : f32 to vector<8x32xf32>
    %16 = arith.mulf %15, %14 : vector<8x32xf32>
    %17 = math.tanh %16 : vector<8x32xf32>
    %cst_12 = arith.constant 1.000000e+00 : f32
    %18 = vector.broadcast %cst_12 : f32 to vector<8x32xf32>
    %19 = arith.addf %17, %18 : vector<8x32xf32>
    %cst_13 = arith.constant 5.000000e-01 : f32
    %20 = vector.broadcast %cst_13 : f32 to vector<8x32xf32>
    %21 = arith.mulf %20, %19 : vector<8x32xf32>
    %cst_14 = arith.constant 0.000000e+00 : f32
    %22 = vector.broadcast %cst_14 : f32 to vector<8x256xf32>
    %cst_15 = arith.constant 0xFF800000 : f32
    %23 = vector.broadcast %cst_15 : f32 to vector<8x256xf32>
    %c0_16 = arith.constant 0 : index
    %c0_17 = arith.constant 0 : index
    %c0_18 = arith.constant 0 : index
    %24 = vector.load %arg1[%c0_16, %c0_17, %c0_18] : memref<8x32x256xf32, #tpu.memory_space<vmem>>, vector<8x8x256xf32>
    %25 = vector.extract_strided_slice %21 {offsets = [0, 0], sizes = [8, 8], strides = [1, 1]} : vector<8x32xf32> to vector<8x8xf32>
    %26 = vector.shape_cast %25 : vector<8x8xf32> to vector<8x8x1xf32>
    %27 = vector.broadcast %26 : vector<8x8x1xf32> to vector<8x8x256xf32>
    %28 = arith.mulf %24, %27 : vector<8x8x256xf32>
    %cst_19 = arith.constant dense<0.000000e+00> : vector<8x256xf32>
    %29 = vector.multi_reduction <add>, %28, %cst_19 [1] : vector<8x8x256xf32> to vector<8x256xf32>
    %30 = arith.addf %22, %29 : vector<8x256xf32>
    %cst_20 = arith.constant dense<0xFF800000> : vector<8x256xf32>
    %31 = vector.multi_reduction <maximumf>, %28, %cst_20 [1] : vector<8x8x256xf32> to vector<8x256xf32>
    %32 = arith.maximumf %23, %31 : vector<8x256xf32>
    %c0_21 = arith.constant 0 : index
    %c8 = arith.constant 8 : index
    %c0_22 = arith.constant 0 : index
    %33 = vector.load %arg1[%c0_21, %c8, %c0_22] : memref<8x32x256xf32, #tpu.memory_space<vmem>>, vector<8x8x256xf32>
    %34 = vector.extract_strided_slice %21 {offsets = [0, 8], sizes = [8, 8], strides = [1, 1]} : vector<8x32xf32> to vector<8x8xf32>
    %35 = vector.shape_cast %34 : vector<8x8xf32> to vector<8x8x1xf32>
    %36 = vector.broadcast %35 : vector<8x8x1xf32> to vector<8x8x256xf32>
    %37 = arith.mulf %33, %36 : vector<8x8x256xf32>
    %cst_23 = arith.constant dense<0.000000e+00> : vector<8x256xf32>
    %38 = vector.multi_reduction <add>, %37, %cst_23 [1] : vector<8x8x256xf32> to vector<8x256xf32>
    %39 = arith.addf %30, %38 : vector<8x256xf32>
    %cst_24 = arith.constant dense<0xFF800000> : vector<8x256xf32>
    %40 = vector.multi_reduction <maximumf>, %37, %cst_24 [1] : vector<8x8x256xf32> to vector<8x256xf32>
    %41 = arith.maximumf %32, %40 : vector<8x256xf32>
    %c0_25 = arith.constant 0 : index
    %c16 = arith.constant 16 : index
    %c0_26 = arith.constant 0 : index
    %42 = vector.load %arg1[%c0_25, %c16, %c0_26] : memref<8x32x256xf32, #tpu.memory_space<vmem>>, vector<8x8x256xf32>
    %43 = vector.extract_strided_slice %21 {offsets = [0, 16], sizes = [8, 8], strides = [1, 1]} : vector<8x32xf32> to vector<8x8xf32>
    %44 = vector.shape_cast %43 : vector<8x8xf32> to vector<8x8x1xf32>
    %45 = vector.broadcast %44 : vector<8x8x1xf32> to vector<8x8x256xf32>
    %46 = arith.mulf %42, %45 : vector<8x8x256xf32>
    %cst_27 = arith.constant dense<0.000000e+00> : vector<8x256xf32>
    %47 = vector.multi_reduction <add>, %46, %cst_27 [1] : vector<8x8x256xf32> to vector<8x256xf32>
    %48 = arith.addf %39, %47 : vector<8x256xf32>
    %cst_28 = arith.constant dense<0xFF800000> : vector<8x256xf32>
    %49 = vector.multi_reduction <maximumf>, %46, %cst_28 [1] : vector<8x8x256xf32> to vector<8x256xf32>
    %50 = arith.maximumf %41, %49 : vector<8x256xf32>
    %c0_29 = arith.constant 0 : index
    %c24 = arith.constant 24 : index
    %c0_30 = arith.constant 0 : index
    %51 = vector.load %arg1[%c0_29, %c24, %c0_30] : memref<8x32x256xf32, #tpu.memory_space<vmem>>, vector<8x8x256xf32>
    %52 = vector.extract_strided_slice %21 {offsets = [0, 24], sizes = [8, 8], strides = [1, 1]} : vector<8x32xf32> to vector<8x8xf32>
    %53 = vector.shape_cast %52 : vector<8x8xf32> to vector<8x8x1xf32>
    %54 = vector.broadcast %53 : vector<8x8x1xf32> to vector<8x8x256xf32>
    %55 = arith.mulf %51, %54 : vector<8x8x256xf32>
    %cst_31 = arith.constant dense<0.000000e+00> : vector<8x256xf32>
    %56 = vector.multi_reduction <add>, %55, %cst_31 [1] : vector<8x8x256xf32> to vector<8x256xf32>
    %57 = arith.addf %48, %56 : vector<8x256xf32>
    %cst_32 = arith.constant dense<0xFF800000> : vector<8x256xf32>
    %58 = vector.multi_reduction <maximumf>, %55, %cst_32 [1] : vector<8x8x256xf32> to vector<8x256xf32>
    %59 = arith.maximumf %50, %58 : vector<8x256xf32>
    %cst_33 = arith.constant 3.125000e-02 : f32
    %60 = vector.broadcast %cst_33 : f32 to vector<8x256xf32>
    %61 = arith.mulf %57, %60 : vector<8x256xf32>
    %c0_34 = arith.constant 0 : index
    %c0_35 = arith.constant 0 : index
    %62 = vector.load %arg4[%c0_34, %c0_35] : memref<256x256xf32, #tpu.memory_space<vmem>>, vector<256x256xf32>
    %cst_36 = arith.constant dense<0.000000e+00> : vector<8x256xf32>
    %63 = tpu.matmul %61, %62, %cst_36 {dimension_numbers = #tpu.dot_dimension_numbers<[1], [0], [0], [1], [0, 0, 1, 1], [], []>} : vector<8x256xf32>, vector<256x256xf32>, vector<8x256xf32> -> vector<8x256xf32>
    %c0_37 = arith.constant 0 : index
    %c0_38 = arith.constant 0 : index
    %64 = vector.load %arg5[%c0_37, %c0_38] : memref<256x256xf32, #tpu.memory_space<vmem>>, vector<256x256xf32>
    %cst_39 = arith.constant dense<0.000000e+00> : vector<8x256xf32>
    %65 = tpu.matmul %59, %64, %cst_39 {dimension_numbers = #tpu.dot_dimension_numbers<[1], [0], [0], [1], [0, 0, 1, 1], [], []>} : vector<8x256xf32>, vector<256x256xf32>, vector<8x256xf32> -> vector<8x256xf32>
    %66 = arith.addf %63, %65 : vector<8x256xf32>
    %cst_40 = arith.constant 5.000000e-01 : f32
    %67 = vector.broadcast %cst_40 : f32 to vector<8x256xf32>
    %68 = arith.mulf %67, %66 : vector<8x256xf32>
    %69 = math.tanh %68 : vector<8x256xf32>
    %cst_41 = arith.constant 1.000000e+00 : f32
    %70 = vector.broadcast %cst_41 : f32 to vector<8x256xf32>
    %71 = arith.addf %69, %70 : vector<8x256xf32>
    %cst_42 = arith.constant 5.000000e-01 : f32
    %72 = vector.broadcast %cst_42 : f32 to vector<8x256xf32>
    %73 = arith.mulf %72, %71 : vector<8x256xf32>
    %c0_43 = arith.constant 0 : index
    %c0_44 = arith.constant 0 : index
    %c0_45 = arith.constant 0 : index
    %74 = vector.load %arg1[%c0_43, %c0_44, %c0_45] : memref<8x32x256xf32, #tpu.memory_space<vmem>>, vector<8x8x256xf32>
    %75 = vector.extract_strided_slice %21 {offsets = [0, 0], sizes = [8, 8], strides = [1, 1]} : vector<8x32xf32> to vector<8x8xf32>
    %76 = vector.shape_cast %75 : vector<8x8xf32> to vector<8x8x1xf32>
    %77 = vector.broadcast %76 : vector<8x8x1xf32> to vector<8x8x256xf32>
    %78 = arith.mulf %74, %77 : vector<8x8x256xf32>
    %79 = vector.shape_cast %73 : vector<8x256xf32> to vector<8x1x256xf32>
    %80 = vector.broadcast %79 : vector<8x1x256xf32> to vector<8x8x256xf32>
    %81 = arith.mulf %78, %80 : vector<8x8x256xf32>
    %cst_46 = arith.constant dense<0.000000e+00> : vector<8x8xf32>
    %82 = vector.multi_reduction <add>, %81, %cst_46 [2] : vector<8x8x256xf32> to vector<8x8xf32>
    %cst_47 = arith.constant 3.906250e-03 : f32
    %83 = vector.broadcast %cst_47 : f32 to vector<8x8xf32>
    %84 = arith.mulf %82, %83 : vector<8x8xf32>
    %cst_48 = arith.constant dense<0xFF800000> : vector<8x8xf32>
    %85 = vector.multi_reduction <maximumf>, %81, %cst_48 [2] : vector<8x8x256xf32> to vector<8x8xf32>
    %c0_49 = arith.constant 0 : index
    %c8_50 = arith.constant 8 : index
    %c0_51 = arith.constant 0 : index
    %86 = vector.load %arg1[%c0_49, %c8_50, %c0_51] : memref<8x32x256xf32, #tpu.memory_space<vmem>>, vector<8x8x256xf32>
    %87 = vector.extract_strided_slice %21 {offsets = [0, 8], sizes = [8, 8], strides = [1, 1]} : vector<8x32xf32> to vector<8x8xf32>
    %88 = vector.shape_cast %87 : vector<8x8xf32> to vector<8x8x1xf32>
    %89 = vector.broadcast %88 : vector<8x8x1xf32> to vector<8x8x256xf32>
    %90 = arith.mulf %86, %89 : vector<8x8x256xf32>
    %91 = vector.shape_cast %73 : vector<8x256xf32> to vector<8x1x256xf32>
    %92 = vector.broadcast %91 : vector<8x1x256xf32> to vector<8x8x256xf32>
    %93 = arith.mulf %90, %92 : vector<8x8x256xf32>
    %cst_52 = arith.constant dense<0.000000e+00> : vector<8x8xf32>
    %94 = vector.multi_reduction <add>, %93, %cst_52 [2] : vector<8x8x256xf32> to vector<8x8xf32>
    %cst_53 = arith.constant 3.906250e-03 : f32
    %95 = vector.broadcast %cst_53 : f32 to vector<8x8xf32>
    %96 = arith.mulf %94, %95 : vector<8x8xf32>
    %cst_54 = arith.constant dense<0xFF800000> : vector<8x8xf32>
    %97 = vector.multi_reduction <maximumf>, %93, %cst_54 [2] : vector<8x8x256xf32> to vector<8x8xf32>
    %c0_55 = arith.constant 0 : index
    %c16_56 = arith.constant 16 : index
    %c0_57 = arith.constant 0 : index
    %98 = vector.load %arg1[%c0_55, %c16_56, %c0_57] : memref<8x32x256xf32, #tpu.memory_space<vmem>>, vector<8x8x256xf32>
    %99 = vector.extract_strided_slice %21 {offsets = [0, 16], sizes = [8, 8], strides = [1, 1]} : vector<8x32xf32> to vector<8x8xf32>
    %100 = vector.shape_cast %99 : vector<8x8xf32> to vector<8x8x1xf32>
    %101 = vector.broadcast %100 : vector<8x8x1xf32> to vector<8x8x256xf32>
    %102 = arith.mulf %98, %101 : vector<8x8x256xf32>
    %103 = vector.shape_cast %73 : vector<8x256xf32> to vector<8x1x256xf32>
    %104 = vector.broadcast %103 : vector<8x1x256xf32> to vector<8x8x256xf32>
    %105 = arith.mulf %102, %104 : vector<8x8x256xf32>
    %cst_58 = arith.constant dense<0.000000e+00> : vector<8x8xf32>
    %106 = vector.multi_reduction <add>, %105, %cst_58 [2] : vector<8x8x256xf32> to vector<8x8xf32>
    %cst_59 = arith.constant 3.906250e-03 : f32
    %107 = vector.broadcast %cst_59 : f32 to vector<8x8xf32>
    %108 = arith.mulf %106, %107 : vector<8x8xf32>
    %cst_60 = arith.constant dense<0xFF800000> : vector<8x8xf32>
    %109 = vector.multi_reduction <maximumf>, %105, %cst_60 [2] : vector<8x8x256xf32> to vector<8x8xf32>
    %c0_61 = arith.constant 0 : index
    %c24_62 = arith.constant 24 : index
    %c0_63 = arith.constant 0 : index
    %110 = vector.load %arg1[%c0_61, %c24_62, %c0_63] : memref<8x32x256xf32, #tpu.memory_space<vmem>>, vector<8x8x256xf32>
    %111 = vector.extract_strided_slice %21 {offsets = [0, 24], sizes = [8, 8], strides = [1, 1]} : vector<8x32xf32> to vector<8x8xf32>
    %112 = vector.shape_cast %111 : vector<8x8xf32> to vector<8x8x1xf32>
    %113 = vector.broadcast %112 : vector<8x8x1xf32> to vector<8x8x256xf32>
    %114 = arith.mulf %110, %113 : vector<8x8x256xf32>
    %115 = vector.shape_cast %73 : vector<8x256xf32> to vector<8x1x256xf32>
    %116 = vector.broadcast %115 : vector<8x1x256xf32> to vector<8x8x256xf32>
    %117 = arith.mulf %114, %116 : vector<8x8x256xf32>
    %cst_64 = arith.constant dense<0.000000e+00> : vector<8x8xf32>
    %118 = vector.multi_reduction <add>, %117, %cst_64 [2] : vector<8x8x256xf32> to vector<8x8xf32>
    %cst_65 = arith.constant 3.906250e-03 : f32
    %119 = vector.broadcast %cst_65 : f32 to vector<8x8xf32>
    %120 = arith.mulf %118, %119 : vector<8x8xf32>
    %cst_66 = arith.constant dense<0xFF800000> : vector<8x8xf32>
    %121 = vector.multi_reduction <maximumf>, %117, %cst_66 [2] : vector<8x8x256xf32> to vector<8x8xf32>
    %122 = tpu.concatenate %84, %96, %108, %120 in 1 : vector<8x8xf32>, vector<8x8xf32>, vector<8x8xf32>, vector<8x8xf32> -> vector<8x32xf32>
    %123 = tpu.concatenate %85, %97, %109, %121 in 1 : vector<8x8xf32>, vector<8x8xf32>, vector<8x8xf32>, vector<8x8xf32> -> vector<8x32xf32>
    %c0_67 = arith.constant 0 : index
    %c0_68 = arith.constant 0 : index
    %124 = vector.load %arg6[%c0_67, %c0_68] : memref<32x32xf32, #tpu.memory_space<vmem>>, vector<32x32xf32>
    %cst_69 = arith.constant dense<0.000000e+00> : vector<8x32xf32>
    %125 = tpu.matmul %122, %124, %cst_69 {dimension_numbers = #tpu.dot_dimension_numbers<[1], [0], [0], [1], [0, 0, 1, 1], [], []>} : vector<8x32xf32>, vector<32x32xf32>, vector<8x32xf32> -> vector<8x32xf32>
    %c0_70 = arith.constant 0 : index
    %c0_71 = arith.constant 0 : index
    %126 = vector.load %arg7[%c0_70, %c0_71] : memref<32x32xf32, #tpu.memory_space<vmem>>, vector<32x32xf32>
    %cst_72 = arith.constant dense<0.000000e+00> : vector<8x32xf32>
    %127 = tpu.matmul %123, %126, %cst_72 {dimension_numbers = #tpu.dot_dimension_numbers<[1], [0], [0], [1], [0, 0, 1, 1], [], []>} : vector<8x32xf32>, vector<32x32xf32>, vector<8x32xf32> -> vector<8x32xf32>
    %128 = arith.addf %125, %127 : vector<8x32xf32>
    %c0_73 = arith.constant 0 : index
    %c0_74 = arith.constant 0 : index
    %129 = vector.load %arg8[%c0_73, %c0_74] : memref<1x32xf32, #tpu.memory_space<vmem>>, vector<1x32xf32>
    %130 = vector.broadcast %129 : vector<1x32xf32> to vector<8x32xf32>
    %131 = arith.addf %128, %130 : vector<8x32xf32>
    %cst_75 = arith.constant 0.000000e+00 : f32
    %132 = vector.broadcast %cst_75 : f32 to vector<8x32xf32>
    %133 = arith.maximumf %131, %132 : vector<8x32xf32>
    %c0_76 = arith.constant 0 : index
    %c0_77 = arith.constant 0 : index
    %134 = vector.load %arg9[%c0_76, %c0_77] : memref<32x128xf32, #tpu.memory_space<vmem>>, vector<32x128xf32>
    %cst_78 = arith.constant dense<0.000000e+00> : vector<8x128xf32>
    %135 = tpu.matmul %133, %134, %cst_78 {dimension_numbers = #tpu.dot_dimension_numbers<[1], [0], [0], [1], [0, 0, 1, 1], [], []>} : vector<8x32xf32>, vector<32x128xf32>, vector<8x128xf32> -> vector<8x128xf32>
    %c0_79 = arith.constant 0 : index
    %c0_80 = arith.constant 0 : index
    %136 = vector.load %arg10[%c0_79, %c0_80] : memref<1x128xf32, #tpu.memory_space<vmem>>, vector<1x128xf32>
    %137 = vector.broadcast %136 : vector<1x128xf32> to vector<8x128xf32>
    %138 = arith.addf %135, %137 : vector<8x128xf32>
    %c0_81 = arith.constant 0 : index
    %c0_82 = arith.constant 0 : index
    %139 = vector.load %arg11[%c0_81, %c0_82] : memref<8x128xf32, #tpu.memory_space<vmem>>, vector<8x128xf32>
    tpu.vector_store %arg11[%c0_81, %c0_82], %138 {strides = array<i32>} : memref<8x128xf32, #tpu.memory_space<vmem>>, vector<8x128xf32>,
    return
  }
  func.func @transform_0(%arg0: i32) -> (i32, i32, i32) {
    %c0_i32 = arith.constant 0 : i32
    %c0_i32_0 = arith.constant 0 : i32
    %c0_i32_1 = arith.constant 0 : i32
    return %arg0, %c0_i32, %c0_i32_0 : i32, i32, i32
  }
  func.func @transform_1(%arg0: i32) -> (i32, i32) {
    %c0_i32 = arith.constant 0 : i32
    %c0_i32_0 = arith.constant 0 : i32
    %c0_i32_1 = arith.constant 0 : i32
    return %c0_i32, %c0_i32_0 : i32, i32
  }
  func.func @transform_2(%arg0: i32) -> (i32, i32) {
    %c0_i32 = arith.constant 0 : i32
    %c0_i32_0 = arith.constant 0 : i32
    %c0_i32_1 = arith.constant 0 : i32
    return %c0_i32, %c0_i32_0 : i32, i32
  }
  func.func @transform_3(%arg0: i32) -> (i32, i32) {
    %c0_i32 = arith.constant 0 : i32
    %c0_i32_0 = arith.constant 0 : i32
    %c0_i32_1 = arith.constant 0 : i32
    return %c0_i32, %c0_i32_0 : i32, i32
  }
  func.func @transform_4(%arg0: i32) -> (i32, i32) {
    %c0_i32 = arith.constant 0 : i32
    %c0_i32_0 = arith.constant 0 : i32
    %c0_i32_1 = arith.constant 0 : i32
    return %c0_i32, %c0_i32_0 : i32, i32
  }
  func.func @transform_5(%arg0: i32) -> (i32, i32) {
    %c0_i32 = arith.constant 0 : i32
    %c0_i32_0 = arith.constant 0 : i32
    %c0_i32_1 = arith.constant 0 : i32
    return %c0_i32, %c0_i32_0 : i32, i32
  }
  func.func @transform_6(%arg0: i32) -> (i32, i32) {
    %c0_i32 = arith.constant 0 : i32
    %c0_i32_0 = arith.constant 0 : i32
    %c0_i32_1 = arith.constant 0 : i32
    return %c0_i32, %c0_i32_0 : i32, i32
  }
  func.func @transform_7(%arg0: i32) -> (i32, i32) {
    %c0_i32 = arith.constant 0 : i32
    %c0_i32_0 = arith.constant 0 : i32
    %c0_i32_1 = arith.constant 0 : i32
    return %c0_i32, %c0_i32_0 : i32, i32
  }
  func.func @transform_8(%arg0: i32) -> (i32, i32) {
    %c0_i32 = arith.constant 0 : i32
    %c0_i32_0 = arith.constant 0 : i32
    %c0_i32_1 = arith.constant 0 : i32
    return %c0_i32, %c0_i32_0 : i32, i32
  }
  func.func @transform_9(%arg0: i32) -> (i32, i32) {
    %c0_i32 = arith.constant 0 : i32
    %c0_i32_0 = arith.constant 0 : i32
    %c0_i32_1 = arith.constant 0 : i32
    return %c0_i32, %c0_i32_0 : i32, i32
  }
  func.func @transform_10(%arg0: i32) -> (i32, i32) {
    %c0_i32 = arith.constant 0 : i32
    %c0_i32_0 = arith.constant 0 : i32
    return %arg0, %c0_i32 : i32, i32
  }
}

</mosaic_0001>

<llo_original>
// kernel: tpu_custom_call.1
$region0: #{tpu_custom_call.1}
  #allocation0 [shape = 'u32[]', space=smem, size = 0x4, offset = 0x4, fixed_abs, tag = 'smem constant byte address 0x4 - core index']
  #allocation1 [shape = 'u32[144,128]{1,0:T(1,128)}', space=vmem, size = 0x12000, scoped, tag = 'internal scratch']
  %s0 = inlined_call_operand.hbm [shape: f32[16,32,256], index: 0, kind: input, shape index: {}]
  %s1 = inlined_call_operand.vmem [shape: f32[32,8], index: 1, kind: input, shape index: {}]
  %s2 = inlined_call_operand.hbm [shape: f32[8,32], index: 2, kind: input, shape index: {}]
  %s3 = inlined_call_operand.hbm [shape: f32[256,256], index: 3, kind: input, shape index: {}]
  %s4 = inlined_call_operand.hbm [shape: f32[256,256], index: 4, kind: input, shape index: {}]
  %s5 = inlined_call_operand.vmem [shape: f32[32,32], index: 5, kind: input, shape index: {}]
  %s6 = inlined_call_operand.hbm [shape: f32[32,32], index: 6, kind: input, shape index: {}]
  %s7 = inlined_call_operand.vmem [shape: f32[1,32], index: 7, kind: input, shape index: {}]
  %s8 = inlined_call_operand.vmem [shape: f32[32,128], index: 8, kind: input, shape index: {}]
  %s9 = inlined_call_operand.vmem [shape: f32[1,128], index: 9, kind: input, shape index: {}]
  %s10 = inlined_call_operand.hbm [shape: f32[16,128], index: 10, kind: output, shape index: {}]
  %s11 = sld [smem:[#allocation0]]
  $region93: #{tpu_custom_call.1} parent=0
    _
  %s13 = ssub.s32 1, %s11
  %s14 = scalar_select 0, %s13, %s11
  $region1: #{tpu_custom_call.1} parent=0
    #allocation2 [shape = 'u8[524288]{0}', space=vmem, size = 0x80000, scoped, tag = 'input window, operand 0']
    #allocation3 [shape = 's32[2]{0}', space=sflag, size = 0x8, scoped, tag = 'scoped memory for tpu_custom_call.1']
    #allocation4 [shape = 's32[2]{0}', space=sflag, size = 0x8, scoped, tag = 'scoped memory for tpu_custom_call.1']
    #allocation5 [shape = 'u8[4096]{0}', space=vmem, size = 0x1000, scoped, tag = 'input window, operand 2, single buffered']
    #allocation6 [shape = 's32[1]{0}', space=sflag, size = 0x4, scoped, tag = 'scoped memory for tpu_custom_call.1']
    #allocation7 [shape = 'u8[262144]{0}', space=vmem, size = 0x40000, scoped, tag = 'input window, operand 3, single buffered']
    #allocation8 [shape = 'u8[262144]{0}', space=vmem, size = 0x40000, scoped, tag = 'input window, operand 4, single buffered']
    #allocation9 [shape = 's32[1]{0}', space=sflag, size = 0x4, scoped, tag = 'scoped memory for tpu_custom_call.1']
    #allocation10 [shape = 'u8[16384]{0}', space=vmem, size = 0x4000, scoped, tag = 'input window, operand 6, single buffered']
    #allocation11 [shape = 'u8[8192]{0}', space=vmem, size = 0x2000, scoped, tag = 'output window, operand 0']
    %15 = vsyncpa [#allocation3], 0
    %s16 = scalar_lea.sflag [#allocation3], 1
    %17 = vsyncpa %s16, 0
    %18 = vsyncpa [#allocation6], 0
    %19 = vsyncpa [#allocation9], 0
    %20 = vsyncpa [#allocation4], 0
    %s21 = scalar_lea.sflag [#allocation4], 1
    %22 = vsyncpa %s21, 0
    loop: start=0, step=1, limit=4
    $region2: #{tpu_custom_call.1} parent=1 // loop_pre_header
      _
    $region3: #{tpu_custom_call.1} parent=1 // loop_header
      %s24 = sphi 0, %s28
      %p25 = scmp.ge.s32.totalorder %s24, 4
      %s34 = sphi 0, %s36
      %s37 = sphi 0, %s34
      %s38 = sphi 0, %s37
      %s54 = sphi 0, %s38
      %s58 = sphi 0, %s58
      %s60 = sphi 0, %s58
      %s61 = sphi 0, %s60
      %s75 = sphi 0, %s61
      %s79 = sphi 0, %s79
      %s81 = sphi 0, %s79
      %s82 = sphi 0, %s81
      %s96 = sphi 0, %s82
      %s100 = sphi 0, %s100
      %s102 = sphi 0, %s100
      %s103 = sphi 0, %s102
      %s117 = sphi 0, %s103
      %s121 = sphi 0, %s121
      %s123 = sphi 0, %s121
      %s124 = sphi 0, %s123
      %s138 = sphi 0, %s124
      %s142 = sphi 0, %s142
      %s144 = sphi 0, %s142
      %s145 = sphi 0, %s144
      %s159 = sphi 0, %s145
      %s163 = sphi 0, %s163
      %s165 = sphi 0, %s163
      %s166 = sphi 0, %s165
      %s180 = sphi 0, %s166
      %s184 = sphi 0, %s184
      %s186 = sphi 0, %s184
      %s187 = sphi 0, %s186
      %s201 = sphi 0, %s187
      %s205 = sphi 0, %s205
      %s207 = sphi 0, %s205
      %s208 = sphi 0, %s207
      %s222 = sphi 0, %s208
      %s226 = sphi 0, %s226
      %s228 = sphi 0, %s226
      %s229 = sphi 0, %s228
      %s243 = sphi 0, %s229
      %s249 = sphi 0, %s251
      %s252 = sphi 0, %s249
      %s253 = sphi 0, %s252
      %s269 = sphi 0, %s253
    $region4: #{tpu_custom_call.1} parent=1 // loop_header_branch
      %27 = sbr.rel (%p25) target = $region8
    $region5: #{tpu_custom_call.1} parent=1 // loop_body
      %s29 = ssub.s32 %s24, 1
      %s30 = ssub.s32 %s24, 2
      %s31 = sadd.s32 %s24, 1
      %s32 = ssub.s32 %s24, %s31
      %p33 = scmp.eq.s32.totalorder %s32, 0
      %s35 = sadd.s32 %s34, 1
      %s36 = scalar_select %p33, %s34, %s35
      %p39 = pneg %p33
      %p40 = scmp.eq.s32.totalorder %s24, 1
      %p41 = por %p39, %p40
      %p42 = scmp.ne.s32.totalorder %s34, %s37
      %p43 = scmp.eq.s32.totalorder %s24, 0
      %p44 = por %p42, %p43
      %p45 = scmp.ne.s32.totalorder %s34, %s37
      %p46 = scmp.eq.s32.totalorder %s29, 1
      %p47 = por %p45, %p46
      %p48 = scmp.ne.s32.totalorder %s37, %s38
      %p49 = scmp.eq.s32.totalorder %s29, 0
      %p50 = por %p48, %p49
      %p51 = scmp.ne.s32.totalorder %s37, %s38
      %p52 = scmp.eq.s32.totalorder %s30, 1
      %p53 = por %p51, %p52
      %p55 = scmp.ne.s32.totalorder %s38, %s54
      %p56 = scmp.eq.s32.totalorder %s30, 0
      %p57 = por %p55, %p56
      %s59 = sadd.s32 %s58, 1
      %p62 = scmp.eq.s32.totalorder %s24, 1
      %p63 = scmp.ne.s32.totalorder %s58, %s60
      %p64 = scmp.eq.s32.totalorder %s24, 0
      %p65 = por %p63, %p64
      %p66 = scmp.ne.s32.totalorder %s58, %s60
      %p67 = scmp.eq.s32.totalorder %s29, 1
      %p68 = por %p66, %p67
      %p69 = scmp.ne.s32.totalorder %s60, %s61
      %p70 = scmp.eq.s32.totalorder %s29, 0
      %p71 = por %p69, %p70
      %p72 = scmp.ne.s32.totalorder %s60, %s61
      %p73 = scmp.eq.s32.totalorder %s30, 1
      %p74 = por %p72, %p73
      %p76 = scmp.ne.s32.totalorder %s61, %s75
      %p77 = scmp.eq.s32.totalorder %s30, 0
      %p78 = por %p76, %p77
      %s80 = sadd.s32 %s79, 1
      %p83 = scmp.eq.s32.totalorder %s24, 1
      %p84 = scmp.ne.s32.totalorder %s79, %s81
      %p85 = scmp.eq.s32.totalorder %s24, 0
      %p86 = por %p84, %p85
      %p87 = scmp.ne.s32.totalorder %s79, %s81
      %p88 = scmp.eq.s32.totalorder %s29, 1
      %p89 = por %p87, %p88
      %p90 = scmp.ne.s32.totalorder %s81, %s82
      %p91 = scmp.eq.s32.totalorder %s29, 0
      %p92 = por %p90, %p91
      %p93 = scmp.ne.s32.totalorder %s81, %s82
      %p94 = scmp.eq.s32.totalorder %s30, 1
      %p95 = por %p93, %p94
      %p97 = scmp.ne.s32.totalorder %s82, %s96
      %p98 = scmp.eq.s32.totalorder %s30, 0
      %p99 = por %p97, %p98
      %s101 = sadd.s32 %s100, 1
      %p104 = scmp.eq.s32.totalorder %s24, 1
      %p105 = scmp.ne.s32.totalorder %s100, %s102
      %p106 = scmp.eq.s32.totalorder %s24, 0
      %p107 = por %p105, %p106
      %p108 = scmp.ne.s32.totalorder %s100, %s102
      %p109 = scmp.eq.s32.totalorder %s29, 1
      %p110 = por %p108, %p109
      %p111 = scmp.ne.s32.totalorder %s102, %s103
      %p112 = scmp.eq.s32.totalorder %s29, 0
      %p113 = por %p111, %p112
      %p114 = scmp.ne.s32.totalorder %s102, %s103
      %p115 = scmp.eq.s32.totalorder %s30, 1
      %p116 = por %p114, %p115
      %p118 = scmp.ne.s32.totalorder %s103, %s117
      %p119 = scmp.eq.s32.totalorder %s30, 0
      %p120 = por %p118, %p119
      %s122 = sadd.s32 %s121, 1
      %p125 = scmp.eq.s32.totalorder %s24, 1
      %p126 = scmp.ne.s32.totalorder %s121, %s123
      %p127 = scmp.eq.s32.totalorder %s24, 0
      %p128 = por %p126, %p127
      %p129 = scmp.ne.s32.totalorder %s121, %s123
      %p130 = scmp.eq.s32.totalorder %s29, 1
      %p131 = por %p129, %p130
      %p132 = scmp.ne.s32.totalorder %s123, %s124
      %p133 = scmp.eq.s32.totalorder %s29, 0
      %p134 = por %p132, %p133
      %p135 = scmp.ne.s32.totalorder %s123, %s124
      %p136 = scmp.eq.s32.totalorder %s30, 1
      %p137 = por %p135, %p136
      %p139 = scmp.ne.s32.totalorder %s124, %s138
      %p140 = scmp.eq.s32.totalorder %s30, 0
      %p141 = por %p139, %p140
      %s143 = sadd.s32 %s142, 1
      %p146 = scmp.eq.s32.totalorder %s24, 1
      %p147 = scmp.ne.s32.totalorder %s142, %s144
      %p148 = scmp.eq.s32.totalorder %s24, 0
      %p149 = por %p147, %p148
      %p150 = scmp.ne.s32.totalorder %s142, %s144
      %p151 = scmp.eq.s32.totalorder %s29, 1
      %p152 = por %p150, %p151
      %p153 = scmp.ne.s32.totalorder %s144, %s145
      %p154 = scmp.eq.s32.totalorder %s29, 0
      %p155 = por %p153, %p154
      %p156 = scmp.ne.s32.totalorder %s144, %s145
      %p157 = scmp.eq.s32.totalorder %s30, 1
      %p158 = por %p156, %p157
      %p160 = scmp.ne.s32.totalorder %s145, %s159
      %p161 = scmp.eq.s32.totalorder %s30, 0
      %p162 = por %p160, %p161
      %s164 = sadd.s32 %s163, 1
      %p167 = scmp.eq.s32.totalorder %s24, 1
      %p168 = scmp.ne.s32.totalorder %s163, %s165
      %p169 = scmp.eq.s32.totalorder %s24, 0
      %p170 = por %p168, %p169
      %p171 = scmp.ne.s32.totalorder %s163, %s165
      %p172 = scmp.eq.s32.totalorder %s29, 1
      %p173 = por %p171, %p172
      %p174 = scmp.ne.s32.totalorder %s165, %s166
      %p175 = scmp.eq.s32.totalorder %s29, 0
      %p176 = por %p174, %p175
      %p177 = scmp.ne.s32.totalorder %s165, %s166
      %p178 = scmp.eq.s32.totalorder %s30, 1
      %p179 = por %p177, %p178
      %p181 = scmp.ne.s32.totalorder %s166, %s180
      %p182 = scmp.eq.s32.totalorder %s30, 0
      %p183 = por %p181, %p182
      %s185 = sadd.s32 %s184, 1
      %p188 = scmp.eq.s32.totalorder %s24, 1
      %p189 = scmp.ne.s32.totalorder %s184, %s186
      %p190 = scmp.eq.s32.totalorder %s24, 0
      %p191 = por %p189, %p190
      %p192 = scmp.ne.s32.totalorder %s184, %s186
      %p193 = scmp.eq.s32.totalorder %s29, 1
      %p194 = por %p192, %p193
      %p195 = scmp.ne.s32.totalorder %s186, %s187
      %p196 = scmp.eq.s32.totalorder %s29, 0
      %p197 = por %p195, %p196
      %p198 = scmp.ne.s32.totalorder %s186, %s187
      %p199 = scmp.eq.s32.totalorder %s30, 1
      %p200 = por %p198, %p199
      %p202 = scmp.ne.s32.totalorder %s187, %s201
      %p203 = scmp.eq.s32.totalorder %s30, 0
      %p204 = por %p202, %p203
      %s206 = sadd.s32 %s205, 1
      %p209 = scmp.eq.s32.totalorder %s24, 1
      %p210 = scmp.ne.s32.totalorder %s205, %s207
      %p211 = scmp.eq.s32.totalorder %s24, 0
      %p212 = por %p210, %p211
      %p213 = scmp.ne.s32.totalorder %s205, %s207
      %p214 = scmp.eq.s32.totalorder %s29, 1
      %p215 = por %p213, %p214
      %p216 = scmp.ne.s32.totalorder %s207, %s208
      %p217 = scmp.eq.s32.totalorder %s29, 0
      %p218 = por %p216, %p217
      %p219 = scmp.ne.s32.totalorder %s207, %s208
      %p220 = scmp.eq.s32.totalorder %s30, 1
      %p221 = por %p219, %p220
      %p223 = scmp.ne.s32.totalorder %s208, %s222
      %p224 = scmp.eq.s32.totalorder %s30, 0
      %p225 = por %p223, %p224
      %s227 = sadd.s32 %s226, 1
      %p230 = scmp.eq.s32.totalorder %s24, 1
      %p231 = scmp.ne.s32.totalorder %s226, %s228
      %p232 = scmp.eq.s32.totalorder %s24, 0
      %p233 = por %p231, %p232
      %p234 = scmp.ne.s32.totalorder %s226, %s228
      %p235 = scmp.eq.s32.totalorder %s29, 1
      %p236 = por %p234, %p235
      %p237 = scmp.ne.s32.totalorder %s228, %s229
      %p238 = scmp.eq.s32.totalorder %s29, 0
      %p239 = por %p237, %p238
      %p240 = scmp.ne.s32.totalorder %s228, %s229
      %p241 = scmp.eq.s32.totalorder %s30, 1
      %p242 = por %p240, %p241
      %p244 = scmp.ne.s32.totalorder %s229, %s243
      %p245 = scmp.eq.s32.totalorder %s30, 0
      %p246 = por %p244, %p245
      %s247 = ssub.s32 %s24, %s31
      %p248 = scmp.eq.s32.totalorder %s247, 0
      %s250 = sadd.s32 %s249, 1
      %s251 = scalar_select %p248, %s249, %s250
      %p254 = pneg %p248
      %p255 = scmp.eq.s32.totalorder %s24, 1
      %p256 = por %p254, %p255
      %p257 = scmp.ne.s32.totalorder %s249, %s252
      %p258 = scmp.eq.s32.totalorder %s24, 0
      %p259 = por %p257, %p258
      %p260 = scmp.ne.s32.totalorder %s249, %s252
      %p261 = scmp.eq.s32.totalorder %s29, 1
      %p262 = por %p260, %p261
      %p263 = scmp.ne.s32.totalorder %s252, %s253
      %p264 = scmp.eq.s32.totalorder %s29, 0
      %p265 = por %p263, %p264
      %p266 = scmp.ne.s32.totalorder %s252, %s253
      %p267 = scmp.eq.s32.totalorder %s30, 1
      %p268 = por %p266, %p267
      %p270 = scmp.ne.s32.totalorder %s253, %s269
      %p271 = scmp.eq.s32.totalorder %s30, 0
      %p272 = por %p270, %p271
      %p273 = scmp.le.s32.totalorder 1, %s24
      %p274 = scmp.lt.s32.totalorder %s24, 3
      %p275 = pnand %p273, %p274
      %p276 = pneg %p275
      // Predicated region
      $region9: #{tpu_custom_call.1} parent=5 // pred_check
        _
      $region10: #{tpu_custom_call.1} parent=5 // pred_check_branch
        %278 = sbr.rel (%p275) target = $region12
      $region11: #{tpu_custom_call.1} parent=5 // pred_region
        %s279 = ssub.s32 %s24, 1
        // Predicated region
        $region13: #{tpu_custom_call.1} parent=11 // pred_check
          %p280 = pneg %p71
        $region14: #{tpu_custom_call.1} parent=11 // pred_check_branch
          %282 = sbr.rel (%p280) target = $region16
        $region15: #{tpu_custom_call.1} parent=11 // pred_region
          _
        $region16: #{tpu_custom_call.1} parent=11 // pred_fallthru
          _
        // Predicated region
        $region17: #{tpu_custom_call.1} parent=11 // pred_check
          %p283 = pneg %p92
        $region18: #{tpu_custom_call.1} parent=11 // pred_check_branch
          %285 = sbr.rel (%p283) target = $region20
        $region19: #{tpu_custom_call.1} parent=11 // pred_region
          %s287 = ssub.s32 128, 128
          %288 = vsyncadd [#allocation6], %s287
          %s290 = sshll.u32 [#allocation5], 4
          %s291 = int_to_ptr.vmem [resolvable:$true] %s290
          %293 = dma.hbm_to_vmem [thread:$0]  %s2, 128, %s291, [#allocation6]
        $region20: #{tpu_custom_call.1} parent=11 // pred_fallthru
          _
        // Predicated region
        $region21: #{tpu_custom_call.1} parent=11 // pred_check
          %p294 = pneg %p113
        $region22: #{tpu_custom_call.1} parent=11 // pred_check_branch
          %296 = sbr.rel (%p294) target = $region24
        $region23: #{tpu_custom_call.1} parent=11 // pred_region
          %s298 = ssub.s32 8192, 8192
          %299 = vsyncadd [#allocation6], %s298
          %s300 = sshll.u32 [#allocation7], 4
          %s301 = int_to_ptr.vmem [resolvable:$true] %s300
          %306 = dma.hbm_to_vmem [thread:$0]  %s3, 8192, %s301, [#allocation6], 256, 256, 16
        $region24: #{tpu_custom_call.1} parent=11 // pred_fallthru
          _
        // Predicated region
        $region25: #{tpu_custom_call.1} parent=11 // pred_check
          %p307 = pneg %p134
        $region26: #{tpu_custom_call.1} parent=11 // pred_check_branch
          %309 = sbr.rel (%p307) target = $region28
        $region27: #{tpu_custom_call.1} parent=11 // pred_region
          %s311 = ssub.s32 8192, 8192
          %312 = vsyncadd [#allocation9], %s311
          %s313 = sshll.u32 [#allocation8], 4
          %s314 = int_to_ptr.vmem [resolvable:$true] %s313
          %319 = dma.hbm_to_vmem [thread:$0]  %s4, 8192, %s314, [#allocation9], 256, 256, 16
        $region28: #{tpu_custom_call.1} parent=11 // pred_fallthru
          _
        // Predicated region
        $region29: #{tpu_custom_call.1} parent=11 // pred_check
          %p320 = pneg %p155
        $region30: #{tpu_custom_call.1} parent=11 // pred_check_branch
          %322 = sbr.rel (%p320) target = $region32
        $region31: #{tpu_custom_call.1} parent=11 // pred_region
          _
        $region32: #{tpu_custom_call.1} parent=11 // pred_fallthru
          _
        // Predicated region
        $region33: #{tpu_custom_call.1} parent=11 // pred_check
          %p323 = pneg %p176
        $region34: #{tpu_custom_call.1} parent=11 // pred_check_branch
          %325 = sbr.rel (%p323) target = $region36
        $region35: #{tpu_custom_call.1} parent=11 // pred_region
          %s327 = ssub.s32 512, 512
          %328 = vsyncadd [#allocation9], %s327
          %s329 = sshll.u32 [#allocation10], 4
          %s330 = int_to_ptr.vmem [resolvable:$true] %s329
          %335 = dma.hbm_to_vmem [thread:$0]  %s6, 512, %s330, [#allocation9], 128, 128, 8
        $region36: #{tpu_custom_call.1} parent=11 // pred_fallthru
          _
        // Predicated region
        $region37: #{tpu_custom_call.1} parent=11 // pred_check
          %p336 = pneg %p197
        $region38: #{tpu_custom_call.1} parent=11 // pred_check_branch
          %338 = sbr.rel (%p336) target = $region40
        $region39: #{tpu_custom_call.1} parent=11 // pred_region
          _
        $region40: #{tpu_custom_call.1} parent=11 // pred_fallthru
          _
        // Predicated region
        $region41: #{tpu_custom_call.1} parent=11 // pred_check
          %p339 = pneg %p218
        $region42: #{tpu_custom_call.1} parent=11 // pred_check_branch
          %341 = sbr.rel (%p339) target = $region44
        $region43: #{tpu_custom_call.1} parent=11 // pred_region
          _
        $region44: #{tpu_custom_call.1} parent=11 // pred_fallthru
          _
        // Predicated region
        $region45: #{tpu_custom_call.1} parent=11 // pred_check
          %p342 = pneg %p239
        $region46: #{tpu_custom_call.1} parent=11 // pred_check_branch
          %344 = sbr.rel (%p342) target = $region48
        $region47: #{tpu_custom_call.1} parent=11 // pred_region
          _
        $region48: #{tpu_custom_call.1} parent=11 // pred_fallthru
          _
      $region12: #{tpu_custom_call.1} parent=5 // pred_fallthru
        _
      %p345 = scmp.lt.s32.totalorder %s24, 2
      // Predicated region
      $region49: #{tpu_custom_call.1} parent=5 // pred_check
        %p346 = pneg %p345
      $region50: #{tpu_custom_call.1} parent=5 // pred_check_branch
        %348 = sbr.rel (%p346) target = $region52
      $region51: #{tpu_custom_call.1} parent=5 // pred_region
        // Predicated region
        $region53: #{tpu_custom_call.1} parent=51 // pred_check
          %p349 = pneg %p44
        $region54: #{tpu_custom_call.1} parent=51 // pred_check_branch
          %351 = sbr.rel (%p349) target = $region56
        $region55: #{tpu_custom_call.1} parent=51 // pred_region
          %s352 = sand.u32 %s34, 1
          %s353 = scalar_lea.sflag [#allocation3], %s352
          %s354 = sand.u32 %s34, 1
          %s355 = smul.addr %s354, 512
          %s356 = scalar_lea.vmem [#allocation2], %s355
          %s357 = smul.u32 8, %s24
          %s359 = ssub.s32 8192, 8192
          %360 = vsyncadd %s353, %s359
          %s361 = smul.addr %s357, 8
          %s362 = smul.addr %s361, 128
          %s363 = scalar_lea.hbm %s0, %s362
          %s364 = sshll.u32 %s356, 4
          %s365 = int_to_ptr.vmem [resolvable:$true] %s364
          %370 = dma.hbm_to_vmem [thread:$0]  %s363, 8192, %s365, %s353, 256, 256, 16
        $region56: #{tpu_custom_call.1} parent=51 // pred_fallthru
          _
      $region52: #{tpu_custom_call.1} parent=5 // pred_fallthru
        _
      %p371 = scmp.le.s32.totalorder 1, %s24
      %p372 = scmp.lt.s32.totalorder %s24, 3
      %p373 = pnand %p371, %p372
      %p374 = pneg %p373
      // Predicated region
      $region57: #{tpu_custom_call.1} parent=5 // pred_check
        _
      $region58: #{tpu_custom_call.1} parent=5 // pred_check_branch
        %376 = sbr.rel (%p373) target = $region60
      $region59: #{tpu_custom_call.1} parent=5 // pred_region
        %s377 = ssub.s32 %s24, 1
        %s378 = sand.u32 %s37, 1
        %s379 = scalar_lea.sflag [#allocation3], %s378
        %s380 = sand.u32 %s37, 1
        %s381 = smul.addr %s380, 512
        %s382 = scalar_lea.vmem [#allocation2], %s381
        // Predicated region
        $region61: #{tpu_custom_call.1} parent=59 // pred_check
          %p383 = pneg %p50
        $region62: #{tpu_custom_call.1} parent=59 // pred_check_branch
          %385 = sbr.rel (%p383) target = $region64
        $region63: #{tpu_custom_call.1} parent=59 // pred_region
          %386 = dma.done %s379, 8192
        $region64: #{tpu_custom_call.1} parent=59 // pred_fallthru
          _
        // Predicated region
        $region65: #{tpu_custom_call.1} parent=59 // pred_check
          %p387 = pneg %p92
        $region66: #{tpu_custom_call.1} parent=59 // pred_check_branch
          %389 = sbr.rel (%p387) target = $region68
        $region67: #{tpu_custom_call.1} parent=59 // pred_region
          %390 = dma.done [#allocation6], 128
        $region68: #{tpu_custom_call.1} parent=59 // pred_fallthru
          _
        // Predicated region
        $region69: #{tpu_custom_call.1} parent=59 // pred_check
          %p391 = pneg %p113
        $region70: #{tpu_custom_call.1} parent=59 // pred_check_branch
          %393 = sbr.rel (%p391) target = $region72
        $region71: #{tpu_custom_call.1} parent=59 // pred_region
          %394 = dma.done [#allocation6], 8192
        $region72: #{tpu_custom_call.1} parent=59 // pred_fallthru
          _
        // Predicated region
        $region73: #{tpu_custom_call.1} parent=59 // pred_check
          %p395 = pneg %p134
        $region74: #{tpu_custom_call.1} parent=59 // pred_check_branch
          %397 = sbr.rel (%p395) target = $region76
        $region75: #{tpu_custom_call.1} parent=59 // pred_region
          %398 = dma.done [#allocation9], 8192
        $region76: #{tpu_custom_call.1} parent=59 // pred_fallthru
          _
        // Predicated region
        $region77: #{tpu_custom_call.1} parent=59 // pred_check
          %p399 = pneg %p176
        $region78: #{tpu_custom_call.1} parent=59 // pred_check_branch
          %401 = sbr.rel (%p399) target = $region80
        $region79: #{tpu_custom_call.1} parent=59 // pred_region
          %402 = dma.done [#allocation9], 512
        $region80: #{tpu_custom_call.1} parent=59 // pred_fallthru
          _
        %s403 = sand.u32 %s37, 1
        %s404 = scalar_lea.sflag [#allocation3], %s403
        %s405 = sand.u32 %s37, 1
        %s406 = smul.addr %s405, 512
        %s407 = scalar_lea.vmem [#allocation2], %s406
        %p408 = pneg %p50
        %p409 = pneg %p47
        %p410 = pneg %p71
        %p411 = pneg %p68
        %p412 = pneg %p92
        %p413 = pneg %p89
        %p414 = pneg %p113
        %p415 = pneg %p110
        %p416 = pneg %p134
        %p417 = pneg %p131
        %p418 = pneg %p155
        %p419 = pneg %p152
        %p420 = pneg %p176
        %p421 = pneg %p173
        %p422 = pneg %p197
        %p423 = pneg %p194
        %p424 = pneg %p218
        %p425 = pneg %p215
        %p426 = pneg %p239
        %p427 = pneg %p236
        %p428 = pneg %p265
        %p429 = pneg %p262
        %s430 = sand.u32 %s252, 1
        %s431 = scalar_lea.sflag [#allocation4], %s430
        %s432 = sand.u32 %s252, 1
        %s433 = smul.addr %s432, 8
        %s434 = scalar_lea.vmem [#allocation11], %s433
        %s435 = smul.u32 8, %s29
        %v436 = vld [vmem:[%s382] sm:$0xff]
        %v437 = vld [vmem:[%s382 + $0x8] sm:$0xff]
        %v438 = vld [vmem:[%s382 + $0x10] sm:$0xff]
        %v439 = vld [vmem:[%s382 + $0x18] sm:$0xff]
        %v440 = vld [vmem:[%s382 + $0x20] sm:$0xff]
        %v441 = vld [vmem:[%s382 + $0x28] sm:$0xff]
        %v442 = vld [vmem:[%s382 + $0x30] sm:$0xff]
        %v443 = vld [vmem:[%s382 + $0x38] sm:$0xff]
        %v444 = vld [vmem:[%s382 + $0x40] sm:$0xff]
        %v445 = vld [vmem:[%s382 + $0x48] sm:$0xff]
        %v446 = vld [vmem:[%s382 + $0x50] sm:$0xff]
        %v447 = vld [vmem:[%s382 + $0x58] sm:$0xff]
        %v448 = vld [vmem:[%s382 + $0x60] sm:$0xff]
        %v449 = vld [vmem:[%s382 + $0x68] sm:$0xff]
        %v450 = vld [vmem:[%s382 + $0x70] sm:$0xff]
        %v451 = vld [vmem:[%s382 + $0x78] sm:$0xff]
        %v452 = vld [vmem:[%s382 + $0x80] sm:$0xff]
        %v453 = vld [vmem:[%s382 + $0x88] sm:$0xff]
        %v454 = vld [vmem:[%s382 + $0x90] sm:$0xff]
        %v455 = vld [vmem:[%s382 + $0x98] sm:$0xff]
        %v456 = vld [vmem:[%s382 + $0xa0] sm:$0xff]
        %v457 = vld [vmem:[%s382 + $0xa8] sm:$0xff]
        %v458 = vld [vmem:[%s382 + $0xb0] sm:$0xff]
        %v459 = vld [vmem:[%s382 + $0xb8] sm:$0xff]
        %v460 = vld [vmem:[%s382 + $0xc0] sm:$0xff]
        %v461 = vld [vmem:[%s382 + $0xc8] sm:$0xff]
        %v462 = vld [vmem:[%s382 + $0xd0] sm:$0xff]
        %v463 = vld [vmem:[%s382 + $0xd8] sm:$0xff]
        %v464 = vld [vmem:[%s382 + $0xe0] sm:$0xff]
        %v465 = vld [vmem:[%s382 + $0xe8] sm:$0xff]
        %v466 = vld [vmem:[%s382 + $0xf0] sm:$0xff]
        %v467 = vld [vmem:[%s382 + $0xf8] sm:$0xff]
        %v468 = vld [vmem:[%s382 + $0x100] sm:$0xff]
        %v469 = vld [vmem:[%s382 + $0x108] sm:$0xff]
        %v470 = vld [vmem:[%s382 + $0x110] sm:$0xff]
        %v471 = vld [vmem:[%s382 + $0x118] sm:$0xff]
        %v472 = vld [vmem:[%s382 + $0x120] sm:$0xff]
        %v473 = vld [vmem:[%s382 + $0x128] sm:$0xff]
        %v474 = vld [vmem:[%s382 + $0x130] sm:$0xff]
        %v475 = vld [vmem:[%s382 + $0x138] sm:$0xff]
        %v476 = vld [vmem:[%s382 + $0x140] sm:$0xff]
        %v477 = vld [vmem:[%s382 + $0x148] sm:$0xff]
        %v478 = vld [vmem:[%s382 + $0x150] sm:$0xff]
        %v479 = vld [vmem:[%s382 + $0x158] sm:$0xff]
        %v480 = vld [vmem:[%s382 + $0x160] sm:$0xff]
        %v481 = vld [vmem:[%s382 + $0x168] sm:$0xff]
        %v482 = vld [vmem:[%s382 + $0x170] sm:$0xff]
        %v483 = vld [vmem:[%s382 + $0x178] sm:$0xff]
        %v484 = vld [vmem:[%s382 + $0x180] sm:$0xff]
        %v485 = vld [vmem:[%s382 + $0x188] sm:$0xff]
        %v486 = vld [vmem:[%s382 + $0x190] sm:$0xff]
        %v487 = vld [vmem:[%s382 + $0x198] sm:$0xff]
        %v488 = vld [vmem:[%s382 + $0x1a0] sm:$0xff]
        %v489 = vld [vmem:[%s382 + $0x1a8] sm:$0xff]
        %v490 = vld [vmem:[%s382 + $0x1b0] sm:$0xff]
        %v491 = vld [vmem:[%s382 + $0x1b8] sm:$0xff]
        %v492 = vld [vmem:[%s382 + $0x1c0] sm:$0xff]
        %v493 = vld [vmem:[%s382 + $0x1c8] sm:$0xff]
        %v494 = vld [vmem:[%s382 + $0x1d0] sm:$0xff]
        %v495 = vld [vmem:[%s382 + $0x1d8] sm:$0xff]
        %v496 = vld [vmem:[%s382 + $0x1e0] sm:$0xff]
        %v497 = vld [vmem:[%s382 + $0x1e8] sm:$0xff]
        %v498 = vld [vmem:[%s382 + $0x1f0] sm:$0xff]
        %v499 = vld [vmem:[%s382 + $0x1f8] sm:$0xff]
        %v500 = vadd.f32 %v436, %v437
        %501 = vadd.xlane.f32.xlu0 %v500
        %v502 = vpop.xlane.xlu0 %501
        %v503 = vadd.f32 %v438, %v439
        %504 = vadd.xlane.f32.xlu0 %v503
        %v505 = vpop.xlane.xlu0 %504
        %v506 = vadd.f32 %v440, %v441
        %507 = vadd.xlane.f32.xlu0 %v506
        %v508 = vpop.xlane.xlu0 %507
        %v509 = vadd.f32 %v442, %v443
        %510 = vadd.xlane.f32.xlu0 %v509
        %v511 = vpop.xlane.xlu0 %510
        %v512 = vadd.f32 %v444, %v445
        %513 = vadd.xlane.f32.xlu0 %v512
        %v514 = vpop.xlane.xlu0 %513
        %v515 = vadd.f32 %v446, %v447
        %516 = vadd.xlane.f32.xlu0 %v515
        %v517 = vpop.xlane.xlu0 %516
        %v518 = vadd.f32 %v448, %v449
        %519 = vadd.xlane.f32.xlu0 %v518
        %v520 = vpop.xlane.xlu0 %519
        %v521 = vadd.f32 %v450, %v451
        %522 = vadd.xlane.f32.xlu0 %v521
        %v523 = vpop.xlane.xlu0 %522
        %v524 = vadd.f32 %v452, %v453
        %525 = vadd.xlane.f32.xlu0 %v524
        %v526 = vpop.xlane.xlu0 %525
        %v527 = vadd.f32 %v454, %v455
        %528 = vadd.xlane.f32.xlu0 %v527
        %v529 = vpop.xlane.xlu0 %528
        %v530 = vadd.f32 %v456, %v457
        %531 = vadd.xlane.f32.xlu0 %v530
        %v532 = vpop.xlane.xlu0 %531
        %v533 = vadd.f32 %v458, %v459
        %534 = vadd.xlane.f32.xlu0 %v533
        %v535 = vpop.xlane.xlu0 %534
        %v536 = vadd.f32 %v460, %v461
        %537 = vadd.xlane.f32.xlu0 %v536
        %v538 = vpop.xlane.xlu0 %537
        %v539 = vadd.f32 %v462, %v463
        %540 = vadd.xlane.f32.xlu0 %v539
        %v541 = vpop.xlane.xlu0 %540
        %v542 = vadd.f32 %v464, %v465
        %543 = vadd.xlane.f32.xlu0 %v542
        %v544 = vpop.xlane.xlu0 %543
        %v545 = vadd.f32 %v466, %v467
        %546 = vadd.xlane.f32.xlu0 %v545
        %v547 = vpop.xlane.xlu0 %546
        %v548 = vadd.f32 %v468, %v469
        %549 = vadd.xlane.f32.xlu0 %v548
        %v550 = vpop.xlane.xlu0 %549
        %v551 = vadd.f32 %v470, %v471
        %552 = vadd.xlane.f32.xlu0 %v551
        %v553 = vpop.xlane.xlu0 %552
        %v554 = vadd.f32 %v472, %v473
        %555 = vadd.xlane.f32.xlu0 %v554
        %v556 = vpop.xlane.xlu0 %555
        %v557 = vadd.f32 %v474, %v475
        %558 = vadd.xlane.f32.xlu0 %v557
        %v559 = vpop.xlane.xlu0 %558
        %v560 = vadd.f32 %v476, %v477
        %561 = vadd.xlane.f32.xlu0 %v560
        %v562 = vpop.xlane.xlu0 %561
        %v563 = vadd.f32 %v478, %v479
        %564 = vadd.xlane.f32.xlu0 %v563
        %v565 = vpop.xlane.xlu0 %564
        %v566 = vadd.f32 %v480, %v481
        %567 = vadd.xlane.f32.xlu0 %v566
        %v568 = vpop.xlane.xlu0 %567
        %v569 = vadd.f32 %v482, %v483
        %570 = vadd.xlane.f32.xlu0 %v569
        %v571 = vpop.xlane.xlu0 %570
        %v572 = vadd.f32 %v484, %v485
        %573 = vadd.xlane.f32.xlu0 %v572
        %v574 = vpop.xlane.xlu0 %573
        %v575 = vadd.f32 %v486, %v487
        %576 = vadd.xlane.f32.xlu0 %v575
        %v577 = vpop.xlane.xlu0 %576
        %v578 = vadd.f32 %v488, %v489
        %579 = vadd.xlane.f32.xlu0 %v578
        %v580 = vpop.xlane.xlu0 %579
        %v581 = vadd.f32 %v490, %v491
        %582 = vadd.xlane.f32.xlu0 %v581
        %v583 = vpop.xlane.xlu0 %582
        %v584 = vadd.f32 %v492, %v493
        %585 = vadd.xlane.f32.xlu0 %v584
        %v586 = vpop.xlane.xlu0 %585
        %v587 = vadd.f32 %v494, %v495
        %588 = vadd.xlane.f32.xlu0 %v587
        %v589 = vpop.xlane.xlu0 %588
        %v590 = vadd.f32 %v496, %v497
        %591 = vadd.xlane.f32.xlu0 %v590
        %v592 = vpop.xlane.xlu0 %591
        %v593 = vadd.f32 %v498, %v499
        %594 = vadd.xlane.f32.xlu0 %v593
        %v595 = vpop.xlane.xlu0 %594
        %v596 = vmul.f32 %v502, 0.00390625
        %v597 = vmul.f32 %v505, 0.00390625
        %v598 = vmul.f32 %v508, 0.00390625
        %v599 = vmul.f32 %v511, 0.00390625
        %v600 = vmul.f32 %v514, 0.00390625
        %v601 = vmul.f32 %v517, 0.00390625
        %v602 = vmul.f32 %v520, 0.00390625
        %v603 = vmul.f32 %v523, 0.00390625
        %v604 = vmul.f32 %v526, 0.00390625
        %v605 = vmul.f32 %v529, 0.00390625
        %v606 = vmul.f32 %v532, 0.00390625
        %v607 = vmul.f32 %v535, 0.00390625
        %v608 = vmul.f32 %v538, 0.00390625
        %v609 = vmul.f32 %v541, 0.00390625
        %v610 = vmul.f32 %v544, 0.00390625
        %v611 = vmul.f32 %v547, 0.00390625
        %v612 = vmul.f32 %v550, 0.00390625
        %v613 = vmul.f32 %v553, 0.00390625
        %v614 = vmul.f32 %v556, 0.00390625
        %v615 = vmul.f32 %v559, 0.00390625
        %v616 = vmul.f32 %v562, 0.00390625
        %v617 = vmul.f32 %v565, 0.00390625
        %v618 = vmul.f32 %v568, 0.00390625
        %v619 = vmul.f32 %v571, 0.00390625
        %v620 = vmul.f32 %v574, 0.00390625
        %v621 = vmul.f32 %v577, 0.00390625
        %v622 = vmul.f32 %v580, 0.00390625
        %v623 = vmul.f32 %v583, 0.00390625
        %v624 = vmul.f32 %v586, 0.00390625
        %v625 = vmul.f32 %v589, 0.00390625
        %v626 = vmul.f32 %v592, 0.00390625
        %v627 = vmul.f32 %v595, 0.00390625
        %v628 = vmax.f32 %v436, %v437
        %629 = vmax.xlane.f32.xlu0 %v628
        %v630 = vpop.xlane.xlu0 %629
        %v631 = vmax.f32 %v438, %v439
        %632 = vmax.xlane.f32.xlu0 %v631
        %v633 = vpop.xlane.xlu0 %632
        %v634 = vmax.f32 %v440, %v441
        %635 = vmax.xlane.f32.xlu0 %v634
        %v636 = vpop.xlane.xlu0 %635
        %v637 = vmax.f32 %v442, %v443
        %638 = vmax.xlane.f32.xlu0 %v637
        %v639 = vpop.xlane.xlu0 %638
        %v640 = vmax.f32 %v444, %v445
        %641 = vmax.xlane.f32.xlu0 %v640
        %v642 = vpop.xlane.xlu0 %641
        %v643 = vmax.f32 %v446, %v447
        %644 = vmax.xlane.f32.xlu0 %v643
        %v645 = vpop.xlane.xlu0 %644
        %v646 = vmax.f32 %v448, %v449
        %647 = vmax.xlane.f32.xlu0 %v646
        %v648 = vpop.xlane.xlu0 %647
        %v649 = vmax.f32 %v450, %v451
        %650 = vmax.xlane.f32.xlu0 %v649
        %v651 = vpop.xlane.xlu0 %650
        %v652 = vmax.f32 %v452, %v453
        %653 = vmax.xlane.f32.xlu0 %v652
        %v654 = vpop.xlane.xlu0 %653
        %v655 = vmax.f32 %v454, %v455
        %656 = vmax.xlane.f32.xlu0 %v655
        %v657 = vpop.xlane.xlu0 %656
        %v658 = vmax.f32 %v456, %v457
        %659 = vmax.xlane.f32.xlu0 %v658
        %v660 = vpop.xlane.xlu0 %659
        %v661 = vmax.f32 %v458, %v459
        %662 = vmax.xlane.f32.xlu0 %v661
        %v663 = vpop.xlane.xlu0 %662
        %v664 = vmax.f32 %v460, %v461
        %665 = vmax.xlane.f32.xlu0 %v664
        %v666 = vpop.xlane.xlu0 %665
        %v667 = vmax.f32 %v462, %v463
        %668 = vmax.xlane.f32.xlu0 %v667
        %v669 = vpop.xlane.xlu0 %668
        %v670 = vmax.f32 %v464, %v465
        %671 = vmax.xlane.f32.xlu0 %v670
        %v672 = vpop.xlane.xlu0 %671
        %v673 = vmax.f32 %v466, %v467
        %674 = vmax.xlane.f32.xlu0 %v673
        %v675 = vpop.xlane.xlu0 %674
        %v676 = vmax.f32 %v468, %v469
        %677 = vmax.xlane.f32.xlu0 %v676
        %v678 = vpop.xlane.xlu0 %677
        %v679 = vmax.f32 %v470, %v471
        %680 = vmax.xlane.f32.xlu0 %v679
        %v681 = vpop.xlane.xlu0 %680
        %v682 = vmax.f32 %v472, %v473
        %683 = vmax.xlane.f32.xlu0 %v682
        %v684 = vpop.xlane.xlu0 %683
        %v685 = vmax.f32 %v474, %v475
        %686 = vmax.xlane.f32.xlu0 %v685
        %v687 = vpop.xlane.xlu0 %686
        %v688 = vmax.f32 %v476, %v477
        %689 = vmax.xlane.f32.xlu0 %v688
        %v690 = vpop.xlane.xlu0 %689
        %v691 = vmax.f32 %v478, %v479
        %692 = vmax.xlane.f32.xlu0 %v691
        %v693 = vpop.xlane.xlu0 %692
        %v694 = vmax.f32 %v480, %v481
        %695 = vmax.xlane.f32.xlu0 %v694
        %v696 = vpop.xlane.xlu0 %695
        %v697 = vmax.f32 %v482, %v483
        %698 = vmax.xlane.f32.xlu0 %v697
        %v699 = vpop.xlane.xlu0 %698
        %v700 = vmax.f32 %v484, %v485
        %701 = vmax.xlane.f32.xlu0 %v700
        %v702 = vpop.xlane.xlu0 %701
        %v703 = vmax.f32 %v486, %v487
        %704 = vmax.xlane.f32.xlu0 %v703
        %v705 = vpop.xlane.xlu0 %704
        %v706 = vmax.f32 %v488, %v489
        %707 = vmax.xlane.f32.xlu0 %v706
        %v708 = vpop.xlane.xlu0 %707
        %v709 = vmax.f32 %v490, %v491
        %710 = vmax.xlane.f32.xlu0 %v709
        %v711 = vpop.xlane.xlu0 %710
        %v712 = vmax.f32 %v492, %v493
        %713 = vmax.xlane.f32.xlu0 %v712
        %v714 = vpop.xlane.xlu0 %713
        %v715 = vmax.f32 %v494, %v495
        %716 = vmax.xlane.f32.xlu0 %v715
        %v717 = vpop.xlane.xlu0 %716
        %v718 = vmax.f32 %v496, %v497
        %719 = vmax.xlane.f32.xlu0 %v718
        %v720 = vpop.xlane.xlu0 %719
        %v721 = vmax.f32 %v498, %v499
        %722 = vmax.xlane.f32.xlu0 %v721
        %v723 = vpop.xlane.xlu0 %722
        %v756 = vlaneseq
        %v757 = vand.u32 %v756, 127
        %v758 = vlaneseq
        %v759 = vshrl.u32 %v758, 7
        %v760 = vsub.s32 %v757, %v759
        %v761 = vrot.slane %v596, %v760
        %v762 = vadd.s32 %v757, 4294967288
        %v763 = vlaneseq
        %v764 = vshrl.u32 %v763, 7
        %v765 = vsub.s32 %v762, %v764
        %v766 = vrot.slane %v597, %v765
        %vm767 = vcmask 130112
        %v768 = vsel %vm767, %v766, %v761
        %v769 = vadd.s32 %v757, 4294967280
        %v770 = vlaneseq
        %v771 = vshrl.u32 %v770, 7
        %v772 = vsub.s32 %v769, %v771
        %v773 = vrot.slane %v598, %v772
        %vm774 = vcmask 195712
        %v775 = vsel %vm774, %v773, %v768
        %v776 = vadd.s32 %v757, 4294967272
        %v777 = vlaneseq
        %v778 = vshrl.u32 %v777, 7
        %v779 = vsub.s32 %v776, %v778
        %v780 = vrot.slane %v599, %v779
        %vm781 = vcmask 261312
        %v782 = vsel %vm781, %v780, %v775
        %v783 = vlaneseq
        %v784 = vshrl.u32 %v783, 7
        %v785 = vsub.s32 %v757, %v784
        %v786 = vrot.slane %v600, %v785
        %v787 = vlaneseq
        %v788 = vshrl.u32 %v787, 7
        %v789 = vsub.s32 %v762, %v788
        %v790 = vrot.slane %v601, %v789
        %v791 = vsel %vm767, %v790, %v786
        %v792 = vlaneseq
        %v793 = vshrl.u32 %v792, 7
        %v794 = vsub.s32 %v769, %v793
        %v795 = vrot.slane %v602, %v794
        %v796 = vsel %vm774, %v795, %v791
        %v797 = vlaneseq
        %v798 = vshrl.u32 %v797, 7
        %v799 = vsub.s32 %v776, %v798
        %v800 = vrot.slane %v603, %v799
        %v801 = vsel %vm781, %v800, %v796
        %v802 = vlaneseq
        %v803 = vshrl.u32 %v802, 7
        %v804 = vsub.s32 %v757, %v803
        %v805 = vrot.slane %v604, %v804
        %v806 = vlaneseq
        %v807 = vshrl.u32 %v806, 7
        %v808 = vsub.s32 %v762, %v807
        %v809 = vrot.slane %v605, %v808
        %v810 = vsel %vm767, %v809, %v805
        %v811 = vlaneseq
        %v812 = vshrl.u32 %v811, 7
        %v813 = vsub.s32 %v769, %v812
        %v814 = vrot.slane %v606, %v813
        %v815 = vsel %vm774, %v814, %v810
        %v816 = vlaneseq
        %v817 = vshrl.u32 %v816, 7
        %v818 = vsub.s32 %v776, %v817
        %v819 = vrot.slane %v607, %v818
        %v820 = vsel %vm781, %v819, %v815
        %v821 = vlaneseq
        %v822 = vshrl.u32 %v821, 7
        %v823 = vsub.s32 %v757, %v822
        %v824 = vrot.slane %v608, %v823
        %v825 = vlaneseq
        %v826 = vshrl.u32 %v825, 7
        %v827 = vsub.s32 %v762, %v826
        %v828 = vrot.slane %v609, %v827
        %v829 = vsel %vm767, %v828, %v824
        %v830 = vlaneseq
        %v831 = vshrl.u32 %v830, 7
        %v832 = vsub.s32 %v769, %v831
        %v833 = vrot.slane %v610, %v832
        %v834 = vsel %vm774, %v833, %v829
        %v835 = vlaneseq
        %v836 = vshrl.u32 %v835, 7
        %v837 = vsub.s32 %v776, %v836
        %v838 = vrot.slane %v611, %v837
        %v839 = vsel %vm781, %v838, %v834
        %v840 = vlaneseq
        %v841 = vshrl.u32 %v840, 7
        %v842 = vsub.s32 %v757, %v841
        %v843 = vrot.slane %v612, %v842
        %v844 = vlaneseq
        %v845 = vshrl.u32 %v844, 7
        %v846 = vsub.s32 %v762, %v845
        %v847 = vrot.slane %v613, %v846
        %v848 = vsel %vm767, %v847, %v843
        %v849 = vlaneseq
        %v850 = vshrl.u32 %v849, 7
        %v851 = vsub.s32 %v769, %v850
        %v852 = vrot.slane %v614, %v851
        %v853 = vsel %vm774, %v852, %v848
        %v854 = vlaneseq
        %v855 = vshrl.u32 %v854, 7
        %v856 = vsub.s32 %v776, %v855
        %v857 = vrot.slane %v615, %v856
        %v858 = vsel %vm781, %v857, %v853
        %v859 = vlaneseq
        %v860 = vshrl.u32 %v859, 7
        %v861 = vsub.s32 %v757, %v860
        %v862 = vrot.slane %v616, %v861
        %v863 = vlaneseq
        %v864 = vshrl.u32 %v863, 7
        %v865 = vsub.s32 %v762, %v864
        %v866 = vrot.slane %v617, %v865
        %v867 = vsel %vm767, %v866, %v862
        %v868 = vlaneseq
        %v869 = vshrl.u32 %v868, 7
        %v870 = vsub.s32 %v769, %v869
        %v871 = vrot.slane %v618, %v870
        %v872 = vsel %vm774, %v871, %v867
        %v873 = vlaneseq
        %v874 = vshrl.u32 %v873, 7
        %v875 = vsub.s32 %v776, %v874
        %v876 = vrot.slane %v619, %v875
        %v877 = vsel %vm781, %v876, %v872
        %v878 = vlaneseq
        %v879 = vshrl.u32 %v878, 7
        %v880 = vsub.s32 %v757, %v879
        %v881 = vrot.slane %v620, %v880
        %v882 = vlaneseq
        %v883 = vshrl.u32 %v882, 7
        %v884 = vsub.s32 %v762, %v883
        %v885 = vrot.slane %v621, %v884
        %v886 = vsel %vm767, %v885, %v881
        %v887 = vlaneseq
        %v888 = vshrl.u32 %v887, 7
        %v889 = vsub.s32 %v769, %v888
        %v890 = vrot.slane %v622, %v889
        %v891 = vsel %vm774, %v890, %v886
        %v892 = vlaneseq
        %v893 = vshrl.u32 %v892, 7
        %v894 = vsub.s32 %v776, %v893
        %v895 = vrot.slane %v623, %v894
        %v896 = vsel %vm781, %v895, %v891
        %v897 = vlaneseq
        %v898 = vshrl.u32 %v897, 7
        %v899 = vsub.s32 %v757, %v898
        %v900 = vrot.slane %v624, %v899
        %v901 = vlaneseq
        %v902 = vshrl.u32 %v901, 7
        %v903 = vsub.s32 %v762, %v902
        %v904 = vrot.slane %v625, %v903
        %v905 = vsel %vm767, %v904, %v900
        %v906 = vlaneseq
        %v907 = vshrl.u32 %v906, 7
        %v908 = vsub.s32 %v769, %v907
        %v909 = vrot.slane %v626, %v908
        %v910 = vsel %vm774, %v909, %v905
        %v911 = vlaneseq
        %v912 = vshrl.u32 %v911, 7
        %v913 = vsub.s32 %v776, %v912
        %v914 = vrot.slane %v627, %v913
        %v915 = vsel %vm781, %v914, %v910
        %vm916 = vcmask 1041409
        %v917 = vsel %vm916, %v801, %v782
        %vm918 = vcmask 1042434
        %v919 = vsel %vm918, %v820, %v917
        %vm920 = vcmask 1043459
        %v921 = vsel %vm920, %v839, %v919
        %vm922 = vcmask 1044484
        %v923 = vsel %vm922, %v858, %v921
        %vm924 = vcmask 1045509
        %v925 = vsel %vm924, %v877, %v923
        %vm926 = vcmask 1046534
        %v927 = vsel %vm926, %v896, %v925
        %vm928 = vcmask 1047559
        %v929 = vsel %vm928, %v915, %v927
        %v962 = vlaneseq
        %v963 = vshrl.u32 %v962, 7
        %v964 = vsub.s32 %v757, %v963
        %v965 = vrot.slane %v630, %v964
        %v966 = vlaneseq
        %v967 = vshrl.u32 %v966, 7
        %v968 = vsub.s32 %v762, %v967
        %v969 = vrot.slane %v633, %v968
        %v970 = vsel %vm767, %v969, %v965
        %v971 = vlaneseq
        %v972 = vshrl.u32 %v971, 7
        %v973 = vsub.s32 %v769, %v972
        %v974 = vrot.slane %v636, %v973
        %v975 = vsel %vm774, %v974, %v970
        %v976 = vlaneseq
        %v977 = vshrl.u32 %v976, 7
        %v978 = vsub.s32 %v776, %v977
        %v979 = vrot.slane %v639, %v978
        %v980 = vsel %vm781, %v979, %v975
        %v981 = vlaneseq
        %v982 = vshrl.u32 %v981, 7
        %v983 = vsub.s32 %v757, %v982
        %v984 = vrot.slane %v642, %v983
        %v985 = vlaneseq
        %v986 = vshrl.u32 %v985, 7
        %v987 = vsub.s32 %v762, %v986
        %v988 = vrot.slane %v645, %v987
        %v989 = vsel %vm767, %v988, %v984
        %v990 = vlaneseq
        %v991 = vshrl.u32 %v990, 7
        %v992 = vsub.s32 %v769, %v991
        %v993 = vrot.slane %v648, %v992
        %v994 = vsel %vm774, %v993, %v989
        %v995 = vlaneseq
        %v996 = vshrl.u32 %v995, 7
        %v997 = vsub.s32 %v776, %v996
        %v998 = vrot.slane %v651, %v997
        %v999 = vsel %vm781, %v998, %v994
        %v1000 = vlaneseq
        %v1001 = vshrl.u32 %v1000, 7
        %v1002 = vsub.s32 %v757, %v1001
        %v1003 = vrot.slane %v654, %v1002
        %v1004 = vlaneseq
        %v1005 = vshrl.u32 %v1004, 7
        %v1006 = vsub.s32 %v762, %v1005
        %v1007 = vrot.slane %v657, %v1006
        %v1008 = vsel %vm767, %v1007, %v1003
        %v1009 = vlaneseq
        %v1010 = vshrl.u32 %v1009, 7
        %v1011 = vsub.s32 %v769, %v1010
        %v1012 = vrot.slane %v660, %v1011
        %v1013 = vsel %vm774, %v1012, %v1008
        %v1014 = vlaneseq
        %v1015 = vshrl.u32 %v1014, 7
        %v1016 = vsub.s32 %v776, %v1015
        %v1017 = vrot.slane %v663, %v1016
        %v1018 = vsel %vm781, %v1017, %v1013
        %v1019 = vlaneseq
        %v1020 = vshrl.u32 %v1019, 7
        %v1021 = vsub.s32 %v757, %v1020
        %v1022 = vrot.slane %v666, %v1021
        %v1023 = vlaneseq
        %v1024 = vshrl.u32 %v1023, 7
        %v1025 = vsub.s32 %v762, %v1024
        %v1026 = vrot.slane %v669, %v1025
        %v1027 = vsel %vm767, %v1026, %v1022
        %v1028 = vlaneseq
        %v1029 = vshrl.u32 %v1028, 7
        %v1030 = vsub.s32 %v769, %v1029
        %v1031 = vrot.slane %v672, %v1030
        %v1032 = vsel %vm774, %v1031, %v1027
        %v1033 = vlaneseq
        %v1034 = vshrl.u32 %v1033, 7
        %v1035 = vsub.s32 %v776, %v1034
        %v1036 = vrot.slane %v675, %v1035
        %v1037 = vsel %vm781, %v1036, %v1032
        %v1038 = vlaneseq
        %v1039 = vshrl.u32 %v1038, 7
        %v1040 = vsub.s32 %v757, %v1039
        %v1041 = vrot.slane %v678, %v1040
        %v1042 = vlaneseq
        %v1043 = vshrl.u32 %v1042, 7
        %v1044 = vsub.s32 %v762, %v1043
        %v1045 = vrot.slane %v681, %v1044
        %v1046 = vsel %vm767, %v1045, %v1041
        %v1047 = vlaneseq
        %v1048 = vshrl.u32 %v1047, 7
        %v1049 = vsub.s32 %v769, %v1048
        %v1050 = vrot.slane %v684, %v1049
        %v1051 = vsel %vm774, %v1050, %v1046
        %v1052 = vlaneseq
        %v1053 = vshrl.u32 %v1052, 7
        %v1054 = vsub.s32 %v776, %v1053
        %v1055 = vrot.slane %v687, %v1054
        %v1056 = vsel %vm781, %v1055, %v1051
        %v1057 = vlaneseq
        %v1058 = vshrl.u32 %v1057, 7
        %v1059 = vsub.s32 %v757, %v1058
        %v1060 = vrot.slane %v690, %v1059
        %v1061 = vlaneseq
        %v1062 = vshrl.u32 %v1061, 7
        %v1063 = vsub.s32 %v762, %v1062
        %v1064 = vrot.slane %v693, %v1063
        %v1065 = vsel %vm767, %v1064, %v1060
        %v1066 = vlaneseq
        %v1067 = vshrl.u32 %v1066, 7
        %v1068 = vsub.s32 %v769, %v1067
        %v1069 = vrot.slane %v696, %v1068
        %v1070 = vsel %vm774, %v1069, %v1065
        %v1071 = vlaneseq
        %v1072 = vshrl.u32 %v1071, 7
        %v1073 = vsub.s32 %v776, %v1072
        %v1074 = vrot.slane %v699, %v1073
        %v1075 = vsel %vm781, %v1074, %v1070
        %v1076 = vlaneseq
        %v1077 = vshrl.u32 %v1076, 7
        %v1078 = vsub.s32 %v757, %v1077
        %v1079 = vrot.slane %v702, %v1078
        %v1080 = vlaneseq
        %v1081 = vshrl.u32 %v1080, 7
        %v1082 = vsub.s32 %v762, %v1081
        %v1083 = vrot.slane %v705, %v1082
        %v1084 = vsel %vm767, %v1083, %v1079
        %v1085 = vlaneseq
        %v1086 = vshrl.u32 %v1085, 7
        %v1087 = vsub.s32 %v769, %v1086
        %v1088 = vrot.slane %v708, %v1087
        %v1089 = vsel %vm774, %v1088, %v1084
        %v1090 = vlaneseq
        %v1091 = vshrl.u32 %v1090, 7
        %v1092 = vsub.s32 %v776, %v1091
        %v1093 = vrot.slane %v711, %v1092
        %v1094 = vsel %vm781, %v1093, %v1089
        %v1095 = vlaneseq
        %v1096 = vshrl.u32 %v1095, 7
        %v1097 = vsub.s32 %v757, %v1096
        %v1098 = vrot.slane %v714, %v1097
        %v1099 = vlaneseq
        %v1100 = vshrl.u32 %v1099, 7
        %v1101 = vsub.s32 %v762, %v1100
        %v1102 = vrot.slane %v717, %v1101
        %v1103 = vsel %vm767, %v1102, %v1098
        %v1104 = vlaneseq
        %v1105 = vshrl.u32 %v1104, 7
        %v1106 = vsub.s32 %v769, %v1105
        %v1107 = vrot.slane %v720, %v1106
        %v1108 = vsel %vm774, %v1107, %v1103
        %v1109 = vlaneseq
        %v1110 = vshrl.u32 %v1109, 7
        %v1111 = vsub.s32 %v776, %v1110
        %v1112 = vrot.slane %v723, %v1111
        %v1113 = vsel %vm781, %v1112, %v1108
        %v1114 = vsel %vm916, %v999, %v980
        %v1115 = vsel %vm918, %v1018, %v1114
        %v1116 = vsel %vm920, %v1037, %v1115
        %v1117 = vsel %vm922, %v1056, %v1116
        %v1118 = vsel %vm924, %v1075, %v1117
        %v1119 = vsel %vm926, %v1094, %v1118
        %v1120 = vsel %vm928, %v1113, %v1119
        %v1121 = vld [vmem:[%s1] sm:$0xff]
        %v1122 = vld [vmem:[%s1 + $0x8] sm:$0xff]
        %v1123 = vld [vmem:[%s1 + $0x10] sm:$0xff]
        %v1124 = vld [vmem:[%s1 + $0x18] sm:$0xff]
        %vm1125 = vcmask 261120
        %v1126 = vsel %vm1125, %v929, 0
        %v1128 = vsel %vm1125, %v1120, 0
        %1130 = vmatprep.subr.mxu0 0.0
        %1131 = vmatpush1.msra.mxu0 %v1121
        %1132 = vmatprep.subr.mxu0 0.0
        %1133 = vmatpush1.msra.mxu0 %v1122
        %1134 = vmatprep.subr.mxu0 0.0
        %1135 = vmatpush1.msra.mxu0 %v1123
        %1136 = vmatprep.subr.mxu0 0.0
        %1137 = vmatpush1.msra.mxu0 %v1124
        %1138 = vmatprep.subr.mxu0 0.0
        %1139 = vmatpush1.msra.mxu0 0.0
        %1140 = vmatprep.subr.mxu0 0.0
        %1141 = vmatpush1.msra.mxu0 0.0
        %1142 = vmatprep.subr.mxu0 0.0
        %1143 = vmatpush1.msra.mxu0 0.0
        %1144 = vmatprep.subr.mxu0 0.0
        %1145 = vmatpush1.msra.mxu0 0.0
        %1146 = vmatprep.subr.mxu0 0.0
        %1147 = vmatpush1.msra.mxu0 0.0
        %1148 = vmatprep.subr.mxu0 0.0
        %1149 = vmatpush1.msra.mxu0 0.0
        %1150 = vmatprep.subr.mxu0 0.0
        %1151 = vmatpush1.msra.mxu0 0.0
        %1152 = vmatprep.subr.mxu0 0.0
        %1153 = vmatpush1.msra.mxu0 0.0
        %1154 = vmatprep.subr.mxu0 0.0
        %1155 = vmatpush1.msra.mxu0 0.0
        %1156 = vmatprep.subr.mxu0 0.0
        %1157 = vmatpush1.msra.mxu0 0.0
        %1158 = vmatprep.subr.mxu0 0.0
        %1159 = vmatpush1.msra.mxu0 0.0
        %1160 = vmatprep.subr.mxu0 0.0
        %1161 = vmatpush1.msra.mxu0 0.0
        %1162 = vmatprep.subr.mxu0 0.0
        %1163 = vmatpush1.msra.mxu0 0.0
        %1164 = vmatprep.subr.mxu0 0.0
        %1165 = vmatpush1.msra.mxu0 0.0
        %1166 = vmatprep.subr.mxu0 0.0
        %1167 = vmatpush1.msra.mxu0 0.0
        %1168 = vmatprep.subr.mxu0 0.0
        %1169 = vmatpush1.msra.mxu0 0.0
        %1170 = vmatprep.subr.mxu0 0.0
        %1171 = vmatpush1.msra.mxu0 0.0
        %1172 = vmatprep.subr.mxu0 0.0
        %1173 = vmatpush1.msra.mxu0 0.0
        %1174 = vmatprep.subr.mxu0 0.0
        %1175 = vmatpush1.msra.mxu0 0.0
        %1176 = vmatprep.subr.mxu0 0.0
        %1177 = vmatpush1.msra.mxu0 0.0
        %1178 = vmatprep.subr.mxu0 0.0
        %1179 = vmatpush1.msra.mxu0 0.0
        %1180 = vmatprep.subr.mxu0 0.0
        %1181 = vmatpush1.msra.mxu0 0.0
        %1182 = vmatprep.subr.mxu0 0.0
        %1183 = vmatpush1.msra.mxu0 0.0
        %1184 = vmatprep.subr.mxu0 0.0
        %1185 = vmatpush1.msra.mxu0 0.0
        %1186 = vmatprep.subr.mxu0 0.0
        %1187 = vmatpush1.msra.mxu0 0.0
        %1188 = vmatprep.subr.mxu0 0.0
        %1189 = vmatpush1.msra.mxu0 0.0
        %1190 = vmatprep.subr.mxu0 0.0
        %1191 = vmatpush1.msra.mxu0 0.0
        %1192 = vmatprep.subr.mxu0 0.0
        %1193 = vmatpush1.msra.mxu0 0.0
        %1194 = vmatprep.mubr.f32.mxu0 0.0
        %1195 = vmatmul.mubr.f32.gmra.mrb[0].mxu0 %v1126
        %v1196 = vpop.f32.mrb[0].mxu0
        %v1197 = vadd.f32 0.0, %v1196
        %v1198 = vpop.f32.mrb[0].mxu0
        %1199 = vmatprep.mubr.f32.mxu0 0.0
        %1200 = vmatmul.mubr.f32.gmra.mrb[0].mxu0 %v1128
        %v1201 = vpop.f32.mrb[0].mxu0
        %v1202 = vadd.f32 0.0, %v1201
        %v1203 = vpop.f32.mrb[0].mxu0
        %1204 = vdwg.mxu0
        %v1205 = vmax.f32 %v1197, 0.0
        %v1206 = vmax.f32 %v1202, 0.0
        %v1207 = vld [vmem:[#allocation5] sm:$0xff]
        %vm1208 = vcmask 64512
        %v1210 = vsel %vm1208, %v1205, 0
        %v1213 = vsel %vm1208, %v1206, 0
        %1215 = vmatprep.subr.mxu0 0.0
        %1216 = vmatpush1.msra.mxu0 %v1207
        %1217 = vmatprep.subr.mxu0 0.0
        %1218 = vmatpush1.msra.mxu0 0.0
        %1219 = vmatprep.subr.mxu0 0.0
        %1220 = vmatpush1.msra.mxu0 0.0
        %1221 = vmatprep.subr.mxu0 0.0
        %1222 = vmatpush1.msra.mxu0 0.0
        %1223 = vmatprep.subr.mxu0 0.0
        %1224 = vmatpush1.msra.mxu0 0.0
        %1225 = vmatprep.subr.mxu0 0.0
        %1226 = vmatpush1.msra.mxu0 0.0
        %1227 = vmatprep.subr.mxu0 0.0
        %1228 = vmatpush1.msra.mxu0 0.0
        %1229 = vmatprep.subr.mxu0 0.0
        %1230 = vmatpush1.msra.mxu0 0.0
        %1231 = vmatprep.subr.mxu0 0.0
        %1232 = vmatpush1.msra.mxu0 0.0
        %1233 = vmatprep.subr.mxu0 0.0
        %1234 = vmatpush1.msra.mxu0 0.0
        %1235 = vmatprep.subr.mxu0 0.0
        %1236 = vmatpush1.msra.mxu0 0.0
        %1237 = vmatprep.subr.mxu0 0.0
        %1238 = vmatpush1.msra.mxu0 0.0
        %1239 = vmatprep.subr.mxu0 0.0
        %1240 = vmatpush1.msra.mxu0 0.0
        %1241 = vmatprep.subr.mxu0 0.0
        %1242 = vmatpush1.msra.mxu0 0.0
        %1243 = vmatprep.subr.mxu0 0.0
        %1244 = vmatpush1.msra.mxu0 0.0
        %1245 = vmatprep.subr.mxu0 0.0
        %1246 = vmatpush1.msra.mxu0 0.0
        %1247 = vmatprep.subr.mxu0 0.0
        %1248 = vmatpush1.msra.mxu0 0.0
        %1249 = vmatprep.subr.mxu0 0.0
        %1250 = vmatpush1.msra.mxu0 0.0
        %1251 = vmatprep.subr.mxu0 0.0
        %1252 = vmatpush1.msra.mxu0 0.0
        %1253 = vmatprep.subr.mxu0 0.0
        %1254 = vmatpush1.msra.mxu0 0.0
        %1255 = vmatprep.subr.mxu0 0.0
        %1256 = vmatpush1.msra.mxu0 0.0
        %1257 = vmatprep.subr.mxu0 0.0
        %1258 = vmatpush1.msra.mxu0 0.0
        %1259 = vmatprep.subr.mxu0 0.0
        %1260 = vmatpush1.msra.mxu0 0.0
        %1261 = vmatprep.subr.mxu0 0.0
        %1262 = vmatpush1.msra.mxu0 0.0
        %1263 = vmatprep.subr.mxu0 0.0
        %1264 = vmatpush1.msra.mxu0 0.0
        %1265 = vmatprep.subr.mxu0 0.0
        %1266 = vmatpush1.msra.mxu0 0.0
        %1267 = vmatprep.subr.mxu0 0.0
        %1268 = vmatpush1.msra.mxu0 0.0
        %1269 = vmatprep.subr.mxu0 0.0
        %1270 = vmatpush1.msra.mxu0 0.0
        %1271 = vmatprep.subr.mxu0 0.0
        %1272 = vmatpush1.msra.mxu0 0.0
        %1273 = vmatprep.subr.mxu0 0.0
        %1274 = vmatpush1.msra.mxu0 0.0
        %1275 = vmatprep.subr.mxu0 0.0
        %1276 = vmatpush1.msra.mxu0 0.0
        %1277 = vmatprep.subr.mxu0 0.0
        %1278 = vmatpush1.msra.mxu0 0.0
        %1279 = vmatprep.mubr.f32.mxu0 0.0
        %1280 = vmatmul.mubr.f32.gmra.mrb[0].mxu0 %v1210
        %v1281 = vpop.f32.mrb[0].mxu0
        %v1282 = vadd.f32 0.0, %v1281
        %v1283 = vpop.f32.mrb[0].mxu0
        %1284 = vmatprep.mubr.f32.mxu0 0.0
        %1285 = vmatmul.mubr.f32.gmra.mrb[0].mxu0 %v1213
        %v1286 = vpop.f32.mrb[0].mxu0
        %v1287 = vadd.f32 0.0, %v1286
        %v1288 = vpop.f32.mrb[0].mxu0
        %1289 = vdwg.mxu0
        %v1290 = vadd.f32 %v1282, %v1287
        %v1291 = vmul.f32 %v1290, 0.5
        %v1292 = vtanh.pop %v1291
        %v1293 = vadd.f32 %v1292, 1.0
        %v1294 = vmul.f32 %v1293, 0.5
        %v1295 = vld [vmem:[%s382] sm:$0xff]
        %v1296 = vld [vmem:[%s382 + $0x8] sm:$0xff]
        %v1297 = vld [vmem:[%s382 + $0x40] sm:$0xff]
        %v1298 = vld [vmem:[%s382 + $0x48] sm:$0xff]
        %v1299 = vld [vmem:[%s382 + $0x80] sm:$0xff]
        %v1300 = vld [vmem:[%s382 + $0x88] sm:$0xff]
        %v1301 = vld [vmem:[%s382 + $0xc0] sm:$0xff]
        %v1302 = vld [vmem:[%s382 + $0xc8] sm:$0xff]
        %v1303 = vld [vmem:[%s382 + $0x100] sm:$0xff]
        %v1304 = vld [vmem:[%s382 + $0x108] sm:$0xff]
        %v1305 = vld [vmem:[%s382 + $0x140] sm:$0xff]
        %v1306 = vld [vmem:[%s382 + $0x148] sm:$0xff]
        %v1307 = vld [vmem:[%s382 + $0x180] sm:$0xff]
        %v1308 = vld [vmem:[%s382 + $0x188] sm:$0xff]
        %v1309 = vld [vmem:[%s382 + $0x1c0] sm:$0xff]
        %v1310 = vld [vmem:[%s382 + $0x1c8] sm:$0xff]
        %v1311 = vlaneseq
        %v1312 = vshrl.u32 %v1311, 7
        %v1313 = vsub.s32 0, %v1312
        %v1314 = vrot.slane %v1294, %v1313
        %1316 = vbcast.lane.b32.xlu0 %v1314, 256
        %v1317 = vpop.permute.xlu0 %1316
        %v1318 = vlaneseq
        %v1319 = vshrl.u32 %v1318, 7
        %v1320 = vsub.s32 1, %v1319
        %v1321 = vrot.slane %v1294, %v1320
        %1323 = vbcast.lane.b32.xlu0 %v1321, 256
        %v1324 = vpop.permute.xlu0 %1323
        %v1325 = vlaneseq
        %v1326 = vshrl.u32 %v1325, 7
        %v1327 = vsub.s32 2, %v1326
        %v1328 = vrot.slane %v1294, %v1327
        %1330 = vbcast.lane.b32.xlu0 %v1328, 256
        %v1331 = vpop.permute.xlu0 %1330
        %v1332 = vlaneseq
        %v1333 = vshrl.u32 %v1332, 7
        %v1334 = vsub.s32 3, %v1333
        %v1335 = vrot.slane %v1294, %v1334
        %1337 = vbcast.lane.b32.xlu0 %v1335, 256
        %v1338 = vpop.permute.xlu0 %1337
        %v1339 = vlaneseq
        %v1340 = vshrl.u32 %v1339, 7
        %v1341 = vsub.s32 4, %v1340
        %v1342 = vrot.slane %v1294, %v1341
        %1344 = vbcast.lane.b32.xlu0 %v1342, 256
        %v1345 = vpop.permute.xlu0 %1344
        %v1346 = vlaneseq
        %v1347 = vshrl.u32 %v1346, 7
        %v1348 = vsub.s32 5, %v1347
        %v1349 = vrot.slane %v1294, %v1348
        %1351 = vbcast.lane.b32.xlu0 %v1349, 256
        %v1352 = vpop.permute.xlu0 %1351
        %v1353 = vlaneseq
        %v1354 = vshrl.u32 %v1353, 7
        %v1355 = vsub.s32 6, %v1354
        %v1356 = vrot.slane %v1294, %v1355
        %1358 = vbcast.lane.b32.xlu0 %v1356, 256
        %v1359 = vpop.permute.xlu0 %1358
        %v1360 = vlaneseq
        %v1361 = vshrl.u32 %v1360, 7
        %v1362 = vsub.s32 7, %v1361
        %v1363 = vrot.slane %v1294, %v1362
        %1365 = vbcast.lane.b32.xlu0 %v1363, 256
        %v1366 = vpop.permute.xlu0 %1365
        %v1367 = vmul.f32 %v1295, %v1317
        %v1368 = vmul.f32 %v1296, %v1317
        %v1369 = vmul.f32 %v1297, %v1324
        %v1370 = vmul.f32 %v1298, %v1324
        %v1371 = vmul.f32 %v1299, %v1331
        %v1372 = vmul.f32 %v1300, %v1331
        %v1373 = vmul.f32 %v1301, %v1338
        %v1374 = vmul.f32 %v1302, %v1338
        %v1375 = vmul.f32 %v1303, %v1345
        %v1376 = vmul.f32 %v1304, %v1345
        %v1377 = vmul.f32 %v1305, %v1352
        %v1378 = vmul.f32 %v1306, %v1352
        %v1379 = vmul.f32 %v1307, %v1359
        %v1380 = vmul.f32 %v1308, %v1359
        %v1381 = vmul.f32 %v1309, %v1366
        %v1382 = vmul.f32 %v1310, %v1366
        %v1383 = vrot.slane %v1367, 4
        %v1384 = vadd.f32 %v1367, %v1383
        %v1385 = vrot.slane %v1384, 2
        %v1386 = vadd.f32 %v1384, %v1385
        %v1387 = vrot.slane %v1386, 1
        %v1388 = vadd.f32 %v1386, %v1387
        %v1389 = vrot.slane %v1368, 4
        %v1390 = vadd.f32 %v1368, %v1389
        %v1391 = vrot.slane %v1390, 2
        %v1392 = vadd.f32 %v1390, %v1391
        %v1393 = vrot.slane %v1392, 1
        %v1394 = vadd.f32 %v1392, %v1393
        %v1395 = vrot.slane %v1369, 4
        %v1396 = vadd.f32 %v1369, %v1395
        %v1397 = vrot.slane %v1396, 2
        %v1398 = vadd.f32 %v1396, %v1397
        %v1399 = vrot.slane %v1398, 1
        %v1400 = vadd.f32 %v1398, %v1399
        %v1401 = vrot.slane %v1370, 4
        %v1402 = vadd.f32 %v1370, %v1401
        %v1403 = vrot.slane %v1402, 2
        %v1404 = vadd.f32 %v1402, %v1403
        %v1405 = vrot.slane %v1404, 1
        %v1406 = vadd.f32 %v1404, %v1405
        %v1407 = vrot.slane %v1371, 4
        %v1408 = vadd.f32 %v1371, %v1407
        %v1409 = vrot.slane %v1408, 2
        %v1410 = vadd.f32 %v1408, %v1409
        %v1411 = vrot.slane %v1410, 1
        %v1412 = vadd.f32 %v1410, %v1411
        %v1413 = vrot.slane %v1372, 4
        %v1414 = vadd.f32 %v1372, %v1413
        %v1415 = vrot.slane %v1414, 2
        %v1416 = vadd.f32 %v1414, %v1415
        %v1417 = vrot.slane %v1416, 1
        %v1418 = vadd.f32 %v1416, %v1417
        %v1419 = vrot.slane %v1373, 4
        %v1420 = vadd.f32 %v1373, %v1419
        %v1421 = vrot.slane %v1420, 2
        %v1422 = vadd.f32 %v1420, %v1421
        %v1423 = vrot.slane %v1422, 1
        %v1424 = vadd.f32 %v1422, %v1423
        %v1425 = vrot.slane %v1374, 4
        %v1426 = vadd.f32 %v1374, %v1425
        %v1427 = vrot.slane %v1426, 2
        %v1428 = vadd.f32 %v1426, %v1427
        %v1429 = vrot.slane %v1428, 1
        %v1430 = vadd.f32 %v1428, %v1429
        %v1431 = vrot.slane %v1375, 4
        %v1432 = vadd.f32 %v1375, %v1431
        %v1433 = vrot.slane %v1432, 2
        %v1434 = vadd.f32 %v1432, %v1433
        %v1435 = vrot.slane %v1434, 1
        %v1436 = vadd.f32 %v1434, %v1435
        %v1437 = vrot.slane %v1376, 4
        %v1438 = vadd.f32 %v1376, %v1437
        %v1439 = vrot.slane %v1438, 2
        %v1440 = vadd.f32 %v1438, %v1439
        %v1441 = vrot.slane %v1440, 1
        %v1442 = vadd.f32 %v1440, %v1441
        %v1443 = vrot.slane %v1377, 4
        %v1444 = vadd.f32 %v1377, %v1443
        %v1445 = vrot.slane %v1444, 2
        %v1446 = vadd.f32 %v1444, %v1445
        %v1447 = vrot.slane %v1446, 1
        %v1448 = vadd.f32 %v1446, %v1447
        %v1449 = vrot.slane %v1378, 4
        %v1450 = vadd.f32 %v1378, %v1449
        %v1451 = vrot.slane %v1450, 2
        %v1452 = vadd.f32 %v1450, %v1451
        %v1453 = vrot.slane %v1452, 1
        %v1454 = vadd.f32 %v1452, %v1453
        %v1455 = vrot.slane %v1379, 4
        %v1456 = vadd.f32 %v1379, %v1455
        %v1457 = vrot.slane %v1456, 2
        %v1458 = vadd.f32 %v1456, %v1457
        %v1459 = vrot.slane %v1458, 1
        %v1460 = vadd.f32 %v1458, %v1459
        %v1461 = vrot.slane %v1380, 4
        %v1462 = vadd.f32 %v1380, %v1461
        %v1463 = vrot.slane %v1462, 2
        %v1464 = vadd.f32 %v1462, %v1463
        %v1465 = vrot.slane %v1464, 1
        %v1466 = vadd.f32 %v1464, %v1465
        %v1467 = vrot.slane %v1381, 4
        %v1468 = vadd.f32 %v1381, %v1467
        %v1469 = vrot.slane %v1468, 2
        %v1470 = vadd.f32 %v1468, %v1469
        %v1471 = vrot.slane %v1470, 1
        %v1472 = vadd.f32 %v1470, %v1471
        %v1473 = vrot.slane %v1382, 4
        %v1474 = vadd.f32 %v1382, %v1473
        %v1475 = vrot.slane %v1474, 2
        %v1476 = vadd.f32 %v1474, %v1475
        %v1477 = vrot.slane %v1476, 1
        %v1478 = vadd.f32 %v1476, %v1477
        %v1479 = vadd.f32 %v1388, 0.0
        %v1480 = vadd.f32 %v1394, 0.0
        %v1481 = vadd.f32 %v1400, 0.0
        %v1482 = vadd.f32 %v1406, 0.0
        %v1483 = vadd.f32 %v1412, 0.0
        %v1484 = vadd.f32 %v1418, 0.0
        %v1485 = vadd.f32 %v1424, 0.0
        %v1486 = vadd.f32 %v1430, 0.0
        %v1487 = vadd.f32 %v1436, 0.0
        %v1488 = vadd.f32 %v1442, 0.0
        %v1489 = vadd.f32 %v1448, 0.0
        %v1490 = vadd.f32 %v1454, 0.0
        %v1491 = vadd.f32 %v1460, 0.0
        %v1492 = vadd.f32 %v1466, 0.0
        %v1493 = vadd.f32 %v1472, 0.0
        %v1494 = vadd.f32 %v1478, 0.0
        %v1495 = vrot.slane %v1367, 4
        %v1496 = vmax.f32 %v1367, %v1495
        %v1497 = vrot.slane %v1496, 2
        %v1498 = vmax.f32 %v1496, %v1497
        %v1499 = vrot.slane %v1498, 1
        %v1500 = vmax.f32 %v1498, %v1499
        %v1501 = vrot.slane %v1368, 4
        %v1502 = vmax.f32 %v1368, %v1501
        %v1503 = vrot.slane %v1502, 2
        %v1504 = vmax.f32 %v1502, %v1503
        %v1505 = vrot.slane %v1504, 1
        %v1506 = vmax.f32 %v1504, %v1505
        %v1507 = vrot.slane %v1369, 4
        %v1508 = vmax.f32 %v1369, %v1507
        %v1509 = vrot.slane %v1508, 2
        %v1510 = vmax.f32 %v1508, %v1509
        %v1511 = vrot.slane %v1510, 1
        %v1512 = vmax.f32 %v1510, %v1511
        %v1513 = vrot.slane %v1370, 4
        %v1514 = vmax.f32 %v1370, %v1513
        %v1515 = vrot.slane %v1514, 2
        %v1516 = vmax.f32 %v1514, %v1515
        %v1517 = vrot.slane %v1516, 1
        %v1518 = vmax.f32 %v1516, %v1517
        %v1519 = vrot.slane %v1371, 4
        %v1520 = vmax.f32 %v1371, %v1519
        %v1521 = vrot.slane %v1520, 2
        %v1522 = vmax.f32 %v1520, %v1521
        %v1523 = vrot.slane %v1522, 1
        %v1524 = vmax.f32 %v1522, %v1523
        %v1525 = vrot.slane %v1372, 4
        %v1526 = vmax.f32 %v1372, %v1525
        %v1527 = vrot.slane %v1526, 2
        %v1528 = vmax.f32 %v1526, %v1527
        %v1529 = vrot.slane %v1528, 1
        %v1530 = vmax.f32 %v1528, %v1529
        %v1531 = vrot.slane %v1373, 4
        %v1532 = vmax.f32 %v1373, %v1531
        %v1533 = vrot.slane %v1532, 2
        %v1534 = vmax.f32 %v1532, %v1533
        %v1535 = vrot.slane %v1534, 1
        %v1536 = vmax.f32 %v1534, %v1535
        %v1537 = vrot.slane %v1374, 4
        %v1538 = vmax.f32 %v1374, %v1537
        %v1539 = vrot.slane %v1538, 2
        %v1540 = vmax.f32 %v1538, %v1539
        %v1541 = vrot.slane %v1540, 1
        %v1542 = vmax.f32 %v1540, %v1541
        %v1543 = vrot.slane %v1375, 4
        %v1544 = vmax.f32 %v1375, %v1543
        %v1545 = vrot.slane %v1544, 2
        %v1546 = vmax.f32 %v1544, %v1545
        %v1547 = vrot.slane %v1546, 1
        %v1548 = vmax.f32 %v1546, %v1547
        %v1549 = vrot.slane %v1376, 4
        %v1550 = vmax.f32 %v1376, %v1549
        %v1551 = vrot.slane %v1550, 2
        %v1552 = vmax.f32 %v1550, %v1551
        %v1553 = vrot.slane %v1552, 1
        %v1554 = vmax.f32 %v1552, %v1553
        %v1555 = vrot.slane %v1377, 4
        %v1556 = vmax.f32 %v1377, %v1555
        %v1557 = vrot.slane %v1556, 2
        %v1558 = vmax.f32 %v1556, %v1557
        %v1559 = vrot.slane %v1558, 1
        %v1560 = vmax.f32 %v1558, %v1559
        %v1561 = vrot.slane %v1378, 4
        %v1562 = vmax.f32 %v1378, %v1561
        %v1563 = vrot.slane %v1562, 2
        %v1564 = vmax.f32 %v1562, %v1563
        %v1565 = vrot.slane %v1564, 1
        %v1566 = vmax.f32 %v1564, %v1565
        %v1567 = vrot.slane %v1379, 4
        %v1568 = vmax.f32 %v1379, %v1567
        %v1569 = vrot.slane %v1568, 2
        %v1570 = vmax.f32 %v1568, %v1569
        %v1571 = vrot.slane %v1570, 1
        %v1572 = vmax.f32 %v1570, %v1571
        %v1573 = vrot.slane %v1380, 4
        %v1574 = vmax.f32 %v1380, %v1573
        %v1575 = vrot.slane %v1574, 2
        %v1576 = vmax.f32 %v1574, %v1575
        %v1577 = vrot.slane %v1576, 1
        %v1578 = vmax.f32 %v1576, %v1577
        %v1579 = vrot.slane %v1381, 4
        %v1580 = vmax.f32 %v1381, %v1579
        %v1581 = vrot.slane %v1580, 2
        %v1582 = vmax.f32 %v1580, %v1581
        %v1583 = vrot.slane %v1582, 1
        %v1584 = vmax.f32 %v1582, %v1583
        %v1585 = vrot.slane %v1382, 4
        %v1586 = vmax.f32 %v1382, %v1585
        %v1587 = vrot.slane %v1586, 2
        %v1588 = vmax.f32 %v1586, %v1587
        %v1589 = vrot.slane %v1588, 1
        %v1590 = vmax.f32 %v1588, %v1589
        %v1591 = vld [vmem:[%s382 + $0x10] sm:$0xff]
        %v1592 = vld [vmem:[%s382 + $0x18] sm:$0xff]
        %v1593 = vld [vmem:[%s382 + $0x50] sm:$0xff]
        %v1594 = vld [vmem:[%s382 + $0x58] sm:$0xff]
        %v1595 = vld [vmem:[%s382 + $0x90] sm:$0xff]
        %v1596 = vld [vmem:[%s382 + $0x98] sm:$0xff]
        %v1597 = vld [vmem:[%s382 + $0xd0] sm:$0xff]
        %v1598 = vld [vmem:[%s382 + $0xd8] sm:$0xff]
        %v1599 = vld [vmem:[%s382 + $0x110] sm:$0xff]
        %v1600 = vld [vmem:[%s382 + $0x118] sm:$0xff]
        %v1601 = vld [vmem:[%s382 + $0x150] sm:$0xff]
        %v1602 = vld [vmem:[%s382 + $0x158] sm:$0xff]
        %v1603 = vld [vmem:[%s382 + $0x190] sm:$0xff]
        %v1604 = vld [vmem:[%s382 + $0x198] sm:$0xff]
        %v1605 = vld [vmem:[%s382 + $0x1d0] sm:$0xff]
        %v1606 = vld [vmem:[%s382 + $0x1d8] sm:$0xff]
        %s1608 = sor.u32 256, 8
        %1609 = vbcast.lane.b32.xlu0 %v1314, %s1608
        %v1610 = vpop.permute.xlu0 %1609
        %s1612 = sor.u32 256, 8
        %1613 = vbcast.lane.b32.xlu0 %v1321, %s1612
        %v1614 = vpop.permute.xlu0 %1613
        %s1616 = sor.u32 256, 8
        %1617 = vbcast.lane.b32.xlu0 %v1328, %s1616
        %v1618 = vpop.permute.xlu0 %1617
        %s1620 = sor.u32 256, 8
        %1621 = vbcast.lane.b32.xlu0 %v1335, %s1620
        %v1622 = vpop.permute.xlu0 %1621
        %s1624 = sor.u32 256, 8
        %1625 = vbcast.lane.b32.xlu0 %v1342, %s1624
        %v1626 = vpop.permute.xlu0 %1625
        %s1628 = sor.u32 256, 8
        %1629 = vbcast.lane.b32.xlu0 %v1349, %s1628
        %v1630 = vpop.permute.xlu0 %1629
        %s1632 = sor.u32 256, 8
        %1633 = vbcast.lane.b32.xlu0 %v1356, %s1632
        %v1634 = vpop.permute.xlu0 %1633
        %s1636 = sor.u32 256, 8
        %1637 = vbcast.lane.b32.xlu0 %v1363, %s1636
        %v1638 = vpop.permute.xlu0 %1637
        %v1639 = vmul.f32 %v1591, %v1610
        %v1640 = vmul.f32 %v1592, %v1610
        %v1641 = vmul.f32 %v1593, %v1614
        %v1642 = vmul.f32 %v1594, %v1614
        %v1643 = vmul.f32 %v1595, %v1618
        %v1644 = vmul.f32 %v1596, %v1618
        %v1645 = vmul.f32 %v1597, %v1622
        %v1646 = vmul.f32 %v1598, %v1622
        %v1647 = vmul.f32 %v1599, %v1626
        %v1648 = vmul.f32 %v1600, %v1626
        %v1649 = vmul.f32 %v1601, %v1630
        %v1650 = vmul.f32 %v1602, %v1630
        %v1651 = vmul.f32 %v1603, %v1634
        %v1652 = vmul.f32 %v1604, %v1634
        %v1653 = vmul.f32 %v1605, %v1638
        %v1654 = vmul.f32 %v1606, %v1638
        %v1655 = vrot.slane %v1639, 4
        %v1656 = vadd.f32 %v1639, %v1655
        %v1657 = vrot.slane %v1656, 2
        %v1658 = vadd.f32 %v1656, %v1657
        %v1659 = vrot.slane %v1658, 1
        %v1660 = vadd.f32 %v1658, %v1659
        %v1661 = vrot.slane %v1640, 4
        %v1662 = vadd.f32 %v1640, %v1661
        %v1663 = vrot.slane %v1662, 2
        %v1664 = vadd.f32 %v1662, %v1663
        %v1665 = vrot.slane %v1664, 1
        %v1666 = vadd.f32 %v1664, %v1665
        %v1667 = vrot.slane %v1641, 4
        %v1668 = vadd.f32 %v1641, %v1667
        %v1669 = vrot.slane %v1668, 2
        %v1670 = vadd.f32 %v1668, %v1669
        %v1671 = vrot.slane %v1670, 1
        %v1672 = vadd.f32 %v1670, %v1671
        %v1673 = vrot.slane %v1642, 4
        %v1674 = vadd.f32 %v1642, %v1673
        %v1675 = vrot.slane %v1674, 2
        %v1676 = vadd.f32 %v1674, %v1675
        %v1677 = vrot.slane %v1676, 1
        %v1678 = vadd.f32 %v1676, %v1677
        %v1679 = vrot.slane %v1643, 4
        %v1680 = vadd.f32 %v1643, %v1679
        %v1681 = vrot.slane %v1680, 2
        %v1682 = vadd.f32 %v1680, %v1681
        %v1683 = vrot.slane %v1682, 1
        %v1684 = vadd.f32 %v1682, %v1683
        %v1685 = vrot.slane %v1644, 4
        %v1686 = vadd.f32 %v1644, %v1685
        %v1687 = vrot.slane %v1686, 2
        %v1688 = vadd.f32 %v1686, %v1687
        %v1689 = vrot.slane %v1688, 1
        %v1690 = vadd.f32 %v1688, %v1689
        %v1691 = vrot.slane %v1645, 4
        %v1692 = vadd.f32 %v1645, %v1691
        %v1693 = vrot.slane %v1692, 2
        %v1694 = vadd.f32 %v1692, %v1693
        %v1695 = vrot.slane %v1694, 1
        %v1696 = vadd.f32 %v1694, %v1695
        %v1697 = vrot.slane %v1646, 4
        %v1698 = vadd.f32 %v1646, %v1697
        %v1699 = vrot.slane %v1698, 2
        %v1700 = vadd.f32 %v1698, %v1699
        %v1701 = vrot.slane %v1700, 1
        %v1702 = vadd.f32 %v1700, %v1701
        %v1703 = vrot.slane %v1647, 4
        %v1704 = vadd.f32 %v1647, %v1703
        %v1705 = vrot.slane %v1704, 2
        %v1706 = vadd.f32 %v1704, %v1705
        %v1707 = vrot.slane %v1706, 1
        %v1708 = vadd.f32 %v1706, %v1707
        %v1709 = vrot.slane %v1648, 4
        %v1710 = vadd.f32 %v1648, %v1709
        %v1711 = vrot.slane %v1710, 2
        %v1712 = vadd.f32 %v1710, %v1711
        %v1713 = vrot.slane %v1712, 1
        %v1714 = vadd.f32 %v1712, %v1713
        %v1715 = vrot.slane %v1649, 4
        %v1716 = vadd.f32 %v1649, %v1715
        %v1717 = vrot.slane %v1716, 2
        %v1718 = vadd.f32 %v1716, %v1717
        %v1719 = vrot.slane %v1718, 1
        %v1720 = vadd.f32 %v1718, %v1719
        %v1721 = vrot.slane %v1650, 4
        %v1722 = vadd.f32 %v1650, %v1721
        %v1723 = vrot.slane %v1722, 2
        %v1724 = vadd.f32 %v1722, %v1723
        %v1725 = vrot.slane %v1724, 1
        %v1726 = vadd.f32 %v1724, %v1725
        %v1727 = vrot.slane %v1651, 4
        %v1728 = vadd.f32 %v1651, %v1727
        %v1729 = vrot.slane %v1728, 2
        %v1730 = vadd.f32 %v1728, %v1729
        %v1731 = vrot.slane %v1730, 1
        %v1732 = vadd.f32 %v1730, %v1731
        %v1733 = vrot.slane %v1652, 4
        %v1734 = vadd.f32 %v1652, %v1733
        %v1735 = vrot.slane %v1734, 2
        %v1736 = vadd.f32 %v1734, %v1735
        %v1737 = vrot.slane %v1736, 1
        %v1738 = vadd.f32 %v1736, %v1737
        %v1739 = vrot.slane %v1653, 4
        %v1740 = vadd.f32 %v1653, %v1739
        %v1741 = vrot.slane %v1740, 2
        %v1742 = vadd.f32 %v1740, %v1741
        %v1743 = vrot.slane %v1742, 1
        %v1744 = vadd.f32 %v1742, %v1743
        %v1745 = vrot.slane %v1654, 4
        %v1746 = vadd.f32 %v1654, %v1745
        %v1747 = vrot.slane %v1746, 2
        %v1748 = vadd.f32 %v1746, %v1747
        %v1749 = vrot.slane %v1748, 1
        %v1750 = vadd.f32 %v1748, %v1749
        %v1751 = vadd.f32 %v1479, %v1660
        %v1752 = vadd.f32 %v1480, %v1666
        %v1753 = vadd.f32 %v1481, %v1672
        %v1754 = vadd.f32 %v1482, %v1678
        %v1755 = vadd.f32 %v1483, %v1684
        %v1756 = vadd.f32 %v1484, %v1690
        %v1757 = vadd.f32 %v1485, %v1696
        %v1758 = vadd.f32 %v1486, %v1702
        %v1759 = vadd.f32 %v1487, %v1708
        %v1760 = vadd.f32 %v1488, %v1714
        %v1761 = vadd.f32 %v1489, %v1720
        %v1762 = vadd.f32 %v1490, %v1726
        %v1763 = vadd.f32 %v1491, %v1732
        %v1764 = vadd.f32 %v1492, %v1738
        %v1765 = vadd.f32 %v1493, %v1744
        %v1766 = vadd.f32 %v1494, %v1750
        %v1767 = vrot.slane %v1639, 4
        %v1768 = vmax.f32 %v1639, %v1767
        %v1769 = vrot.slane %v1768, 2
        %v1770 = vmax.f32 %v1768, %v1769
        %v1771 = vrot.slane %v1770, 1
        %v1772 = vmax.f32 %v1770, %v1771
        %v1773 = vrot.slane %v1640, 4
        %v1774 = vmax.f32 %v1640, %v1773
        %v1775 = vrot.slane %v1774, 2
        %v1776 = vmax.f32 %v1774, %v1775
        %v1777 = vrot.slane %v1776, 1
        %v1778 = vmax.f32 %v1776, %v1777
        %v1779 = vrot.slane %v1641, 4
        %v1780 = vmax.f32 %v1641, %v1779
        %v1781 = vrot.slane %v1780, 2
        %v1782 = vmax.f32 %v1780, %v1781
        %v1783 = vrot.slane %v1782, 1
        %v1784 = vmax.f32 %v1782, %v1783
        %v1785 = vrot.slane %v1642, 4
        %v1786 = vmax.f32 %v1642, %v1785
        %v1787 = vrot.slane %v1786, 2
        %v1788 = vmax.f32 %v1786, %v1787
        %v1789 = vrot.slane %v1788, 1
        %v1790 = vmax.f32 %v1788, %v1789
        %v1791 = vrot.slane %v1643, 4
        %v1792 = vmax.f32 %v1643, %v1791
        %v1793 = vrot.slane %v1792, 2
        %v1794 = vmax.f32 %v1792, %v1793
        %v1795 = vrot.slane %v1794, 1
        %v1796 = vmax.f32 %v1794, %v1795
        %v1797 = vrot.slane %v1644, 4
        %v1798 = vmax.f32 %v1644, %v1797
        %v1799 = vrot.slane %v1798, 2
        %v1800 = vmax.f32 %v1798, %v1799
        %v1801 = vrot.slane %v1800, 1
        %v1802 = vmax.f32 %v1800, %v1801
        %v1803 = vrot.slane %v1645, 4
        %v1804 = vmax.f32 %v1645, %v1803
        %v1805 = vrot.slane %v1804, 2
        %v1806 = vmax.f32 %v1804, %v1805
        %v1807 = vrot.slane %v1806, 1
        %v1808 = vmax.f32 %v1806, %v1807
        %v1809 = vrot.slane %v1646, 4
        %v1810 = vmax.f32 %v1646, %v1809
        %v1811 = vrot.slane %v1810, 2
        %v1812 = vmax.f32 %v1810, %v1811
        %v1813 = vrot.slane %v1812, 1
        %v1814 = vmax.f32 %v1812, %v1813
        %v1815 = vrot.slane %v1647, 4
        %v1816 = vmax.f32 %v1647, %v1815
        %v1817 = vrot.slane %v1816, 2
        %v1818 = vmax.f32 %v1816, %v1817
        %v1819 = vrot.slane %v1818, 1
        %v1820 = vmax.f32 %v1818, %v1819
        %v1821 = vrot.slane %v1648, 4
        %v1822 = vmax.f32 %v1648, %v1821
        %v1823 = vrot.slane %v1822, 2
        %v1824 = vmax.f32 %v1822, %v1823
        %v1825 = vrot.slane %v1824, 1
        %v1826 = vmax.f32 %v1824, %v1825
        %v1827 = vrot.slane %v1649, 4
        %v1828 = vmax.f32 %v1649, %v1827
        %v1829 = vrot.slane %v1828, 2
        %v1830 = vmax.f32 %v1828, %v1829
        %v1831 = vrot.slane %v1830, 1
        %v1832 = vmax.f32 %v1830, %v1831
        %v1833 = vrot.slane %v1650, 4
        %v1834 = vmax.f32 %v1650, %v1833
        %v1835 = vrot.slane %v1834, 2
        %v1836 = vmax.f32 %v1834, %v1835
        %v1837 = vrot.slane %v1836, 1
        %v1838 = vmax.f32 %v1836, %v1837
        %v1839 = vrot.slane %v1651, 4
        %v1840 = vmax.f32 %v1651, %v1839
        %v1841 = vrot.slane %v1840, 2
        %v1842 = vmax.f32 %v1840, %v1841
        %v1843 = vrot.slane %v1842, 1
        %v1844 = vmax.f32 %v1842, %v1843
        %v1845 = vrot.slane %v1652, 4
        %v1846 = vmax.f32 %v1652, %v1845
        %v1847 = vrot.slane %v1846, 2
        %v1848 = vmax.f32 %v1846, %v1847
        %v1849 = vrot.slane %v1848, 1
        %v1850 = vmax.f32 %v1848, %v1849
        %v1851 = vrot.slane %v1653, 4
        %v1852 = vmax.f32 %v1653, %v1851
        %v1853 = vrot.slane %v1852, 2
        %v1854 = vmax.f32 %v1852, %v1853
        %v1855 = vrot.slane %v1854, 1
        %v1856 = vmax.f32 %v1854, %v1855
        %v1857 = vrot.slane %v1654, 4
        %v1858 = vmax.f32 %v1654, %v1857
        %v1859 = vrot.slane %v1858, 2
        %v1860 = vmax.f32 %v1858, %v1859
        %v1861 = vrot.slane %v1860, 1
        %v1862 = vmax.f32 %v1860, %v1861
        %v1863 = vmax.f32 %v1500, %v1772
        %v1864 = vmax.f32 %v1506, %v1778
        %v1865 = vmax.f32 %v1512, %v1784
        %v1866 = vmax.f32 %v1518, %v1790
        %v1867 = vmax.f32 %v1524, %v1796
        %v1868 = vmax.f32 %v1530, %v1802
        %v1869 = vmax.f32 %v1536, %v1808
        %v1870 = vmax.f32 %v1542, %v1814
        %v1871 = vmax.f32 %v1548, %v1820
        %v1872 = vmax.f32 %v1554, %v1826
        %v1873 = vmax.f32 %v1560, %v1832
        %v1874 = vmax.f32 %v1566, %v1838
        %v1875 = vmax.f32 %v1572, %v1844
        %v1876 = vmax.f32 %v1578, %v1850
        %v1877 = vmax.f32 %v1584, %v1856
        %v1878 = vmax.f32 %v1590, %v1862
        %v1879 = vld [vmem:[%s382 + $0x20] sm:$0xff]
        %v1880 = vld [vmem:[%s382 + $0x28] sm:$0xff]
        %v1881 = vld [vmem:[%s382 + $0x60] sm:$0xff]
        %v1882 = vld [vmem:[%s382 + $0x68] sm:$0xff]
        %v1883 = vld [vmem:[%s382 + $0xa0] sm:$0xff]
        %v1884 = vld [vmem:[%s382 + $0xa8] sm:$0xff]
        %v1885 = vld [vmem:[%s382 + $0xe0] sm:$0xff]
        %v1886 = vld [vmem:[%s382 + $0xe8] sm:$0xff]
        %v1887 = vld [vmem:[%s382 + $0x120] sm:$0xff]
        %v1888 = vld [vmem:[%s382 + $0x128] sm:$0xff]
        %v1889 = vld [vmem:[%s382 + $0x160] sm:$0xff]
        %v1890 = vld [vmem:[%s382 + $0x168] sm:$0xff]
        %v1891 = vld [vmem:[%s382 + $0x1a0] sm:$0xff]
        %v1892 = vld [vmem:[%s382 + $0x1a8] sm:$0xff]
        %v1893 = vld [vmem:[%s382 + $0x1e0] sm:$0xff]
        %v1894 = vld [vmem:[%s382 + $0x1e8] sm:$0xff]
        %s1896 = sor.u32 256, 16
        %1897 = vbcast.lane.b32.xlu0 %v1314, %s1896
        %v1898 = vpop.permute.xlu0 %1897
        %s1900 = sor.u32 256, 16
        %1901 = vbcast.lane.b32.xlu0 %v1321, %s1900
        %v1902 = vpop.permute.xlu0 %1901
        %s1904 = sor.u32 256, 16
        %1905 = vbcast.lane.b32.xlu0 %v1328, %s1904
        %v1906 = vpop.permute.xlu0 %1905
        %s1908 = sor.u32 256, 16
        %1909 = vbcast.lane.b32.xlu0 %v1335, %s1908
        %v1910 = vpop.permute.xlu0 %1909
        %s1912 = sor.u32 256, 16
        %1913 = vbcast.lane.b32.xlu0 %v1342, %s1912
        %v1914 = vpop.permute.xlu0 %1913
        %s1916 = sor.u32 256, 16
        %1917 = vbcast.lane.b32.xlu0 %v1349, %s1916
        %v1918 = vpop.permute.xlu0 %1917
        %s1920 = sor.u32 256, 16
        %1921 = vbcast.lane.b32.xlu0 %v1356, %s1920
        %v1922 = vpop.permute.xlu0 %1921
        %s1924 = sor.u32 256, 16
        %1925 = vbcast.lane.b32.xlu0 %v1363, %s1924
        %v1926 = vpop.permute.xlu0 %1925
        %v1927 = vmul.f32 %v1879, %v1898
        %v1928 = vmul.f32 %v1880, %v1898
        %v1929 = vmul.f32 %v1881, %v1902
        %v1930 = vmul.f32 %v1882, %v1902
        %v1931 = vmul.f32 %v1883, %v1906
        %v1932 = vmul.f32 %v1884, %v1906
        %v1933 = vmul.f32 %v1885, %v1910
        %v1934 = vmul.f32 %v1886, %v1910
        %v1935 = vmul.f32 %v1887, %v1914
        %v1936 = vmul.f32 %v1888, %v1914
        %v1937 = vmul.f32 %v1889, %v1918
        %v1938 = vmul.f32 %v1890, %v1918
        %v1939 = vmul.f32 %v1891, %v1922
        %v1940 = vmul.f32 %v1892, %v1922
        %v1941 = vmul.f32 %v1893, %v1926
        %v1942 = vmul.f32 %v1894, %v1926
        %v1943 = vrot.slane %v1927, 4
        %v1944 = vadd.f32 %v1927, %v1943
        %v1945 = vrot.slane %v1944, 2
        %v1946 = vadd.f32 %v1944, %v1945
        %v1947 = vrot.slane %v1946, 1
        %v1948 = vadd.f32 %v1946, %v1947
        %v1949 = vrot.slane %v1928, 4
        %v1950 = vadd.f32 %v1928, %v1949
        %v1951 = vrot.slane %v1950, 2
        %v1952 = vadd.f32 %v1950, %v1951
        %v1953 = vrot.slane %v1952, 1
        %v1954 = vadd.f32 %v1952, %v1953
        %v1955 = vrot.slane %v1929, 4
        %v1956 = vadd.f32 %v1929, %v1955
        %v1957 = vrot.slane %v1956, 2
        %v1958 = vadd.f32 %v1956, %v1957
        %v1959 = vrot.slane %v1958, 1
        %v1960 = vadd.f32 %v1958, %v1959
        %v1961 = vrot.slane %v1930, 4
        %v1962 = vadd.f32 %v1930, %v1961
        %v1963 = vrot.slane %v1962, 2
        %v1964 = vadd.f32 %v1962, %v1963
        %v1965 = vrot.slane %v1964, 1
        %v1966 = vadd.f32 %v1964, %v1965
        %v1967 = vrot.slane %v1931, 4
        %v1968 = vadd.f32 %v1931, %v1967
        %v1969 = vrot.slane %v1968, 2
        %v1970 = vadd.f32 %v1968, %v1969
        %v1971 = vrot.slane %v1970, 1
        %v1972 = vadd.f32 %v1970, %v1971
        %v1973 = vrot.slane %v1932, 4
        %v1974 = vadd.f32 %v1932, %v1973
        %v1975 = vrot.slane %v1974, 2
        %v1976 = vadd.f32 %v1974, %v1975
        %v1977 = vrot.slane %v1976, 1
        %v1978 = vadd.f32 %v1976, %v1977
        %v1979 = vrot.slane %v1933, 4
        %v1980 = vadd.f32 %v1933, %v1979
        %v1981 = vrot.slane %v1980, 2
        %v1982 = vadd.f32 %v1980, %v1981
        %v1983 = vrot.slane %v1982, 1
        %v1984 = vadd.f32 %v1982, %v1983
        %v1985 = vrot.slane %v1934, 4
        %v1986 = vadd.f32 %v1934, %v1985
        %v1987 = vrot.slane %v1986, 2
        %v1988 = vadd.f32 %v1986, %v1987
        %v1989 = vrot.slane %v1988, 1
        %v1990 = vadd.f32 %v1988, %v1989
        %v1991 = vrot.slane %v1935, 4
        %v1992 = vadd.f32 %v1935, %v1991
        %v1993 = vrot.slane %v1992, 2
        %v1994 = vadd.f32 %v1992, %v1993
        %v1995 = vrot.slane %v1994, 1
        %v1996 = vadd.f32 %v1994, %v1995
        %v1997 = vrot.slane %v1936, 4
        %v1998 = vadd.f32 %v1936, %v1997
        %v1999 = vrot.slane %v1998, 2
        %v2000 = vadd.f32 %v1998, %v1999
        %v2001 = vrot.slane %v2000, 1
        %v2002 = vadd.f32 %v2000, %v2001
        %v2003 = vrot.slane %v1937, 4
        %v2004 = vadd.f32 %v1937, %v2003
        %v2005 = vrot.slane %v2004, 2
        %v2006 = vadd.f32 %v2004, %v2005
        %v2007 = vrot.slane %v2006, 1
        %v2008 = vadd.f32 %v2006, %v2007
        %v2009 = vrot.slane %v1938, 4
        %v2010 = vadd.f32 %v1938, %v2009
        %v2011 = vrot.slane %v2010, 2
        %v2012 = vadd.f32 %v2010, %v2011
        %v2013 = vrot.slane %v2012, 1
        %v2014 = vadd.f32 %v2012, %v2013
        %v2015 = vrot.slane %v1939, 4
        %v2016 = vadd.f32 %v1939, %v2015
        %v2017 = vrot.slane %v2016, 2
        %v2018 = vadd.f32 %v2016, %v2017
        %v2019 = vrot.slane %v2018, 1
        %v2020 = vadd.f32 %v2018, %v2019
        %v2021 = vrot.slane %v1940, 4
        %v2022 = vadd.f32 %v1940, %v2021
        %v2023 = vrot.slane %v2022, 2
        %v2024 = vadd.f32 %v2022, %v2023
        %v2025 = vrot.slane %v2024, 1
        %v2026 = vadd.f32 %v2024, %v2025
        %v2027 = vrot.slane %v1941, 4
        %v2028 = vadd.f32 %v1941, %v2027
        %v2029 = vrot.slane %v2028, 2
        %v2030 = vadd.f32 %v2028, %v2029
        %v2031 = vrot.slane %v2030, 1
        %v2032 = vadd.f32 %v2030, %v2031
        %v2033 = vrot.slane %v1942, 4
        %v2034 = vadd.f32 %v1942, %v2033
        %v2035 = vrot.slane %v2034, 2
        %v2036 = vadd.f32 %v2034, %v2035
        %v2037 = vrot.slane %v2036, 1
        %v2038 = vadd.f32 %v2036, %v2037
        %v2039 = vadd.f32 %v1751, %v1948
        %v2040 = vadd.f32 %v1752, %v1954
        %v2041 = vadd.f32 %v1753, %v1960
        %v2042 = vadd.f32 %v1754, %v1966
        %v2043 = vadd.f32 %v1755, %v1972
        %v2044 = vadd.f32 %v1756, %v1978
        %v2045 = vadd.f32 %v1757, %v1984
        %v2046 = vadd.f32 %v1758, %v1990
        %v2047 = vadd.f32 %v1759, %v1996
        %v2048 = vadd.f32 %v1760, %v2002
        %v2049 = vadd.f32 %v1761, %v2008
        %v2050 = vadd.f32 %v1762, %v2014
        %v2051 = vadd.f32 %v1763, %v2020
        %v2052 = vadd.f32 %v1764, %v2026
        %v2053 = vadd.f32 %v1765, %v2032
        %v2054 = vadd.f32 %v1766, %v2038
        %v2055 = vrot.slane %v1927, 4
        %v2056 = vmax.f32 %v1927, %v2055
        %v2057 = vrot.slane %v2056, 2
        %v2058 = vmax.f32 %v2056, %v2057
        %v2059 = vrot.slane %v2058, 1
        %v2060 = vmax.f32 %v2058, %v2059
        %v2061 = vrot.slane %v1928, 4
        %v2062 = vmax.f32 %v1928, %v2061
        %v2063 = vrot.slane %v2062, 2
        %v2064 = vmax.f32 %v2062, %v2063
        %v2065 = vrot.slane %v2064, 1
        %v2066 = vmax.f32 %v2064, %v2065
        %v2067 = vrot.slane %v1929, 4
        %v2068 = vmax.f32 %v1929, %v2067
        %v2069 = vrot.slane %v2068, 2
        %v2070 = vmax.f32 %v2068, %v2069
        %v2071 = vrot.slane %v2070, 1
        %v2072 = vmax.f32 %v2070, %v2071
        %v2073 = vrot.slane %v1930, 4
        %v2074 = vmax.f32 %v1930, %v2073
        %v2075 = vrot.slane %v2074, 2
        %v2076 = vmax.f32 %v2074, %v2075
        %v2077 = vrot.slane %v2076, 1
        %v2078 = vmax.f32 %v2076, %v2077
        %v2079 = vrot.slane %v1931, 4
        %v2080 = vmax.f32 %v1931, %v2079
        %v2081 = vrot.slane %v2080, 2
        %v2082 = vmax.f32 %v2080, %v2081
        %v2083 = vrot.slane %v2082, 1
        %v2084 = vmax.f32 %v2082, %v2083
        %v2085 = vrot.slane %v1932, 4
        %v2086 = vmax.f32 %v1932, %v2085
        %v2087 = vrot.slane %v2086, 2
        %v2088 = vmax.f32 %v2086, %v2087
        %v2089 = vrot.slane %v2088, 1
        %v2090 = vmax.f32 %v2088, %v2089
        %v2091 = vrot.slane %v1933, 4
        %v2092 = vmax.f32 %v1933, %v2091
        %v2093 = vrot.slane %v2092, 2
        %v2094 = vmax.f32 %v2092, %v2093
        %v2095 = vrot.slane %v2094, 1
        %v2096 = vmax.f32 %v2094, %v2095
        %v2097 = vrot.slane %v1934, 4
        %v2098 = vmax.f32 %v1934, %v2097
        %v2099 = vrot.slane %v2098, 2
        %v2100 = vmax.f32 %v2098, %v2099
        %v2101 = vrot.slane %v2100, 1
        %v2102 = vmax.f32 %v2100, %v2101
        %v2103 = vrot.slane %v1935, 4
        %v2104 = vmax.f32 %v1935, %v2103
        %v2105 = vrot.slane %v2104, 2
        %v2106 = vmax.f32 %v2104, %v2105
        %v2107 = vrot.slane %v2106, 1
        %v2108 = vmax.f32 %v2106, %v2107
        %v2109 = vrot.slane %v1936, 4
        %v2110 = vmax.f32 %v1936, %v2109
        %v2111 = vrot.slane %v2110, 2
        %v2112 = vmax.f32 %v2110, %v2111
        %v2113 = vrot.slane %v2112, 1
        %v2114 = vmax.f32 %v2112, %v2113
        %v2115 = vrot.slane %v1937, 4
        %v2116 = vmax.f32 %v1937, %v2115
        %v2117 = vrot.slane %v2116, 2
        %v2118 = vmax.f32 %v2116, %v2117
        %v2119 = vrot.slane %v2118, 1
        %v2120 = vmax.f32 %v2118, %v2119
        %v2121 = vrot.slane %v1938, 4
        %v2122 = vmax.f32 %v1938, %v2121
        %v2123 = vrot.slane %v2122, 2
        %v2124 = vmax.f32 %v2122, %v2123
        %v2125 = vrot.slane %v2124, 1
        %v2126 = vmax.f32 %v2124, %v2125
        %v2127 = vrot.slane %v1939, 4
        %v2128 = vmax.f32 %v1939, %v2127
        %v2129 = vrot.slane %v2128, 2
        %v2130 = vmax.f32 %v2128, %v2129
        %v2131 = vrot.slane %v2130, 1
        %v2132 = vmax.f32 %v2130, %v2131
        %v2133 = vrot.slane %v1940, 4
        %v2134 = vmax.f32 %v1940, %v2133
        %v2135 = vrot.slane %v2134, 2
        %v2136 = vmax.f32 %v2134, %v2135
        %v2137 = vrot.slane %v2136, 1
        %v2138 = vmax.f32 %v2136, %v2137
        %v2139 = vrot.slane %v1941, 4
        %v2140 = vmax.f32 %v1941, %v2139
        %v2141 = vrot.slane %v2140, 2
        %v2142 = vmax.f32 %v2140, %v2141
        %v2143 = vrot.slane %v2142, 1
        %v2144 = vmax.f32 %v2142, %v2143
        %v2145 = vrot.slane %v1942, 4
        %v2146 = vmax.f32 %v1942, %v2145
        %v2147 = vrot.slane %v2146, 2
        %v2148 = vmax.f32 %v2146, %v2147
        %v2149 = vrot.slane %v2148, 1
        %v2150 = vmax.f32 %v2148, %v2149
        %v2151 = vmax.f32 %v1863, %v2060
        %v2152 = vmax.f32 %v1864, %v2066
        %v2153 = vmax.f32 %v1865, %v2072
        %v2154 = vmax.f32 %v1866, %v2078
        %v2155 = vmax.f32 %v1867, %v2084
        %v2156 = vmax.f32 %v1868, %v2090
        %v2157 = vmax.f32 %v1869, %v2096
        %v2158 = vmax.f32 %v1870, %v2102
        %v2159 = vmax.f32 %v1871, %v2108
        %v2160 = vmax.f32 %v1872, %v2114
        %v2161 = vmax.f32 %v1873, %v2120
        %v2162 = vmax.f32 %v1874, %v2126
        %v2163 = vmax.f32 %v1875, %v2132
        %v2164 = vmax.f32 %v1876, %v2138
        %v2165 = vmax.f32 %v1877, %v2144
        %v2166 = vmax.f32 %v1878, %v2150
        %s2168 = sor.u32 256, 24
        %2169 = vbcast.lane.b32.xlu0 %v1314, %s2168
        %v2170 = vpop.permute.xlu0 %2169
        %s2172 = sor.u32 256, 24
        %2173 = vbcast.lane.b32.xlu0 %v1321, %s2172
        %v2174 = vpop.permute.xlu0 %2173
        %s2176 = sor.u32 256, 24
        %2177 = vbcast.lane.b32.xlu0 %v1328, %s2176
        %v2178 = vpop.permute.xlu0 %2177
        %s2180 = sor.u32 256, 24
        %2181 = vbcast.lane.b32.xlu0 %v1335, %s2180
        %v2182 = vpop.permute.xlu0 %2181
        %s2184 = sor.u32 256, 24
        %2185 = vbcast.lane.b32.xlu0 %v1342, %s2184
        %v2186 = vpop.permute.xlu0 %2185
        %s2188 = sor.u32 256, 24
        %2189 = vbcast.lane.b32.xlu0 %v1349, %s2188
        %v2190 = vpop.permute.xlu0 %2189
        %s2192 = sor.u32 256, 24
        %2193 = vbcast.lane.b32.xlu0 %v1356, %s2192
        %v2194 = vpop.permute.xlu0 %2193
        %s2196 = sor.u32 256, 24
        %2197 = vbcast.lane.b32.xlu0 %v1363, %s2196
        %v2198 = vpop.permute.xlu0 %2197
        %v2199 = vmul.f32 %v442, %v2170
        %v2200 = vmul.f32 %v443, %v2170
        %v2201 = vmul.f32 %v450, %v2174
        %v2202 = vmul.f32 %v451, %v2174
        %v2203 = vmul.f32 %v458, %v2178
        %v2204 = vmul.f32 %v459, %v2178
        %v2205 = vmul.f32 %v466, %v2182
        %v2206 = vmul.f32 %v467, %v2182
        %v2207 = vmul.f32 %v474, %v2186
        %v2208 = vmul.f32 %v475, %v2186
        %v2209 = vmul.f32 %v482, %v2190
        %v2210 = vmul.f32 %v483, %v2190
        %v2211 = vmul.f32 %v490, %v2194
        %v2212 = vmul.f32 %v491, %v2194
        %v2213 = vmul.f32 %v498, %v2198
        %v2214 = vmul.f32 %v499, %v2198
        %v2215 = vrot.slane %v2199, 4
        %v2216 = vadd.f32 %v2199, %v2215
        %v2217 = vrot.slane %v2216, 2
        %v2218 = vadd.f32 %v2216, %v2217
        %v2219 = vrot.slane %v2218, 1
        %v2220 = vadd.f32 %v2218, %v2219
        %v2221 = vrot.slane %v2200, 4
        %v2222 = vadd.f32 %v2200, %v2221
        %v2223 = vrot.slane %v2222, 2
        %v2224 = vadd.f32 %v2222, %v2223
        %v2225 = vrot.slane %v2224, 1
        %v2226 = vadd.f32 %v2224, %v2225
        %v2227 = vrot.slane %v2201, 4
        %v2228 = vadd.f32 %v2201, %v2227
        %v2229 = vrot.slane %v2228, 2
        %v2230 = vadd.f32 %v2228, %v2229
        %v2231 = vrot.slane %v2230, 1
        %v2232 = vadd.f32 %v2230, %v2231
        %v2233 = vrot.slane %v2202, 4
        %v2234 = vadd.f32 %v2202, %v2233
        %v2235 = vrot.slane %v2234, 2
        %v2236 = vadd.f32 %v2234, %v2235
        %v2237 = vrot.slane %v2236, 1
        %v2238 = vadd.f32 %v2236, %v2237
        %v2239 = vrot.slane %v2203, 4
        %v2240 = vadd.f32 %v2203, %v2239
        %v2241 = vrot.slane %v2240, 2
        %v2242 = vadd.f32 %v2240, %v2241
        %v2243 = vrot.slane %v2242, 1
        %v2244 = vadd.f32 %v2242, %v2243
        %v2245 = vrot.slane %v2204, 4
        %v2246 = vadd.f32 %v2204, %v2245
        %v2247 = vrot.slane %v2246, 2
        %v2248 = vadd.f32 %v2246, %v2247
        %v2249 = vrot.slane %v2248, 1
        %v2250 = vadd.f32 %v2248, %v2249
        %v2251 = vrot.slane %v2205, 4
        %v2252 = vadd.f32 %v2205, %v2251
        %v2253 = vrot.slane %v2252, 2
        %v2254 = vadd.f32 %v2252, %v2253
        %v2255 = vrot.slane %v2254, 1
        %v2256 = vadd.f32 %v2254, %v2255
        %v2257 = vrot.slane %v2206, 4
        %v2258 = vadd.f32 %v2206, %v2257
        %v2259 = vrot.slane %v2258, 2
        %v2260 = vadd.f32 %v2258, %v2259
        %v2261 = vrot.slane %v2260, 1
        %v2262 = vadd.f32 %v2260, %v2261
        %v2263 = vrot.slane %v2207, 4
        %v2264 = vadd.f32 %v2207, %v2263
        %v2265 = vrot.slane %v2264, 2
        %v2266 = vadd.f32 %v2264, %v2265
        %v2267 = vrot.slane %v2266, 1
        %v2268 = vadd.f32 %v2266, %v2267
        %v2269 = vrot.slane %v2208, 4
        %v2270 = vadd.f32 %v2208, %v2269
        %v2271 = vrot.slane %v2270, 2
        %v2272 = vadd.f32 %v2270, %v2271
        %v2273 = vrot.slane %v2272, 1
        %v2274 = vadd.f32 %v2272, %v2273
        %v2275 = vrot.slane %v2209, 4
        %v2276 = vadd.f32 %v2209, %v2275
        %v2277 = vrot.slane %v2276, 2
        %v2278 = vadd.f32 %v2276, %v2277
        %v2279 = vrot.slane %v2278, 1
        %v2280 = vadd.f32 %v2278, %v2279
        %v2281 = vrot.slane %v2210, 4
        %v2282 = vadd.f32 %v2210, %v2281
        %v2283 = vrot.slane %v2282, 2
        %v2284 = vadd.f32 %v2282, %v2283
        %v2285 = vrot.slane %v2284, 1
        %v2286 = vadd.f32 %v2284, %v2285
        %v2287 = vrot.slane %v2211, 4
        %v2288 = vadd.f32 %v2211, %v2287
        %v2289 = vrot.slane %v2288, 2
        %v2290 = vadd.f32 %v2288, %v2289
        %v2291 = vrot.slane %v2290, 1
        %v2292 = vadd.f32 %v2290, %v2291
        %v2293 = vrot.slane %v2212, 4
        %v2294 = vadd.f32 %v2212, %v2293
        %v2295 = vrot.slane %v2294, 2
        %v2296 = vadd.f32 %v2294, %v2295
        %v2297 = vrot.slane %v2296, 1
        %v2298 = vadd.f32 %v2296, %v2297
        %v2299 = vrot.slane %v2213, 4
        %v2300 = vadd.f32 %v2213, %v2299
        %v2301 = vrot.slane %v2300, 2
        %v2302 = vadd.f32 %v2300, %v2301
        %v2303 = vrot.slane %v2302, 1
        %v2304 = vadd.f32 %v2302, %v2303
        %v2305 = vrot.slane %v2214, 4
        %v2306 = vadd.f32 %v2214, %v2305
        %v2307 = vrot.slane %v2306, 2
        %v2308 = vadd.f32 %v2306, %v2307
        %v2309 = vrot.slane %v2308, 1
        %v2310 = vadd.f32 %v2308, %v2309
        %v2311 = vadd.f32 %v2039, %v2220
        %v2312 = vadd.f32 %v2040, %v2226
        %v2313 = vadd.f32 %v2041, %v2232
        %v2314 = vadd.f32 %v2042, %v2238
        %v2315 = vadd.f32 %v2043, %v2244
        %v2316 = vadd.f32 %v2044, %v2250
        %v2317 = vadd.f32 %v2045, %v2256
        %v2318 = vadd.f32 %v2046, %v2262
        %v2319 = vadd.f32 %v2047, %v2268
        %v2320 = vadd.f32 %v2048, %v2274
        %v2321 = vadd.f32 %v2049, %v2280
        %v2322 = vadd.f32 %v2050, %v2286
        %v2323 = vadd.f32 %v2051, %v2292
        %v2324 = vadd.f32 %v2052, %v2298
        %v2325 = vadd.f32 %v2053, %v2304
        %v2326 = vadd.f32 %v2054, %v2310
        %v2327 = vrot.slane %v2199, 4
        %v2328 = vmax.f32 %v2199, %v2327
        %v2329 = vrot.slane %v2328, 2
        %v2330 = vmax.f32 %v2328, %v2329
        %v2331 = vrot.slane %v2330, 1
        %v2332 = vmax.f32 %v2330, %v2331
        %v2333 = vrot.slane %v2200, 4
        %v2334 = vmax.f32 %v2200, %v2333
        %v2335 = vrot.slane %v2334, 2
        %v2336 = vmax.f32 %v2334, %v2335
        %v2337 = vrot.slane %v2336, 1
        %v2338 = vmax.f32 %v2336, %v2337
        %v2339 = vrot.slane %v2201, 4
        %v2340 = vmax.f32 %v2201, %v2339
        %v2341 = vrot.slane %v2340, 2
        %v2342 = vmax.f32 %v2340, %v2341
        %v2343 = vrot.slane %v2342, 1
        %v2344 = vmax.f32 %v2342, %v2343
        %v2345 = vrot.slane %v2202, 4
        %v2346 = vmax.f32 %v2202, %v2345
        %v2347 = vrot.slane %v2346, 2
        %v2348 = vmax.f32 %v2346, %v2347
        %v2349 = vrot.slane %v2348, 1
        %v2350 = vmax.f32 %v2348, %v2349
        %v2351 = vrot.slane %v2203, 4
        %v2352 = vmax.f32 %v2203, %v2351
        %v2353 = vrot.slane %v2352, 2
        %v2354 = vmax.f32 %v2352, %v2353
        %v2355 = vrot.slane %v2354, 1
        %v2356 = vmax.f32 %v2354, %v2355
        %v2357 = vrot.slane %v2204, 4
        %v2358 = vmax.f32 %v2204, %v2357
        %v2359 = vrot.slane %v2358, 2
        %v2360 = vmax.f32 %v2358, %v2359
        %v2361 = vrot.slane %v2360, 1
        %v2362 = vmax.f32 %v2360, %v2361
        %v2363 = vrot.slane %v2205, 4
        %v2364 = vmax.f32 %v2205, %v2363
        %v2365 = vrot.slane %v2364, 2
        %v2366 = vmax.f32 %v2364, %v2365
        %v2367 = vrot.slane %v2366, 1
        %v2368 = vmax.f32 %v2366, %v2367
        %v2369 = vrot.slane %v2206, 4
        %v2370 = vmax.f32 %v2206, %v2369
        %v2371 = vrot.slane %v2370, 2
        %v2372 = vmax.f32 %v2370, %v2371
        %v2373 = vrot.slane %v2372, 1
        %v2374 = vmax.f32 %v2372, %v2373
        %v2375 = vrot.slane %v2207, 4
        %v2376 = vmax.f32 %v2207, %v2375
        %v2377 = vrot.slane %v2376, 2
        %v2378 = vmax.f32 %v2376, %v2377
        %v2379 = vrot.slane %v2378, 1
        %v2380 = vmax.f32 %v2378, %v2379
        %v2381 = vrot.slane %v2208, 4
        %v2382 = vmax.f32 %v2208, %v2381
        %v2383 = vrot.slane %v2382, 2
        %v2384 = vmax.f32 %v2382, %v2383
        %v2385 = vrot.slane %v2384, 1
        %v2386 = vmax.f32 %v2384, %v2385
        %v2387 = vrot.slane %v2209, 4
        %v2388 = vmax.f32 %v2209, %v2387
        %v2389 = vrot.slane %v2388, 2
        %v2390 = vmax.f32 %v2388, %v2389
        %v2391 = vrot.slane %v2390, 1
        %v2392 = vmax.f32 %v2390, %v2391
        %v2393 = vrot.slane %v2210, 4
        %v2394 = vmax.f32 %v2210, %v2393
        %v2395 = vrot.slane %v2394, 2
        %v2396 = vmax.f32 %v2394, %v2395
        %v2397 = vrot.slane %v2396, 1
        %v2398 = vmax.f32 %v2396, %v2397
        %v2399 = vrot.slane %v2211, 4
        %v2400 = vmax.f32 %v2211, %v2399
        %v2401 = vrot.slane %v2400, 2
        %v2402 = vmax.f32 %v2400, %v2401
        %v2403 = vrot.slane %v2402, 1
        %v2404 = vmax.f32 %v2402, %v2403
        %v2405 = vrot.slane %v2212, 4
        %v2406 = vmax.f32 %v2212, %v2405
        %v2407 = vrot.slane %v2406, 2
        %v2408 = vmax.f32 %v2406, %v2407
        %v2409 = vrot.slane %v2408, 1
        %v2410 = vmax.f32 %v2408, %v2409
        %v2411 = vrot.slane %v2213, 4
        %v2412 = vmax.f32 %v2213, %v2411
        %v2413 = vrot.slane %v2412, 2
        %v2414 = vmax.f32 %v2412, %v2413
        %v2415 = vrot.slane %v2414, 1
        %v2416 = vmax.f32 %v2414, %v2415
        %v2417 = vrot.slane %v2214, 4
        %v2418 = vmax.f32 %v2214, %v2417
        %v2419 = vrot.slane %v2418, 2
        %v2420 = vmax.f32 %v2418, %v2419
        %v2421 = vrot.slane %v2420, 1
        %v2422 = vmax.f32 %v2420, %v2421
        %v2423 = vmax.f32 %v2151, %v2332
        %v2424 = vmax.f32 %v2152, %v2338
        %v2425 = vmax.f32 %v2153, %v2344
        %v2426 = vmax.f32 %v2154, %v2350
        %v2427 = vmax.f32 %v2155, %v2356
        %v2428 = vmax.f32 %v2156, %v2362
        %v2429 = vmax.f32 %v2157, %v2368
        %v2430 = vmax.f32 %v2158, %v2374
        %v2431 = vmax.f32 %v2159, %v2380
        %v2432 = vmax.f32 %v2160, %v2386
        %v2433 = vmax.f32 %v2161, %v2392
        %v2434 = vmax.f32 %v2162, %v2398
        %v2435 = vmax.f32 %v2163, %v2404
        %v2436 = vmax.f32 %v2164, %v2410
        %v2437 = vmax.f32 %v2165, %v2416
        %v2438 = vmax.f32 %v2166, %v2422
        %v2439 = vmul.f32 %v2311, 0.03125
        %v2440 = vmul.f32 %v2312, 0.03125
        %v2441 = vmul.f32 %v2313, 0.03125
        %v2442 = vmul.f32 %v2314, 0.03125
        %v2443 = vmul.f32 %v2315, 0.03125
        %v2444 = vmul.f32 %v2316, 0.03125
        %v2445 = vmul.f32 %v2317, 0.03125
        %v2446 = vmul.f32 %v2318, 0.03125
        %v2447 = vmul.f32 %v2319, 0.03125
        %v2448 = vmul.f32 %v2320, 0.03125
        %v2449 = vmul.f32 %v2321, 0.03125
        %v2450 = vmul.f32 %v2322, 0.03125
        %v2451 = vmul.f32 %v2323, 0.03125
        %v2452 = vmul.f32 %v2324, 0.03125
        %v2453 = vmul.f32 %v2325, 0.03125
        %v2454 = vmul.f32 %v2326, 0.03125
        %v2455 = vld [vmem:[#allocation7] sm:$0xff]
        %v2456 = vld [vmem:[#allocation7 + $0x8] sm:$0xff]
        %v2457 = vld [vmem:[#allocation7 + $0x10] sm:$0xff]
        %v2458 = vld [vmem:[#allocation7 + $0x18] sm:$0xff]
        %v2459 = vld [vmem:[#allocation7 + $0x20] sm:$0xff]
        %v2460 = vld [vmem:[#allocation7 + $0x28] sm:$0xff]
        %v2461 = vld [vmem:[#allocation7 + $0x30] sm:$0xff]
        %v2462 = vld [vmem:[#allocation7 + $0x38] sm:$0xff]
        %v2463 = vld [vmem:[#allocation7 + $0x40] sm:$0xff]
        %v2464 = vld [vmem:[#allocation7 + $0x48] sm:$0xff]
        %v2465 = vld [vmem:[#allocation7 + $0x50] sm:$0xff]
        %v2466 = vld [vmem:[#allocation7 + $0x58] sm:$0xff]
        %v2467 = vld [vmem:[#allocation7 + $0x60] sm:$0xff]
        %v2468 = vld [vmem:[#allocation7 + $0x68] sm:$0xff]
        %v2469 = vld [vmem:[#allocation7 + $0x70] sm:$0xff]
        %v2470 = vld [vmem:[#allocation7 + $0x78] sm:$0xff]
        %v2471 = vld [vmem:[#allocation7 + $0x80] sm:$0xff]
        %v2472 = vld [vmem:[#allocation7 + $0x88] sm:$0xff]
        %v2473 = vld [vmem:[#allocation7 + $0x90] sm:$0xff]
        %v2474 = vld [vmem:[#allocation7 + $0x98] sm:$0xff]
        %v2475 = vld [vmem:[#allocation7 + $0xa0] sm:$0xff]
        %v2476 = vld [vmem:[#allocation7 + $0xa8] sm:$0xff]
        %v2477 = vld [vmem:[#allocation7 + $0xb0] sm:$0xff]
        %v2478 = vld [vmem:[#allocation7 + $0xb8] sm:$0xff]
        %v2479 = vld [vmem:[#allocation7 + $0xc0] sm:$0xff]
        %v2480 = vld [vmem:[#allocation7 + $0xc8] sm:$0xff]
        %v2481 = vld [vmem:[#allocation7 + $0xd0] sm:$0xff]
        %v2482 = vld [vmem:[#allocation7 + $0xd8] sm:$0xff]
        %v2483 = vld [vmem:[#allocation7 + $0xe0] sm:$0xff]
        %v2484 = vld [vmem:[#allocation7 + $0xe8] sm:$0xff]
        %v2485 = vld [vmem:[#allocation7 + $0xf0] sm:$0xff]
        %v2486 = vld [vmem:[#allocation7 + $0xf8] sm:$0xff]
        %v2487 = vld [vmem:[#allocation7 + $0x100] sm:$0xff]
        %v2488 = vld [vmem:[#allocation7 + $0x108] sm:$0xff]
        %v2489 = vld [vmem:[#allocation7 + $0x110] sm:$0xff]
        %v2490 = vld [vmem:[#allocation7 + $0x118] sm:$0xff]
        %v2491 = vld [vmem:[#allocation7 + $0x120] sm:$0xff]
        %v2492 = vld [vmem:[#allocation7 + $0x128] sm:$0xff]
        %v2493 = vld [vmem:[#allocation7 + $0x130] sm:$0xff]
        %v2494 = vld [vmem:[#allocation7 + $0x138] sm:$0xff]
        %v2495 = vld [vmem:[#allocation7 + $0x140] sm:$0xff]
        %v2496 = vld [vmem:[#allocation7 + $0x148] sm:$0xff]
        %v2497 = vld [vmem:[#allocation7 + $0x150] sm:$0xff]
        %v2498 = vld [vmem:[#allocation7 + $0x158] sm:$0xff]
        %v2499 = vld [vmem:[#allocation7 + $0x160] sm:$0xff]
        %v2500 = vld [vmem:[#allocation7 + $0x168] sm:$0xff]
        %v2501 = vld [vmem:[#allocation7 + $0x170] sm:$0xff]
        %v2502 = vld [vmem:[#allocation7 + $0x178] sm:$0xff]
        %v2503 = vld [vmem:[#allocation7 + $0x180] sm:$0xff]
        %v2504 = vld [vmem:[#allocation7 + $0x188] sm:$0xff]
        %v2505 = vld [vmem:[#allocation7 + $0x190] sm:$0xff]
        %v2506 = vld [vmem:[#allocation7 + $0x198] sm:$0xff]
        %v2507 = vld [vmem:[#allocation7 + $0x1a0] sm:$0xff]
        %v2508 = vld [vmem:[#allocation7 + $0x1a8] sm:$0xff]
        %v2509 = vld [vmem:[#allocation7 + $0x1b0] sm:$0xff]
        %v2510 = vld [vmem:[#allocation7 + $0x1b8] sm:$0xff]
        %v2511 = vld [vmem:[#allocation7 + $0x1c0] sm:$0xff]
        %v2512 = vld [vmem:[#allocation7 + $0x1c8] sm:$0xff]
        %v2513 = vld [vmem:[#allocation7 + $0x1d0] sm:$0xff]
        %v2514 = vld [vmem:[#allocation7 + $0x1d8] sm:$0xff]
        %v2515 = vld [vmem:[#allocation7 + $0x1e0] sm:$0xff]
        %v2516 = vld [vmem:[#allocation7 + $0x1e8] sm:$0xff]
        %v2517 = vld [vmem:[#allocation7 + $0x1f0] sm:$0xff]
        %v2518 = vld [vmem:[#allocation7 + $0x1f8] sm:$0xff]
        %v2519 = vld [vmem:[#allocation8] sm:$0xff]
        %v2520 = vld [vmem:[#allocation8 + $0x8] sm:$0xff]
        %v2521 = vld [vmem:[#allocation8 + $0x10] sm:$0xff]
        %v2522 = vld [vmem:[#allocation8 + $0x18] sm:$0xff]
        %v2523 = vld [vmem:[#allocation8 + $0x20] sm:$0xff]
        %v2524 = vld [vmem:[#allocation8 + $0x28] sm:$0xff]
        %v2525 = vld [vmem:[#allocation8 + $0x30] sm:$0xff]
        %v2526 = vld [vmem:[#allocation8 + $0x38] sm:$0xff]
        %v2527 = vld [vmem:[#allocation8 + $0x40] sm:$0xff]
        %v2528 = vld [vmem:[#allocation8 + $0x48] sm:$0xff]
        %v2529 = vld [vmem:[#allocation8 + $0x50] sm:$0xff]
        %v2530 = vld [vmem:[#allocation8 + $0x58] sm:$0xff]
        %v2531 = vld [vmem:[#allocation8 + $0x60] sm:$0xff]
        %v2532 = vld [vmem:[#allocation8 + $0x68] sm:$0xff]
        %v2533 = vld [vmem:[#allocation8 + $0x70] sm:$0xff]
        %v2534 = vld [vmem:[#allocation8 + $0x78] sm:$0xff]
        %v2535 = vld [vmem:[#allocation8 + $0x80] sm:$0xff]
        %v2536 = vld [vmem:[#allocation8 + $0x88] sm:$0xff]
        %v2537 = vld [vmem:[#allocation8 + $0x90] sm:$0xff]
        %v2538 = vld [vmem:[#allocation8 + $0x98] sm:$0xff]
        %v2539 = vld [vmem:[#allocation8 + $0xa0] sm:$0xff]
        %v2540 = vld [vmem:[#allocation8 + $0xa8] sm:$0xff]
        %v2541 = vld [vmem:[#allocation8 + $0xb0] sm:$0xff]
        %v2542 = vld [vmem:[#allocation8 + $0xb8] sm:$0xff]
        %v2543 = vld [vmem:[#allocation8 + $0xc0] sm:$0xff]
        %v2544 = vld [vmem:[#allocation8 + $0xc8] sm:$0xff]
        %v2545 = vld [vmem:[#allocation8 + $0xd0] sm:$0xff]
        %v2546 = vld [vmem:[#allocation8 + $0xd8] sm:$0xff]
        %v2547 = vld [vmem:[#allocation8 + $0xe0] sm:$0xff]
        %v2548 = vld [vmem:[#allocation8 + $0xe8] sm:$0xff]
        %v2549 = vld [vmem:[#allocation8 + $0xf0] sm:$0xff]
        %v2550 = vld [vmem:[#allocation8 + $0xf8] sm:$0xff]
        %v2551 = vld [vmem:[#allocation8 + $0x100] sm:$0xff]
        %v2552 = vld [vmem:[#allocation8 + $0x108] sm:$0xff]
        %v2553 = vld [vmem:[#allocation8 + $0x110] sm:$0xff]
        %v2554 = vld [vmem:[#allocation8 + $0x118] sm:$0xff]
        %v2555 = vld [vmem:[#allocation8 + $0x120] sm:$0xff]
        %v2556 = vld [vmem:[#allocation8 + $0x128] sm:$0xff]
        %v2557 = vld [vmem:[#allocation8 + $0x130] sm:$0xff]
        %v2558 = vld [vmem:[#allocation8 + $0x138] sm:$0xff]
        %v2559 = vld [vmem:[#allocation8 + $0x140] sm:$0xff]
        %v2560 = vld [vmem:[#allocation8 + $0x148] sm:$0xff]
        %v2561 = vld [vmem:[#allocation8 + $0x150] sm:$0xff]
        %v2562 = vld [vmem:[#allocation8 + $0x158] sm:$0xff]
        %v2563 = vld [vmem:[#allocation8 + $0x160] sm:$0xff]
        %v2564 = vld [vmem:[#allocation8 + $0x168] sm:$0xff]
        %v2565 = vld [vmem:[#allocation8 + $0x170] sm:$0xff]
        %v2566 = vld [vmem:[#allocation8 + $0x178] sm:$0xff]
        %v2567 = vld [vmem:[#allocation8 + $0x180] sm:$0xff]
        %v2568 = vld [vmem:[#allocation8 + $0x188] sm:$0xff]
        %v2569 = vld [vmem:[#allocation8 + $0x190] sm:$0xff]
        %v2570 = vld [vmem:[#allocation8 + $0x198] sm:$0xff]
        %v2571 = vld [vmem:[#allocation8 + $0x1a0] sm:$0xff]
        %v2572 = vld [vmem:[#allocation8 + $0x1a8] sm:$0xff]
        %v2573 = vld [vmem:[#allocation8 + $0x1b0] sm:$0xff]
        %v2574 = vld [vmem:[#allocation8 + $0x1b8] sm:$0xff]
        %v2575 = vld [vmem:[#allocation8 + $0x1c0] sm:$0xff]
        %v2576 = vld [vmem:[#allocation8 + $0x1c8] sm:$0xff]
        %v2577 = vld [vmem:[#allocation8 + $0x1d0] sm:$0xff]
        %v2578 = vld [vmem:[#allocation8 + $0x1d8] sm:$0xff]
        %v2579 = vld [vmem:[#allocation8 + $0x1e0] sm:$0xff]
        %v2580 = vld [vmem:[#allocation8 + $0x1e8] sm:$0xff]
        %v2581 = vld [vmem:[#allocation8 + $0x1f0] sm:$0xff]
        %v2582 = vld [vmem:[#allocation8 + $0x1f8] sm:$0xff]
        %v2599 = vsel %vm916, %v2425, %v2423
        %v2600 = vsel %vm918, %v2427, %v2599
        %v2601 = vsel %vm920, %v2429, %v2600
        %v2602 = vsel %vm922, %v2431, %v2601
        %v2603 = vsel %vm924, %v2433, %v2602
        %v2604 = vsel %vm926, %v2435, %v2603
        %v2605 = vsel %vm928, %v2437, %v2604
        %v2606 = vsel %vm916, %v2426, %v2424
        %v2607 = vsel %vm918, %v2428, %v2606
        %v2608 = vsel %vm920, %v2430, %v2607
        %v2609 = vsel %vm922, %v2432, %v2608
        %v2610 = vsel %vm924, %v2434, %v2609
        %v2611 = vsel %vm926, %v2436, %v2610
        %v2612 = vsel %vm928, %v2438, %v2611
        %2615 = vmatprep.subr.mxu0 %v2520
        %2616 = vmatpush1.msra.mxu0 %v2519
        %2617 = vmatprep.subr.mxu0 %v2522
        %2618 = vmatpush1.msra.mxu0 %v2521
        %2619 = vmatprep.subr.mxu0 %v2524
        %2620 = vmatpush1.msra.mxu0 %v2523
        %2621 = vmatprep.subr.mxu0 %v2526
        %2622 = vmatpush1.msra.mxu0 %v2525
        %2623 = vmatprep.subr.mxu0 %v2528
        %2624 = vmatpush1.msra.mxu0 %v2527
        %2625 = vmatprep.subr.mxu0 %v2530
        %2626 = vmatpush1.msra.mxu0 %v2529
        %2627 = vmatprep.subr.mxu0 %v2532
        %2628 = vmatpush1.msra.mxu0 %v2531
        %2629 = vmatprep.subr.mxu0 %v2534
        %2630 = vmatpush1.msra.mxu0 %v2533
        %2631 = vmatprep.subr.mxu0 %v2536
        %2632 = vmatpush1.msra.mxu0 %v2535
        %2633 = vmatprep.subr.mxu0 %v2538
        %2634 = vmatpush1.msra.mxu0 %v2537
        %2635 = vmatprep.subr.mxu0 %v2540
        %2636 = vmatpush1.msra.mxu0 %v2539
        %2637 = vmatprep.subr.mxu0 %v2542
        %2638 = vmatpush1.msra.mxu0 %v2541
        %2639 = vmatprep.subr.mxu0 %v2544
        %2640 = vmatpush1.msra.mxu0 %v2543
        %2641 = vmatprep.subr.mxu0 %v2546
        %2642 = vmatpush1.msra.mxu0 %v2545
        %2643 = vmatprep.subr.mxu0 %v2548
        %2644 = vmatpush1.msra.mxu0 %v2547
        %2645 = vmatprep.subr.mxu0 %v2550
        %2646 = vmatpush1.msra.mxu0 %v2549
        %2647 = vmatprep.subr.mxu0 %v2552
        %2648 = vmatpush1.msra.mxu0 %v2551
        %2649 = vmatprep.subr.mxu0 %v2554
        %2650 = vmatpush1.msra.mxu0 %v2553
        %2651 = vmatprep.subr.mxu0 %v2556
        %2652 = vmatpush1.msra.mxu0 %v2555
        %2653 = vmatprep.subr.mxu0 %v2558
        %2654 = vmatpush1.msra.mxu0 %v2557
        %2655 = vmatprep.subr.mxu0 %v2560
        %2656 = vmatpush1.msra.mxu0 %v2559
        %2657 = vmatprep.subr.mxu0 %v2562
        %2658 = vmatpush1.msra.mxu0 %v2561
        %2659 = vmatprep.subr.mxu0 %v2564
        %2660 = vmatpush1.msra.mxu0 %v2563
        %2661 = vmatprep.subr.mxu0 %v2566
        %2662 = vmatpush1.msra.mxu0 %v2565
        %2663 = vmatprep.subr.mxu0 %v2568
        %2664 = vmatpush1.msra.mxu0 %v2567
        %2665 = vmatprep.subr.mxu0 %v2570
        %2666 = vmatpush1.msra.mxu0 %v2569
        %2667 = vmatprep.subr.mxu0 %v2572
        %2668 = vmatpush1.msra.mxu0 %v2571
        %2669 = vmatprep.subr.mxu0 %v2574
        %2670 = vmatpush1.msra.mxu0 %v2573
        %2671 = vmatprep.subr.mxu0 %v2576
        %2672 = vmatpush1.msra.mxu0 %v2575
        %2673 = vmatprep.subr.mxu0 %v2578
        %2674 = vmatpush1.msra.mxu0 %v2577
        %2675 = vmatprep.subr.mxu0 %v2580
        %2676 = vmatpush1.msra.mxu0 %v2579
        %2677 = vmatprep.subr.mxu0 %v2582
        %2678 = vmatpush1.msra.mxu0 %v2581
        %2679 = vmatprep.mubr.f32.mxu0 %v2612
        %2680 = vmatmul.mubr.f32.gmra.mrb[0].mxu0 %v2605
        %v2681 = vpop.f32.mrb[0].mxu0
        %v2682 = vadd.f32 0.0, %v2681
        %v2683 = vpop.f32.mrb[0].mxu0
        %v2684 = vadd.f32 0.0, %v2683
        %2685 = vdwg.mxu0
        %v2702 = vsel %vm916, %v2441, %v2439
        %v2703 = vsel %vm918, %v2443, %v2702
        %v2704 = vsel %vm920, %v2445, %v2703
        %v2705 = vsel %vm922, %v2447, %v2704
        %v2706 = vsel %vm924, %v2449, %v2705
        %v2707 = vsel %vm926, %v2451, %v2706
        %v2708 = vsel %vm928, %v2453, %v2707
        %v2709 = vsel %vm916, %v2442, %v2440
        %v2710 = vsel %vm918, %v2444, %v2709
        %v2711 = vsel %vm920, %v2446, %v2710
        %v2712 = vsel %vm922, %v2448, %v2711
        %v2713 = vsel %vm924, %v2450, %v2712
        %v2714 = vsel %vm926, %v2452, %v2713
        %v2715 = vsel %vm928, %v2454, %v2714
        %2718 = vmatprep.subr.mxu0 %v2456
        %2719 = vmatpush1.msra.mxu0 %v2455
        %2720 = vmatprep.subr.mxu0 %v2458
        %2721 = vmatpush1.msra.mxu0 %v2457
        %2722 = vmatprep.subr.mxu0 %v2460
        %2723 = vmatpush1.msra.mxu0 %v2459
        %2724 = vmatprep.subr.mxu0 %v2462
        %2725 = vmatpush1.msra.mxu0 %v2461
        %2726 = vmatprep.subr.mxu0 %v2464
        %2727 = vmatpush1.msra.mxu0 %v2463
        %2728 = vmatprep.subr.mxu0 %v2466
        %2729 = vmatpush1.msra.mxu0 %v2465
        %2730 = vmatprep.subr.mxu0 %v2468
        %2731 = vmatpush1.msra.mxu0 %v2467
        %2732 = vmatprep.subr.mxu0 %v2470
        %2733 = vmatpush1.msra.mxu0 %v2469
        %2734 = vmatprep.subr.mxu0 %v2472
        %2735 = vmatpush1.msra.mxu0 %v2471
        %2736 = vmatprep.subr.mxu0 %v2474
        %2737 = vmatpush1.msra.mxu0 %v2473
        %2738 = vmatprep.subr.mxu0 %v2476
        %2739 = vmatpush1.msra.mxu0 %v2475
        %2740 = vmatprep.subr.mxu0 %v2478
        %2741 = vmatpush1.msra.mxu0 %v2477
        %2742 = vmatprep.subr.mxu0 %v2480
        %2743 = vmatpush1.msra.mxu0 %v2479
        %2744 = vmatprep.subr.mxu0 %v2482
        %2745 = vmatpush1.msra.mxu0 %v2481
        %2746 = vmatprep.subr.mxu0 %v2484
        %2747 = vmatpush1.msra.mxu0 %v2483
        %2748 = vmatprep.subr.mxu0 %v2486
        %2749 = vmatpush1.msra.mxu0 %v2485
        %2750 = vmatprep.subr.mxu0 %v2488
        %2751 = vmatpush1.msra.mxu0 %v2487
        %2752 = vmatprep.subr.mxu0 %v2490
        %2753 = vmatpush1.msra.mxu0 %v2489
        %2754 = vmatprep.subr.mxu0 %v2492
        %2755 = vmatpush1.msra.mxu0 %v2491
        %2756 = vmatprep.subr.mxu0 %v2494
        %2757 = vmatpush1.msra.mxu0 %v2493
        %2758 = vmatprep.subr.mxu0 %v2496
        %2759 = vmatpush1.msra.mxu0 %v2495
        %2760 = vmatprep.subr.mxu0 %v2498
        %2761 = vmatpush1.msra.mxu0 %v2497
        %2762 = vmatprep.subr.mxu0 %v2500
        %2763 = vmatpush1.msra.mxu0 %v2499
        %2764 = vmatprep.subr.mxu0 %v2502
        %2765 = vmatpush1.msra.mxu0 %v2501
        %2766 = vmatprep.subr.mxu0 %v2504
        %2767 = vmatpush1.msra.mxu0 %v2503
        %2768 = vmatprep.subr.mxu0 %v2506
        %2769 = vmatpush1.msra.mxu0 %v2505
        %2770 = vmatprep.subr.mxu0 %v2508
        %2771 = vmatpush1.msra.mxu0 %v2507
        %2772 = vmatprep.subr.mxu0 %v2510
        %2773 = vmatpush1.msra.mxu0 %v2509
        %2774 = vmatprep.subr.mxu0 %v2512
        %2775 = vmatpush1.msra.mxu0 %v2511
        %2776 = vmatprep.subr.mxu0 %v2514
        %2777 = vmatpush1.msra.mxu0 %v2513
        %2778 = vmatprep.subr.mxu0 %v2516
        %2779 = vmatpush1.msra.mxu0 %v2515
        %2780 = vmatprep.subr.mxu0 %v2518
        %2781 = vmatpush1.msra.mxu0 %v2517
        %2782 = vmatprep.mubr.f32.mxu0 %v2715
        %2783 = vmatmul.mubr.f32.gmra.mrb[0].mxu0 %v2708
        %v2784 = vpop.f32.mrb[0].mxu0
        %v2785 = vadd.f32 %v2682, %v2784
        %v2786 = vpop.f32.mrb[0].mxu0
        %v2787 = vadd.f32 %v2684, %v2786
        %2788 = vdwg.mxu0
        %v2789 = vmul.f32 %v2785, 0.5
        %v2790 = vmul.f32 %v2787, 0.5
        %v2791 = vtanh.pop %v2789
        %v2792 = vtanh.pop %v2790
        %v2793 = vadd.f32 %v2791, 1.0
        %v2794 = vadd.f32 %v2792, 1.0
        %v2795 = vmul.f32 %v2793, 0.5
        %v2796 = vmul.f32 %v2794, 0.5
        %v2799 = vcombine.low %v2795, %v2796
        %v2800 = vcombine.high %v2795, %v2796
        %v2802 = vunpack.c.l.s4 1966171168
        %v2803 = vunpack.c.0.s8 %v2802
        %v2804 = vlaneseq
        %v2805 = vshrl.u32 %v2804, 7
        %v2806 = vsub.s32 %v2803, %v2805
        %v2807 = vrot.slane %v2799, %v2806
        %v2809 = vunpack.c.l.s4 1966171168
        %v2810 = vunpack.c.0.s8 %v2809
        %v2811 = vlaneseq
        %v2812 = vshrl.u32 %v2811, 7
        %v2813 = vsub.s32 %v2810, %v2812
        %v2814 = vrot.slane %v2800, %v2813
        %v2815 = vcombine.high %v2807, %v2807
        %v2816 = vcombine.high %v2814, %v2814
        %v2818 = vunpack.c.l.s4 1966171168
        %v2819 = vunpack.c.0.s8 %v2818
        %v2820 = vlaneseq
        %v2821 = vshrl.u32 %v2820, 7
        %v2822 = vsub.s32 %v2819, %v2821
        %v2823 = vrot.slane %v2807, %v2822
        %v2825 = vunpack.c.l.s4 1966171168
        %v2826 = vunpack.c.0.s8 %v2825
        %v2827 = vlaneseq
        %v2828 = vshrl.u32 %v2827, 7
        %v2829 = vsub.s32 %v2826, %v2828
        %v2830 = vrot.slane %v2814, %v2829
        %v2832 = vunpack.c.l.s4 1966171168
        %v2833 = vunpack.c.0.s8 %v2832
        %v2834 = vlaneseq
        %v2835 = vshrl.u32 %v2834, 7
        %v2836 = vsub.s32 %v2833, %v2835
        %v2837 = vrot.slane %v2815, %v2836
        %v2839 = vunpack.c.l.s4 1966171168
        %v2840 = vunpack.c.0.s8 %v2839
        %v2841 = vlaneseq
        %v2842 = vshrl.u32 %v2841, 7
        %v2843 = vsub.s32 %v2840, %v2842
        %v2844 = vrot.slane %v2816, %v2843
        %v2845 = vcombine.high %v2823, %v2823
        %v2846 = vcombine.high %v2830, %v2830
        %v2847 = vcombine.high %v2837, %v2837
        %v2848 = vcombine.high %v2844, %v2844
        %v2849 = vlaneseq
        %v2850 = vshrl.u32 %v2849, 7
        %v2851 = vsub.s32 0, %v2850
        %v2852 = vrot.slane %v2823, %v2851
        %v2853 = vlaneseq
        %v2854 = vshrl.u32 %v2853, 7
        %v2855 = vsub.s32 1, %v2854
        %v2856 = vrot.slane %v2823, %v2855
        %v2857 = vlaneseq
        %v2858 = vshrl.u32 %v2857, 7
        %v2859 = vsub.s32 0, %v2858
        %v2860 = vrot.slane %v2837, %v2859
        %v2861 = vlaneseq
        %v2862 = vshrl.u32 %v2861, 7
        %v2863 = vsub.s32 1, %v2862
        %v2864 = vrot.slane %v2837, %v2863
        %v2865 = vlaneseq
        %v2866 = vshrl.u32 %v2865, 7
        %v2867 = vsub.s32 0, %v2866
        %v2868 = vrot.slane %v2845, %v2867
        %v2869 = vlaneseq
        %v2870 = vshrl.u32 %v2869, 7
        %v2871 = vsub.s32 1, %v2870
        %v2872 = vrot.slane %v2845, %v2871
        %v2873 = vlaneseq
        %v2874 = vshrl.u32 %v2873, 7
        %v2875 = vsub.s32 0, %v2874
        %v2876 = vrot.slane %v2847, %v2875
        %v2877 = vlaneseq
        %v2878 = vshrl.u32 %v2877, 7
        %v2879 = vsub.s32 1, %v2878
        %v2880 = vrot.slane %v2847, %v2879
        %v2881 = vlaneseq
        %v2882 = vshrl.u32 %v2881, 7
        %v2883 = vsub.s32 0, %v2882
        %v2884 = vrot.slane %v2830, %v2883
        %v2885 = vlaneseq
        %v2886 = vshrl.u32 %v2885, 7
        %v2887 = vsub.s32 1, %v2886
        %v2888 = vrot.slane %v2830, %v2887
        %v2889 = vlaneseq
        %v2890 = vshrl.u32 %v2889, 7
        %v2891 = vsub.s32 0, %v2890
        %v2892 = vrot.slane %v2844, %v2891
        %v2893 = vlaneseq
        %v2894 = vshrl.u32 %v2893, 7
        %v2895 = vsub.s32 1, %v2894
        %v2896 = vrot.slane %v2844, %v2895
        %v2897 = vlaneseq
        %v2898 = vshrl.u32 %v2897, 7
        %v2899 = vsub.s32 0, %v2898
        %v2900 = vrot.slane %v2846, %v2899
        %v2901 = vlaneseq
        %v2902 = vshrl.u32 %v2901, 7
        %v2903 = vsub.s32 1, %v2902
        %v2904 = vrot.slane %v2846, %v2903
        %v2905 = vlaneseq
        %v2906 = vshrl.u32 %v2905, 7
        %v2907 = vsub.s32 0, %v2906
        %v2908 = vrot.slane %v2848, %v2907
        %v2909 = vlaneseq
        %v2910 = vshrl.u32 %v2909, 7
        %v2911 = vsub.s32 1, %v2910
        %v2912 = vrot.slane %v2848, %v2911
        %v2929 = vmul.f32 %v1367, %v2852
        %v2930 = vmul.f32 %v1368, %v2856
        %v2931 = vmul.f32 %v1369, %v2860
        %v2932 = vmul.f32 %v1370, %v2864
        %v2933 = vmul.f32 %v1371, %v2868
        %v2934 = vmul.f32 %v1372, %v2872
        %v2935 = vmul.f32 %v1373, %v2876
        %v2936 = vmul.f32 %v1374, %v2880
        %v2937 = vmul.f32 %v1375, %v2884
        %v2938 = vmul.f32 %v1376, %v2888
        %v2939 = vmul.f32 %v1377, %v2892
        %v2940 = vmul.f32 %v1378, %v2896
        %v2941 = vmul.f32 %v1379, %v2900
        %v2942 = vmul.f32 %v1380, %v2904
        %v2943 = vmul.f32 %v1381, %v2908
        %v2944 = vmul.f32 %v1382, %v2912
        %v2945 = vadd.f32 %v2929, %v2930
        %2946 = vadd.xlane.f32.xlu0 %v2945
        %v2947 = vpop.xlane.xlu0 %2946
        %v2948 = vadd.f32 %v2931, %v2932
        %2949 = vadd.xlane.f32.xlu0 %v2948
        %v2950 = vpop.xlane.xlu0 %2949
        %v2951 = vadd.f32 %v2933, %v2934
        %2952 = vadd.xlane.f32.xlu0 %v2951
        %v2953 = vpop.xlane.xlu0 %2952
        %v2954 = vadd.f32 %v2935, %v2936
        %2955 = vadd.xlane.f32.xlu0 %v2954
        %v2956 = vpop.xlane.xlu0 %2955
        %v2957 = vadd.f32 %v2937, %v2938
        %2958 = vadd.xlane.f32.xlu0 %v2957
        %v2959 = vpop.xlane.xlu0 %2958
        %v2960 = vadd.f32 %v2939, %v2940
        %2961 = vadd.xlane.f32.xlu0 %v2960
        %v2962 = vpop.xlane.xlu0 %2961
        %v2963 = vadd.f32 %v2941, %v2942
        %2964 = vadd.xlane.f32.xlu0 %v2963
        %v2965 = vpop.xlane.xlu0 %2964
        %v2966 = vadd.f32 %v2943, %v2944
        %2967 = vadd.xlane.f32.xlu0 %v2966
        %v2968 = vpop.xlane.xlu0 %2967
        %v2969 = vmul.f32 %v2947, 0.00390625
        %v2970 = vmul.f32 %v2950, 0.00390625
        %v2971 = vmul.f32 %v2953, 0.00390625
        %v2972 = vmul.f32 %v2956, 0.00390625
        %v2973 = vmul.f32 %v2959, 0.00390625
        %v2974 = vmul.f32 %v2962, 0.00390625
        %v2975 = vmul.f32 %v2965, 0.00390625
        %v2976 = vmul.f32 %v2968, 0.00390625
        %v2977 = vmax.f32 %v2929, %v2930
        %2978 = vmax.xlane.f32.xlu0 %v2977
        %v2979 = vpop.xlane.xlu0 %2978
        %v2980 = vmax.f32 %v2931, %v2932
        %2981 = vmax.xlane.f32.xlu0 %v2980
        %v2982 = vpop.xlane.xlu0 %2981
        %v2983 = vmax.f32 %v2933, %v2934
        %2984 = vmax.xlane.f32.xlu0 %v2983
        %v2985 = vpop.xlane.xlu0 %2984
        %v2986 = vmax.f32 %v2935, %v2936
        %2987 = vmax.xlane.f32.xlu0 %v2986
        %v2988 = vpop.xlane.xlu0 %2987
        %v2989 = vmax.f32 %v2937, %v2938
        %2990 = vmax.xlane.f32.xlu0 %v2989
        %v2991 = vpop.xlane.xlu0 %2990
        %v2992 = vmax.f32 %v2939, %v2940
        %2993 = vmax.xlane.f32.xlu0 %v2992
        %v2994 = vpop.xlane.xlu0 %2993
        %v2995 = vmax.f32 %v2941, %v2942
        %2996 = vmax.xlane.f32.xlu0 %v2995
        %v2997 = vpop.xlane.xlu0 %2996
        %v2998 = vmax.f32 %v2943, %v2944
        %2999 = vmax.xlane.f32.xlu0 %v2998
        %v3000 = vpop.xlane.xlu0 %2999
        %v3001 = vmul.f32 %v1639, %v2852
        %v3002 = vmul.f32 %v1640, %v2856
        %v3003 = vmul.f32 %v1641, %v2860
        %v3004 = vmul.f32 %v1642, %v2864
        %v3005 = vmul.f32 %v1643, %v2868
        %v3006 = vmul.f32 %v1644, %v2872
        %v3007 = vmul.f32 %v1645, %v2876
        %v3008 = vmul.f32 %v1646, %v2880
        %v3009 = vmul.f32 %v1647, %v2884
        %v3010 = vmul.f32 %v1648, %v2888
        %v3011 = vmul.f32 %v1649, %v2892
        %v3012 = vmul.f32 %v1650, %v2896
        %v3013 = vmul.f32 %v1651, %v2900
        %v3014 = vmul.f32 %v1652, %v2904
        %v3015 = vmul.f32 %v1653, %v2908
        %v3016 = vmul.f32 %v1654, %v2912
        %v3017 = vadd.f32 %v3001, %v3002
        %3018 = vadd.xlane.f32.xlu0 %v3017
        %v3019 = vpop.xlane.xlu0 %3018
        %v3020 = vadd.f32 %v3003, %v3004
        %3021 = vadd.xlane.f32.xlu0 %v3020
        %v3022 = vpop.xlane.xlu0 %3021
        %v3023 = vadd.f32 %v3005, %v3006
        %3024 = vadd.xlane.f32.xlu0 %v3023
        %v3025 = vpop.xlane.xlu0 %3024
        %v3026 = vadd.f32 %v3007, %v3008
        %3027 = vadd.xlane.f32.xlu0 %v3026
        %v3028 = vpop.xlane.xlu0 %3027
        %v3029 = vadd.f32 %v3009, %v3010
        %3030 = vadd.xlane.f32.xlu0 %v3029
        %v3031 = vpop.xlane.xlu0 %3030
        %v3032 = vadd.f32 %v3011, %v3012
        %3033 = vadd.xlane.f32.xlu0 %v3032
        %v3034 = vpop.xlane.xlu0 %3033
        %v3035 = vadd.f32 %v3013, %v3014
        %3036 = vadd.xlane.f32.xlu0 %v3035
        %v3037 = vpop.xlane.xlu0 %3036
        %v3038 = vadd.f32 %v3015, %v3016
        %3039 = vadd.xlane.f32.xlu0 %v3038
        %v3040 = vpop.xlane.xlu0 %3039
        %v3041 = vmul.f32 %v3019, 0.00390625
        %v3042 = vmul.f32 %v3022, 0.00390625
        %v3043 = vmul.f32 %v3025, 0.00390625
        %v3044 = vmul.f32 %v3028, 0.00390625
        %v3045 = vmul.f32 %v3031, 0.00390625
        %v3046 = vmul.f32 %v3034, 0.00390625
        %v3047 = vmul.f32 %v3037, 0.00390625
        %v3048 = vmul.f32 %v3040, 0.00390625
        %v3049 = vmax.f32 %v3001, %v3002
        %3050 = vmax.xlane.f32.xlu0 %v3049
        %v3051 = vpop.xlane.xlu0 %3050
        %v3052 = vmax.f32 %v3003, %v3004
        %3053 = vmax.xlane.f32.xlu0 %v3052
        %v3054 = vpop.xlane.xlu0 %3053
        %v3055 = vmax.f32 %v3005, %v3006
        %3056 = vmax.xlane.f32.xlu0 %v3055
        %v3057 = vpop.xlane.xlu0 %3056
        %v3058 = vmax.f32 %v3007, %v3008
        %3059 = vmax.xlane.f32.xlu0 %v3058
        %v3060 = vpop.xlane.xlu0 %3059
        %v3061 = vmax.f32 %v3009, %v3010
        %3062 = vmax.xlane.f32.xlu0 %v3061
        %v3063 = vpop.xlane.xlu0 %3062
        %v3064 = vmax.f32 %v3011, %v3012
        %3065 = vmax.xlane.f32.xlu0 %v3064
        %v3066 = vpop.xlane.xlu0 %3065
        %v3067 = vmax.f32 %v3013, %v3014
        %3068 = vmax.xlane.f32.xlu0 %v3067
        %v3069 = vpop.xlane.xlu0 %3068
        %v3070 = vmax.f32 %v3015, %v3016
        %3071 = vmax.xlane.f32.xlu0 %v3070
        %v3072 = vpop.xlane.xlu0 %3071
        %v3073 = vmul.f32 %v1927, %v2852
        %v3074 = vmul.f32 %v1928, %v2856
        %v3075 = vmul.f32 %v1929, %v2860
        %v3076 = vmul.f32 %v1930, %v2864
        %v3077 = vmul.f32 %v1931, %v2868
        %v3078 = vmul.f32 %v1932, %v2872
        %v3079 = vmul.f32 %v1933, %v2876
        %v3080 = vmul.f32 %v1934, %v2880
        %v3081 = vmul.f32 %v1935, %v2884
        %v3082 = vmul.f32 %v1936, %v2888
        %v3083 = vmul.f32 %v1937, %v2892
        %v3084 = vmul.f32 %v1938, %v2896
        %v3085 = vmul.f32 %v1939, %v2900
        %v3086 = vmul.f32 %v1940, %v2904
        %v3087 = vmul.f32 %v1941, %v2908
        %v3088 = vmul.f32 %v1942, %v2912
        %v3089 = vadd.f32 %v3073, %v3074
        %3090 = vadd.xlane.f32.xlu0 %v3089
        %v3091 = vpop.xlane.xlu0 %3090
        %v3092 = vadd.f32 %v3075, %v3076
        %3093 = vadd.xlane.f32.xlu0 %v3092
        %v3094 = vpop.xlane.xlu0 %3093
        %v3095 = vadd.f32 %v3077, %v3078
        %3096 = vadd.xlane.f32.xlu0 %v3095
        %v3097 = vpop.xlane.xlu0 %3096
        %v3098 = vadd.f32 %v3079, %v3080
        %3099 = vadd.xlane.f32.xlu0 %v3098
        %v3100 = vpop.xlane.xlu0 %3099
        %v3101 = vadd.f32 %v3081, %v3082
        %3102 = vadd.xlane.f32.xlu0 %v3101
        %v3103 = vpop.xlane.xlu0 %3102
        %v3104 = vadd.f32 %v3083, %v3084
        %3105 = vadd.xlane.f32.xlu0 %v3104
        %v3106 = vpop.xlane.xlu0 %3105
        %v3107 = vadd.f32 %v3085, %v3086
        %3108 = vadd.xlane.f32.xlu0 %v3107
        %v3109 = vpop.xlane.xlu0 %3108
        %v3110 = vadd.f32 %v3087, %v3088
        %3111 = vadd.xlane.f32.xlu0 %v3110
        %v3112 = vpop.xlane.xlu0 %3111
        %v3113 = vmul.f32 %v3091, 0.00390625
        %v3114 = vmul.f32 %v3094, 0.00390625
        %v3115 = vmul.f32 %v3097, 0.00390625
        %v3116 = vmul.f32 %v3100, 0.00390625
        %v3117 = vmul.f32 %v3103, 0.00390625
        %v3118 = vmul.f32 %v3106, 0.00390625
        %v3119 = vmul.f32 %v3109, 0.00390625
        %v3120 = vmul.f32 %v3112, 0.00390625
        %v3121 = vmax.f32 %v3073, %v3074
        %3122 = vmax.xlane.f32.xlu0 %v3121
        %v3123 = vpop.xlane.xlu0 %3122
        %v3124 = vmax.f32 %v3075, %v3076
        %3125 = vmax.xlane.f32.xlu0 %v3124
        %v3126 = vpop.xlane.xlu0 %3125
        %v3127 = vmax.f32 %v3077, %v3078
        %3128 = vmax.xlane.f32.xlu0 %v3127
        %v3129 = vpop.xlane.xlu0 %3128
        %v3130 = vmax.f32 %v3079, %v3080
        %3131 = vmax.xlane.f32.xlu0 %v3130
        %v3132 = vpop.xlane.xlu0 %3131
        %v3133 = vmax.f32 %v3081, %v3082
        %3134 = vmax.xlane.f32.xlu0 %v3133
        %v3135 = vpop.xlane.xlu0 %3134
        %v3136 = vmax.f32 %v3083, %v3084
        %3137 = vmax.xlane.f32.xlu0 %v3136
        %v3138 = vpop.xlane.xlu0 %3137
        %v3139 = vmax.f32 %v3085, %v3086
        %3140 = vmax.xlane.f32.xlu0 %v3139
        %v3141 = vpop.xlane.xlu0 %3140
        %v3142 = vmax.f32 %v3087, %v3088
        %3143 = vmax.xlane.f32.xlu0 %v3142
        %v3144 = vpop.xlane.xlu0 %3143
        %v3145 = vmul.f32 %v2199, %v2852
        %v3146 = vmul.f32 %v2200, %v2856
        %v3147 = vmul.f32 %v2201, %v2860
        %v3148 = vmul.f32 %v2202, %v2864
        %v3149 = vmul.f32 %v2203, %v2868
        %v3150 = vmul.f32 %v2204, %v2872
        %v3151 = vmul.f32 %v2205, %v2876
        %v3152 = vmul.f32 %v2206, %v2880
        %v3153 = vmul.f32 %v2207, %v2884
        %v3154 = vmul.f32 %v2208, %v2888
        %v3155 = vmul.f32 %v2209, %v2892
        %v3156 = vmul.f32 %v2210, %v2896
        %v3157 = vmul.f32 %v2211, %v2900
        %v3158 = vmul.f32 %v2212, %v2904
        %v3159 = vmul.f32 %v2213, %v2908
        %v3160 = vmul.f32 %v2214, %v2912
        %v3161 = vadd.f32 %v3145, %v3146
        %3162 = vadd.xlane.f32.xlu0 %v3161
        %v3163 = vpop.xlane.xlu0 %3162
        %v3164 = vadd.f32 %v3147, %v3148
        %3165 = vadd.xlane.f32.xlu0 %v3164
        %v3166 = vpop.xlane.xlu0 %3165
        %v3167 = vadd.f32 %v3149, %v3150
        %3168 = vadd.xlane.f32.xlu0 %v3167
        %v3169 = vpop.xlane.xlu0 %3168
        %v3170 = vadd.f32 %v3151, %v3152
        %3171 = vadd.xlane.f32.xlu0 %v3170
        %v3172 = vpop.xlane.xlu0 %3171
        %v3173 = vadd.f32 %v3153, %v3154
        %3174 = vadd.xlane.f32.xlu0 %v3173
        %v3175 = vpop.xlane.xlu0 %3174
        %v3176 = vadd.f32 %v3155, %v3156
        %3177 = vadd.xlane.f32.xlu0 %v3176
        %v3178 = vpop.xlane.xlu0 %3177
        %v3179 = vadd.f32 %v3157, %v3158
        %3180 = vadd.xlane.f32.xlu0 %v3179
        %v3181 = vpop.xlane.xlu0 %3180
        %v3182 = vadd.f32 %v3159, %v3160
        %3183 = vadd.xlane.f32.xlu0 %v3182
        %v3184 = vpop.xlane.xlu0 %3183
        %v3185 = vmul.f32 %v3163, 0.00390625
        %v3186 = vmul.f32 %v3166, 0.00390625
        %v3187 = vmul.f32 %v3169, 0.00390625
        %v3188 = vmul.f32 %v3172, 0.00390625
        %v3189 = vmul.f32 %v3175, 0.00390625
        %v3190 = vmul.f32 %v3178, 0.00390625
        %v3191 = vmul.f32 %v3181, 0.00390625
        %v3192 = vmul.f32 %v3184, 0.00390625
        %v3193 = vmax.f32 %v3145, %v3146
        %3194 = vmax.xlane.f32.xlu0 %v3193
        %v3195 = vpop.xlane.xlu0 %3194
        %v3196 = vmax.f32 %v3147, %v3148
        %3197 = vmax.xlane.f32.xlu0 %v3196
        %v3198 = vpop.xlane.xlu0 %3197
        %v3199 = vmax.f32 %v3149, %v3150
        %3200 = vmax.xlane.f32.xlu0 %v3199
        %v3201 = vpop.xlane.xlu0 %3200
        %v3202 = vmax.f32 %v3151, %v3152
        %3203 = vmax.xlane.f32.xlu0 %v3202
        %v3204 = vpop.xlane.xlu0 %3203
        %v3205 = vmax.f32 %v3153, %v3154
        %3206 = vmax.xlane.f32.xlu0 %v3205
        %v3207 = vpop.xlane.xlu0 %3206
        %v3208 = vmax.f32 %v3155, %v3156
        %3209 = vmax.xlane.f32.xlu0 %v3208
        %v3210 = vpop.xlane.xlu0 %3209
        %v3211 = vmax.f32 %v3157, %v3158
        %3212 = vmax.xlane.f32.xlu0 %v3211
        %v3213 = vpop.xlane.xlu0 %3212
        %v3214 = vmax.f32 %v3159, %v3160
        %3215 = vmax.xlane.f32.xlu0 %v3214
        %v3216 = vpop.xlane.xlu0 %3215
        %v3225 = vlaneseq
        %v3226 = vshrl.u32 %v3225, 7
        %v3227 = vsub.s32 %v757, %v3226
        %v3228 = vrot.slane %v2969, %v3227
        %v3229 = vlaneseq
        %v3230 = vshrl.u32 %v3229, 7
        %v3231 = vsub.s32 %v757, %v3230
        %v3232 = vrot.slane %v2970, %v3231
        %v3233 = vlaneseq
        %v3234 = vshrl.u32 %v3233, 7
        %v3235 = vsub.s32 %v757, %v3234
        %v3236 = vrot.slane %v2971, %v3235
        %v3237 = vlaneseq
        %v3238 = vshrl.u32 %v3237, 7
        %v3239 = vsub.s32 %v757, %v3238
        %v3240 = vrot.slane %v2972, %v3239
        %v3241 = vlaneseq
        %v3242 = vshrl.u32 %v3241, 7
        %v3243 = vsub.s32 %v757, %v3242
        %v3244 = vrot.slane %v2973, %v3243
        %v3245 = vlaneseq
        %v3246 = vshrl.u32 %v3245, 7
        %v3247 = vsub.s32 %v757, %v3246
        %v3248 = vrot.slane %v2974, %v3247
        %v3249 = vlaneseq
        %v3250 = vshrl.u32 %v3249, 7
        %v3251 = vsub.s32 %v757, %v3250
        %v3252 = vrot.slane %v2975, %v3251
        %v3253 = vlaneseq
        %v3254 = vshrl.u32 %v3253, 7
        %v3255 = vsub.s32 %v757, %v3254
        %v3256 = vrot.slane %v2976, %v3255
        %v3257 = vsel %vm916, %v3232, %v3228
        %v3258 = vsel %vm918, %v3236, %v3257
        %v3259 = vsel %vm920, %v3240, %v3258
        %v3260 = vsel %vm922, %v3244, %v3259
        %v3261 = vsel %vm924, %v3248, %v3260
        %v3262 = vsel %vm926, %v3252, %v3261
        %v3263 = vsel %vm928, %v3256, %v3262
        %v3273 = vlaneseq
        %v3274 = vshrl.u32 %v3273, 7
        %v3275 = vsub.s32 %v762, %v3274
        %v3276 = vrot.slane %v3041, %v3275
        %v3277 = vlaneseq
        %v3278 = vshrl.u32 %v3277, 7
        %v3279 = vsub.s32 %v762, %v3278
        %v3280 = vrot.slane %v3042, %v3279
        %v3281 = vlaneseq
        %v3282 = vshrl.u32 %v3281, 7
        %v3283 = vsub.s32 %v762, %v3282
        %v3284 = vrot.slane %v3043, %v3283
        %v3285 = vlaneseq
        %v3286 = vshrl.u32 %v3285, 7
        %v3287 = vsub.s32 %v762, %v3286
        %v3288 = vrot.slane %v3044, %v3287
        %v3289 = vlaneseq
        %v3290 = vshrl.u32 %v3289, 7
        %v3291 = vsub.s32 %v762, %v3290
        %v3292 = vrot.slane %v3045, %v3291
        %v3293 = vlaneseq
        %v3294 = vshrl.u32 %v3293, 7
        %v3295 = vsub.s32 %v762, %v3294
        %v3296 = vrot.slane %v3046, %v3295
        %v3297 = vlaneseq
        %v3298 = vshrl.u32 %v3297, 7
        %v3299 = vsub.s32 %v762, %v3298
        %v3300 = vrot.slane %v3047, %v3299
        %v3301 = vlaneseq
        %v3302 = vshrl.u32 %v3301, 7
        %v3303 = vsub.s32 %v762, %v3302
        %v3304 = vrot.slane %v3048, %v3303
        %v3305 = vsel %vm916, %v3280, %v3276
        %v3306 = vsel %vm918, %v3284, %v3305
        %v3307 = vsel %vm920, %v3288, %v3306
        %v3308 = vsel %vm922, %v3292, %v3307
        %v3309 = vsel %vm924, %v3296, %v3308
        %v3310 = vsel %vm926, %v3300, %v3309
        %v3311 = vsel %vm928, %v3304, %v3310
        %v3321 = vlaneseq
        %v3322 = vshrl.u32 %v3321, 7
        %v3323 = vsub.s32 %v769, %v3322
        %v3324 = vrot.slane %v3113, %v3323
        %v3325 = vlaneseq
        %v3326 = vshrl.u32 %v3325, 7
        %v3327 = vsub.s32 %v769, %v3326
        %v3328 = vrot.slane %v3114, %v3327
        %v3329 = vlaneseq
        %v3330 = vshrl.u32 %v3329, 7
        %v3331 = vsub.s32 %v769, %v3330
        %v3332 = vrot.slane %v3115, %v3331
        %v3333 = vlaneseq
        %v3334 = vshrl.u32 %v3333, 7
        %v3335 = vsub.s32 %v769, %v3334
        %v3336 = vrot.slane %v3116, %v3335
        %v3337 = vlaneseq
        %v3338 = vshrl.u32 %v3337, 7
        %v3339 = vsub.s32 %v769, %v3338
        %v3340 = vrot.slane %v3117, %v3339
        %v3341 = vlaneseq
        %v3342 = vshrl.u32 %v3341, 7
        %v3343 = vsub.s32 %v769, %v3342
        %v3344 = vrot.slane %v3118, %v3343
        %v3345 = vlaneseq
        %v3346 = vshrl.u32 %v3345, 7
        %v3347 = vsub.s32 %v769, %v3346
        %v3348 = vrot.slane %v3119, %v3347
        %v3349 = vlaneseq
        %v3350 = vshrl.u32 %v3349, 7
        %v3351 = vsub.s32 %v769, %v3350
        %v3352 = vrot.slane %v3120, %v3351
        %v3353 = vsel %vm916, %v3328, %v3324
        %v3354 = vsel %vm918, %v3332, %v3353
        %v3355 = vsel %vm920, %v3336, %v3354
        %v3356 = vsel %vm922, %v3340, %v3355
        %v3357 = vsel %vm924, %v3344, %v3356
        %v3358 = vsel %vm926, %v3348, %v3357
        %v3359 = vsel %vm928, %v3352, %v3358
        %v3369 = vlaneseq
        %v3370 = vshrl.u32 %v3369, 7
        %v3371 = vsub.s32 %v776, %v3370
        %v3372 = vrot.slane %v3185, %v3371
        %v3373 = vlaneseq
        %v3374 = vshrl.u32 %v3373, 7
        %v3375 = vsub.s32 %v776, %v3374
        %v3376 = vrot.slane %v3186, %v3375
        %v3377 = vlaneseq
        %v3378 = vshrl.u32 %v3377, 7
        %v3379 = vsub.s32 %v776, %v3378
        %v3380 = vrot.slane %v3187, %v3379
        %v3381 = vlaneseq
        %v3382 = vshrl.u32 %v3381, 7
        %v3383 = vsub.s32 %v776, %v3382
        %v3384 = vrot.slane %v3188, %v3383
        %v3385 = vlaneseq
        %v3386 = vshrl.u32 %v3385, 7
        %v3387 = vsub.s32 %v776, %v3386
        %v3388 = vrot.slane %v3189, %v3387
        %v3389 = vlaneseq
        %v3390 = vshrl.u32 %v3389, 7
        %v3391 = vsub.s32 %v776, %v3390
        %v3392 = vrot.slane %v3190, %v3391
        %v3393 = vlaneseq
        %v3394 = vshrl.u32 %v3393, 7
        %v3395 = vsub.s32 %v776, %v3394
        %v3396 = vrot.slane %v3191, %v3395
        %v3397 = vlaneseq
        %v3398 = vshrl.u32 %v3397, 7
        %v3399 = vsub.s32 %v776, %v3398
        %v3400 = vrot.slane %v3192, %v3399
        %v3401 = vsel %vm916, %v3376, %v3372
        %v3402 = vsel %vm918, %v3380, %v3401
        %v3403 = vsel %vm920, %v3384, %v3402
        %v3404 = vsel %vm922, %v3388, %v3403
        %v3405 = vsel %vm924, %v3392, %v3404
        %v3406 = vsel %vm926, %v3396, %v3405
        %v3407 = vsel %vm928, %v3400, %v3406
        %v3409 = vsel %vm1208, %v3263, %v3311
        %vm3410 = vcmask 130048
        %v3411 = vsel %vm3410, %v3409, %v3359
        %vm3412 = vcmask 195584
        %v3413 = vsel %vm3412, %v3411, %v3407
        %v3422 = vlaneseq
        %v3423 = vshrl.u32 %v3422, 7
        %v3424 = vsub.s32 %v757, %v3423
        %v3425 = vrot.slane %v2979, %v3424
        %v3426 = vlaneseq
        %v3427 = vshrl.u32 %v3426, 7
        %v3428 = vsub.s32 %v757, %v3427
        %v3429 = vrot.slane %v2982, %v3428
        %v3430 = vlaneseq
        %v3431 = vshrl.u32 %v3430, 7
        %v3432 = vsub.s32 %v757, %v3431
        %v3433 = vrot.slane %v2985, %v3432
        %v3434 = vlaneseq
        %v3435 = vshrl.u32 %v3434, 7
        %v3436 = vsub.s32 %v757, %v3435
        %v3437 = vrot.slane %v2988, %v3436
        %v3438 = vlaneseq
        %v3439 = vshrl.u32 %v3438, 7
        %v3440 = vsub.s32 %v757, %v3439
        %v3441 = vrot.slane %v2991, %v3440
        %v3442 = vlaneseq
        %v3443 = vshrl.u32 %v3442, 7
        %v3444 = vsub.s32 %v757, %v3443
        %v3445 = vrot.slane %v2994, %v3444
        %v3446 = vlaneseq
        %v3447 = vshrl.u32 %v3446, 7
        %v3448 = vsub.s32 %v757, %v3447
        %v3449 = vrot.slane %v2997, %v3448
        %v3450 = vlaneseq
        %v3451 = vshrl.u32 %v3450, 7
        %v3452 = vsub.s32 %v757, %v3451
        %v3453 = vrot.slane %v3000, %v3452
        %v3454 = vsel %vm916, %v3429, %v3425
        %v3455 = vsel %vm918, %v3433, %v3454
        %v3456 = vsel %vm920, %v3437, %v3455
        %v3457 = vsel %vm922, %v3441, %v3456
        %v3458 = vsel %vm924, %v3445, %v3457
        %v3459 = vsel %vm926, %v3449, %v3458
        %v3460 = vsel %vm928, %v3453, %v3459
        %v3470 = vlaneseq
        %v3471 = vshrl.u32 %v3470, 7
        %v3472 = vsub.s32 %v762, %v3471
        %v3473 = vrot.slane %v3051, %v3472
        %v3474 = vlaneseq
        %v3475 = vshrl.u32 %v3474, 7
        %v3476 = vsub.s32 %v762, %v3475
        %v3477 = vrot.slane %v3054, %v3476
        %v3478 = vlaneseq
        %v3479 = vshrl.u32 %v3478, 7
        %v3480 = vsub.s32 %v762, %v3479
        %v3481 = vrot.slane %v3057, %v3480
        %v3482 = vlaneseq
        %v3483 = vshrl.u32 %v3482, 7
        %v3484 = vsub.s32 %v762, %v3483
        %v3485 = vrot.slane %v3060, %v3484
        %v3486 = vlaneseq
        %v3487 = vshrl.u32 %v3486, 7
        %v3488 = vsub.s32 %v762, %v3487
        %v3489 = vrot.slane %v3063, %v3488
        %v3490 = vlaneseq
        %v3491 = vshrl.u32 %v3490, 7
        %v3492 = vsub.s32 %v762, %v3491
        %v3493 = vrot.slane %v3066, %v3492
        %v3494 = vlaneseq
        %v3495 = vshrl.u32 %v3494, 7
        %v3496 = vsub.s32 %v762, %v3495
        %v3497 = vrot.slane %v3069, %v3496
        %v3498 = vlaneseq
        %v3499 = vshrl.u32 %v3498, 7
        %v3500 = vsub.s32 %v762, %v3499
        %v3501 = vrot.slane %v3072, %v3500
        %v3502 = vsel %vm916, %v3477, %v3473
        %v3503 = vsel %vm918, %v3481, %v3502
        %v3504 = vsel %vm920, %v3485, %v3503
        %v3505 = vsel %vm922, %v3489, %v3504
        %v3506 = vsel %vm924, %v3493, %v3505
        %v3507 = vsel %vm926, %v3497, %v3506
        %v3508 = vsel %vm928, %v3501, %v3507
        %v3518 = vlaneseq
        %v3519 = vshrl.u32 %v3518, 7
        %v3520 = vsub.s32 %v769, %v3519
        %v3521 = vrot.slane %v3123, %v3520
        %v3522 = vlaneseq
        %v3523 = vshrl.u32 %v3522, 7
        %v3524 = vsub.s32 %v769, %v3523
        %v3525 = vrot.slane %v3126, %v3524
        %v3526 = vlaneseq
        %v3527 = vshrl.u32 %v3526, 7
        %v3528 = vsub.s32 %v769, %v3527
        %v3529 = vrot.slane %v3129, %v3528
        %v3530 = vlaneseq
        %v3531 = vshrl.u32 %v3530, 7
        %v3532 = vsub.s32 %v769, %v3531
        %v3533 = vrot.slane %v3132, %v3532
        %v3534 = vlaneseq
        %v3535 = vshrl.u32 %v3534, 7
        %v3536 = vsub.s32 %v769, %v3535
        %v3537 = vrot.slane %v3135, %v3536
        %v3538 = vlaneseq
        %v3539 = vshrl.u32 %v3538, 7
        %v3540 = vsub.s32 %v769, %v3539
        %v3541 = vrot.slane %v3138, %v3540
        %v3542 = vlaneseq
        %v3543 = vshrl.u32 %v3542, 7
        %v3544 = vsub.s32 %v769, %v3543
        %v3545 = vrot.slane %v3141, %v3544
        %v3546 = vlaneseq
        %v3547 = vshrl.u32 %v3546, 7
        %v3548 = vsub.s32 %v769, %v3547
        %v3549 = vrot.slane %v3144, %v3548
        %v3550 = vsel %vm916, %v3525, %v3521
        %v3551 = vsel %vm918, %v3529, %v3550
        %v3552 = vsel %vm920, %v3533, %v3551
        %v3553 = vsel %vm922, %v3537, %v3552
        %v3554 = vsel %vm924, %v3541, %v3553
        %v3555 = vsel %vm926, %v3545, %v3554
        %v3556 = vsel %vm928, %v3549, %v3555
        %v3566 = vlaneseq
        %v3567 = vshrl.u32 %v3566, 7
        %v3568 = vsub.s32 %v776, %v3567
        %v3569 = vrot.slane %v3195, %v3568
        %v3570 = vlaneseq
        %v3571 = vshrl.u32 %v3570, 7
        %v3572 = vsub.s32 %v776, %v3571
        %v3573 = vrot.slane %v3198, %v3572
        %v3574 = vlaneseq
        %v3575 = vshrl.u32 %v3574, 7
        %v3576 = vsub.s32 %v776, %v3575
        %v3577 = vrot.slane %v3201, %v3576
        %v3578 = vlaneseq
        %v3579 = vshrl.u32 %v3578, 7
        %v3580 = vsub.s32 %v776, %v3579
        %v3581 = vrot.slane %v3204, %v3580
        %v3582 = vlaneseq
        %v3583 = vshrl.u32 %v3582, 7
        %v3584 = vsub.s32 %v776, %v3583
        %v3585 = vrot.slane %v3207, %v3584
        %v3586 = vlaneseq
        %v3587 = vshrl.u32 %v3586, 7
        %v3588 = vsub.s32 %v776, %v3587
        %v3589 = vrot.slane %v3210, %v3588
        %v3590 = vlaneseq
        %v3591 = vshrl.u32 %v3590, 7
        %v3592 = vsub.s32 %v776, %v3591
        %v3593 = vrot.slane %v3213, %v3592
        %v3594 = vlaneseq
        %v3595 = vshrl.u32 %v3594, 7
        %v3596 = vsub.s32 %v776, %v3595
        %v3597 = vrot.slane %v3216, %v3596
        %v3598 = vsel %vm916, %v3573, %v3569
        %v3599 = vsel %vm918, %v3577, %v3598
        %v3600 = vsel %vm920, %v3581, %v3599
        %v3601 = vsel %vm922, %v3585, %v3600
        %v3602 = vsel %vm924, %v3589, %v3601
        %v3603 = vsel %vm926, %v3593, %v3602
        %v3604 = vsel %vm928, %v3597, %v3603
        %v3606 = vsel %vm1208, %v3460, %v3508
        %v3607 = vsel %vm3410, %v3606, %v3556
        %v3608 = vsel %vm3412, %v3607, %v3604
        %v3609 = vld [vmem:[%s5] sm:$0xff]
        %v3610 = vld [vmem:[%s5 + $0x8] sm:$0xff]
        %v3611 = vld [vmem:[%s5 + $0x10] sm:$0xff]
        %v3612 = vld [vmem:[%s5 + $0x18] sm:$0xff]
        %v3613 = vld [vmem:[#allocation10] sm:$0xff]
        %v3614 = vld [vmem:[#allocation10 + $0x8] sm:$0xff]
        %v3615 = vld [vmem:[#allocation10 + $0x10] sm:$0xff]
        %v3616 = vld [vmem:[#allocation10 + $0x18] sm:$0xff]
        %v3618 = vsel %vm1125, %v3608, 0
        %3620 = vmatprep.subr.mxu0 0.0
        %3621 = vmatpush1.msra.mxu0 %v3613
        %3622 = vmatprep.subr.mxu0 0.0
        %3623 = vmatpush1.msra.mxu0 %v3614
        %3624 = vmatprep.subr.mxu0 0.0
        %3625 = vmatpush1.msra.mxu0 %v3615
        %3626 = vmatprep.subr.mxu0 0.0
        %3627 = vmatpush1.msra.mxu0 %v3616
        %3628 = vmatprep.subr.mxu0 0.0
        %3629 = vmatpush1.msra.mxu0 0.0
        %3630 = vmatprep.subr.mxu0 0.0
        %3631 = vmatpush1.msra.mxu0 0.0
        %3632 = vmatprep.subr.mxu0 0.0
        %3633 = vmatpush1.msra.mxu0 0.0
        %3634 = vmatprep.subr.mxu0 0.0
        %3635 = vmatpush1.msra.mxu0 0.0
        %3636 = vmatprep.subr.mxu0 0.0
        %3637 = vmatpush1.msra.mxu0 0.0
        %3638 = vmatprep.subr.mxu0 0.0
        %3639 = vmatpush1.msra.mxu0 0.0
        %3640 = vmatprep.subr.mxu0 0.0
        %3641 = vmatpush1.msra.mxu0 0.0
        %3642 = vmatprep.subr.mxu0 0.0
        %3643 = vmatpush1.msra.mxu0 0.0
        %3644 = vmatprep.subr.mxu0 0.0
        %3645 = vmatpush1.msra.mxu0 0.0
        %3646 = vmatprep.subr.mxu0 0.0
        %3647 = vmatpush1.msra.mxu0 0.0
        %3648 = vmatprep.subr.mxu0 0.0
        %3649 = vmatpush1.msra.mxu0 0.0
        %3650 = vmatprep.subr.mxu0 0.0
        %3651 = vmatpush1.msra.mxu0 0.0
        %3652 = vmatprep.subr.mxu0 0.0
        %3653 = vmatpush1.msra.mxu0 0.0
        %3654 = vmatprep.subr.mxu0 0.0
        %3655 = vmatpush1.msra.mxu0 0.0
        %3656 = vmatprep.subr.mxu0 0.0
        %3657 = vmatpush1.msra.mxu0 0.0
        %3658 = vmatprep.subr.mxu0 0.0
        %3659 = vmatpush1.msra.mxu0 0.0
        %3660 = vmatprep.subr.mxu0 0.0
        %3661 = vmatpush1.msra.mxu0 0.0
        %3662 = vmatprep.subr.mxu0 0.0
        %3663 = vmatpush1.msra.mxu0 0.0
        %3664 = vmatprep.subr.mxu0 0.0
        %3665 = vmatpush1.msra.mxu0 0.0
        %3666 = vmatprep.subr.mxu0 0.0
        %3667 = vmatpush1.msra.mxu0 0.0
        %3668 = vmatprep.subr.mxu0 0.0
        %3669 = vmatpush1.msra.mxu0 0.0
        %3670 = vmatprep.subr.mxu0 0.0
        %3671 = vmatpush1.msra.mxu0 0.0
        %3672 = vmatprep.subr.mxu0 0.0
        %3673 = vmatpush1.msra.mxu0 0.0
        %3674 = vmatprep.subr.mxu0 0.0
        %3675 = vmatpush1.msra.mxu0 0.0
        %3676 = vmatprep.subr.mxu0 0.0
        %3677 = vmatpush1.msra.mxu0 0.0
        %3678 = vmatprep.subr.mxu0 0.0
        %3679 = vmatpush1.msra.mxu0 0.0
        %3680 = vmatprep.subr.mxu0 0.0
        %3681 = vmatpush1.msra.mxu0 0.0
        %3682 = vmatprep.subr.mxu0 0.0
        %3683 = vmatpush1.msra.mxu0 0.0
        %3684 = vmatprep.mubr.f32.mxu0 0.0
        %3685 = vmatmul.mubr.f32.gmra.mrb[0].mxu0 %v3618
        %v3686 = vpop.f32.mrb[0].mxu0
        %v3687 = vadd.f32 0.0, %v3686
        %v3688 = vpop.f32.mrb[0].mxu0
        %3689 = vdwg.mxu0
        %v3691 = vsel %vm1125, %v3413, 0
        %3693 = vmatprep.subr.mxu0 0.0
        %3694 = vmatpush1.msra.mxu0 %v3609
        %3695 = vmatprep.subr.mxu0 0.0
        %3696 = vmatpush1.msra.mxu0 %v3610
        %3697 = vmatprep.subr.mxu0 0.0
        %3698 = vmatpush1.msra.mxu0 %v3611
        %3699 = vmatprep.subr.mxu0 0.0
        %3700 = vmatpush1.msra.mxu0 %v3612
        %3701 = vmatprep.subr.mxu0 0.0
        %3702 = vmatpush1.msra.mxu0 0.0
        %3703 = vmatprep.subr.mxu0 0.0
        %3704 = vmatpush1.msra.mxu0 0.0
        %3705 = vmatprep.subr.mxu0 0.0
        %3706 = vmatpush1.msra.mxu0 0.0
        %3707 = vmatprep.subr.mxu0 0.0
        %3708 = vmatpush1.msra.mxu0 0.0
        %3709 = vmatprep.subr.mxu0 0.0
        %3710 = vmatpush1.msra.mxu0 0.0
        %3711 = vmatprep.subr.mxu0 0.0
        %3712 = vmatpush1.msra.mxu0 0.0
        %3713 = vmatprep.subr.mxu0 0.0
        %3714 = vmatpush1.msra.mxu0 0.0
        %3715 = vmatprep.subr.mxu0 0.0
        %3716 = vmatpush1.msra.mxu0 0.0
        %3717 = vmatprep.subr.mxu0 0.0
        %3718 = vmatpush1.msra.mxu0 0.0
        %3719 = vmatprep.subr.mxu0 0.0
        %3720 = vmatpush1.msra.mxu0 0.0
        %3721 = vmatprep.subr.mxu0 0.0
        %3722 = vmatpush1.msra.mxu0 0.0
        %3723 = vmatprep.subr.mxu0 0.0
        %3724 = vmatpush1.msra.mxu0 0.0
        %3725 = vmatprep.subr.mxu0 0.0
        %3726 = vmatpush1.msra.mxu0 0.0
        %3727 = vmatprep.subr.mxu0 0.0
        %3728 = vmatpush1.msra.mxu0 0.0
        %3729 = vmatprep.subr.mxu0 0.0
        %3730 = vmatpush1.msra.mxu0 0.0
        %3731 = vmatprep.subr.mxu0 0.0
        %3732 = vmatpush1.msra.mxu0 0.0
        %3733 = vmatprep.subr.mxu0 0.0
        %3734 = vmatpush1.msra.mxu0 0.0
        %3735 = vmatprep.subr.mxu0 0.0
        %3736 = vmatpush1.msra.mxu0 0.0
        %3737 = vmatprep.subr.mxu0 0.0
        %3738 = vmatpush1.msra.mxu0 0.0
        %3739 = vmatprep.subr.mxu0 0.0
        %3740 = vmatpush1.msra.mxu0 0.0
        %3741 = vmatprep.subr.mxu0 0.0
        %3742 = vmatpush1.msra.mxu0 0.0
        %3743 = vmatprep.subr.mxu0 0.0
        %3744 = vmatpush1.msra.mxu0 0.0
        %3745 = vmatprep.subr.mxu0 0.0
        %3746 = vmatpush1.msra.mxu0 0.0
        %3747 = vmatprep.subr.mxu0 0.0
        %3748 = vmatpush1.msra.mxu0 0.0
        %3749 = vmatprep.subr.mxu0 0.0
        %3750 = vmatpush1.msra.mxu0 0.0
        %3751 = vmatprep.subr.mxu0 0.0
        %3752 = vmatpush1.msra.mxu0 0.0
        %3753 = vmatprep.subr.mxu0 0.0
        %3754 = vmatpush1.msra.mxu0 0.0
        %3755 = vmatprep.subr.mxu0 0.0
        %3756 = vmatpush1.msra.mxu0 0.0
        %3757 = vmatprep.mubr.f32.mxu0 0.0
        %3758 = vmatmul.mubr.f32.gmra.mrb[0].mxu0 %v3691
        %v3759 = vpop.f32.mrb[0].mxu0
        %v3760 = vadd.f32 %v3687, %v3759
        %v3761 = vpop.f32.mrb[0].mxu0
        %3762 = vdwg.mxu0
        %v3763 = vld [vmem:[%s7] sm:$0x1]
        %v3765 = vlaneseq
        %v3766 = vshrl.u32 %v3765, 7
        %v3767 = vsub.s32 0, %v3766
        %v3768 = vrot.slane %v3763, %v3767
        %v3770 = vadd.f32 %v3760, %v3768
        %v3771 = vmax.f32 %v3770, 0.0
        %v3772 = vld [vmem:[%s8] sm:$0xff]
        %v3773 = vld [vmem:[%s8 + $0x8] sm:$0xff]
        %v3774 = vld [vmem:[%s8 + $0x10] sm:$0xff]
        %v3775 = vld [vmem:[%s8 + $0x18] sm:$0xff]
        %v3776 = vld [vmem:[%s9] sm:$0x1]
        %v3778 = vlaneseq
        %v3779 = vshrl.u32 %v3778, 7
        %v3780 = vsub.s32 0, %v3779
        %v3781 = vrot.slane %v3776, %v3780
        %v3784 = vsel %vm1125, %v3771, 0
        %3786 = vmatprep.subr.mxu0 0.0
        %3787 = vmatpush1.msra.mxu0 %v3772
        %3788 = vmatprep.subr.mxu0 0.0
        %3789 = vmatpush1.msra.mxu0 %v3773
        %3790 = vmatprep.subr.mxu0 0.0
        %3791 = vmatpush1.msra.mxu0 %v3774
        %3792 = vmatprep.subr.mxu0 0.0
        %3793 = vmatpush1.msra.mxu0 %v3775
        %3794 = vmatprep.subr.mxu0 0.0
        %3795 = vmatpush1.msra.mxu0 0.0
        %3796 = vmatprep.subr.mxu0 0.0
        %3797 = vmatpush1.msra.mxu0 0.0
        %3798 = vmatprep.subr.mxu0 0.0
        %3799 = vmatpush1.msra.mxu0 0.0
        %3800 = vmatprep.subr.mxu0 0.0
        %3801 = vmatpush1.msra.mxu0 0.0
        %3802 = vmatprep.subr.mxu0 0.0
        %3803 = vmatpush1.msra.mxu0 0.0
        %3804 = vmatprep.subr.mxu0 0.0
        %3805 = vmatpush1.msra.mxu0 0.0
        %3806 = vmatprep.subr.mxu0 0.0
        %3807 = vmatpush1.msra.mxu0 0.0
        %3808 = vmatprep.subr.mxu0 0.0
        %3809 = vmatpush1.msra.mxu0 0.0
        %3810 = vmatprep.subr.mxu0 0.0
        %3811 = vmatpush1.msra.mxu0 0.0
        %3812 = vmatprep.subr.mxu0 0.0
        %3813 = vmatpush1.msra.mxu0 0.0
        %3814 = vmatprep.subr.mxu0 0.0
        %3815 = vmatpush1.msra.mxu0 0.0
        %3816 = vmatprep.subr.mxu0 0.0
        %3817 = vmatpush1.msra.mxu0 0.0
        %3818 = vmatprep.subr.mxu0 0.0
        %3819 = vmatpush1.msra.mxu0 0.0
        %3820 = vmatprep.subr.mxu0 0.0
        %3821 = vmatpush1.msra.mxu0 0.0
        %3822 = vmatprep.subr.mxu0 0.0
        %3823 = vmatpush1.msra.mxu0 0.0
        %3824 = vmatprep.subr.mxu0 0.0
        %3825 = vmatpush1.msra.mxu0 0.0
        %3826 = vmatprep.subr.mxu0 0.0
        %3827 = vmatpush1.msra.mxu0 0.0
        %3828 = vmatprep.subr.mxu0 0.0
        %3829 = vmatpush1.msra.mxu0 0.0
        %3830 = vmatprep.subr.mxu0 0.0
        %3831 = vmatpush1.msra.mxu0 0.0
        %3832 = vmatprep.subr.mxu0 0.0
        %3833 = vmatpush1.msra.mxu0 0.0
        %3834 = vmatprep.subr.mxu0 0.0
        %3835 = vmatpush1.msra.mxu0 0.0
        %3836 = vmatprep.subr.mxu0 0.0
        %3837 = vmatpush1.msra.mxu0 0.0
        %3838 = vmatprep.subr.mxu0 0.0
        %3839 = vmatpush1.msra.mxu0 0.0
        %3840 = vmatprep.subr.mxu0 0.0
        %3841 = vmatpush1.msra.mxu0 0.0
        %3842 = vmatprep.subr.mxu0 0.0
        %3843 = vmatpush1.msra.mxu0 0.0
        %3844 = vmatprep.subr.mxu0 0.0
        %3845 = vmatpush1.msra.mxu0 0.0
        %3846 = vmatprep.subr.mxu0 0.0
        %3847 = vmatpush1.msra.mxu0 0.0
        %3848 = vmatprep.subr.mxu0 0.0
        %3849 = vmatpush1.msra.mxu0 0.0
        %3850 = vmatprep.mubr.f32.mxu0 0.0
        %3851 = vmatmul.mubr.f32.gmra.mrb[0].mxu0 %v3784
        %v3852 = vpop.f32.mrb[0].mxu0
        %v3853 = vadd.f32 %v3781, %v3852
        %v3854 = vpop.f32.mrb[0].mxu0
        %3855 = vdwg.mxu0
        %3856 = vst [vmem:[%s434] sm:$0xff] %v3853
        %s3857 = sand.u32 %s252, 1
        %s3858 = scalar_lea.sflag [#allocation4], %s3857
        %s3859 = sand.u32 %s252, 1
        %s3860 = smul.addr %s3859, 8
        %s3861 = scalar_lea.vmem [#allocation11], %s3860
        // Predicated region
        $region81: #{tpu_custom_call.1} parent=59 // pred_check
          %p3862 = pneg %p262
        $region82: #{tpu_custom_call.1} parent=59 // pred_check_branch
          %3864 = sbr.rel (%p3862) target = $region84
        $region83: #{tpu_custom_call.1} parent=59 // pred_region
          %s3866 = ssub.s32 128, 128
          %3867 = vsyncadd %s3858, %s3866
          %s3868 = smul.addr %s29, 128
          %s3869 = scalar_lea.hbm %s10, %s3868
          %s3871 = sshll.u32 %s3861, 4
          %s3872 = int_to_ptr.vmem [resolvable:$true] %s3871
          %3874 = dma.vmem_to_hbm [thread:$0]  %s3872, 128, %s3869, %s3858
        $region84: #{tpu_custom_call.1} parent=59 // pred_fallthru
          _
      $region60: #{tpu_custom_call.1} parent=5 // pred_fallthru
        _
      %p3875 = scmp.le.s32.totalorder 2, %s24
      // Predicated region
      $region85: #{tpu_custom_call.1} parent=5 // pred_check
        %p3876 = pneg %p3875
      $region86: #{tpu_custom_call.1} parent=5 // pred_check_branch
        %3878 = sbr.rel (%p3876) target = $region88
      $region87: #{tpu_custom_call.1} parent=5 // pred_region
        %s3879 = ssub.s32 %s24, 2
        // Predicated region
        $region89: #{tpu_custom_call.1} parent=87 // pred_check
          %p3880 = pneg %p268
        $region90: #{tpu_custom_call.1} parent=87 // pred_check_branch
          %3882 = sbr.rel (%p3880) target = $region92
        $region91: #{tpu_custom_call.1} parent=87 // pred_region
          %s3883 = sand.u32 %s253, 1
          %s3884 = scalar_lea.sflag [#allocation4], %s3883
          %s3885 = sand.u32 %s253, 1
          %s3886 = smul.addr %s3885, 8
          %s3887 = scalar_lea.vmem [#allocation11], %s3886
          %3888 = dma.done %s3884, 128
        $region92: #{tpu_custom_call.1} parent=87 // pred_fallthru
          _
      $region88: #{tpu_custom_call.1} parent=5 // pred_fallthru
        _
    $region6: #{tpu_custom_call.1} parent=1 // loop_footer
      %s28 = sadd.s32 1, %s24
    $region7: #{tpu_custom_call.1} parent=1 // loop_footer_branch
      %23 = sbr.rel target = $region3
    $region8: #{tpu_custom_call.1} parent=1 // loop_exit
      _
    %3889 = vsyncpa [#allocation3], 1
    %s3890 = scalar_lea.sflag [#allocation3], 1
    %3891 = vsyncpa %s3890, 1
    %3892 = vsyncpa [#allocation6], 1
    %3893 = vsyncpa [#allocation9], 1
    %3894 = vsyncpa [#allocation4], 1
    %s3895 = scalar_lea.sflag [#allocation4], 1
    %3896 = vsyncpa %s3895, 1

</llo_original>
